<compile_context>
chip_gen: v7x
topology: tpu7x:2x2x1
jax: 0.10.0
libtpu: 0.0.40
codegen_flags: <defaults>
</compile_context>

<pallas_src>
import functools
import math

import jax
import jax.numpy as jnp
from jax.experimental import pallas as pl
from jax.experimental.pallas import tpu as pltpu

_LN_EPS = 1e-6  # matches LayerNorm(config.hidden_size, eps=1e-06)


# ----------------------------------------------------------------------------
# In-kernel helpers (traced, VMEM-resident math)
# ----------------------------------------------------------------------------
def _layernorm(x, g, b, eps):
    x = x.astype(jnp.float32)
    mean = jnp.mean(x, axis=-1, keepdims=True)
    var = jnp.mean(jnp.square(x - mean), axis=-1, keepdims=True)
    return (x - mean) * jax.lax.rsqrt(var + eps) * g + b


def _gelu_exact(x):
    # erf-based GELU, matching torch.nn.functional.gelu default
    return 0.5 * x * (1.0 + jax.lax.erf(x * (1.0 / math.sqrt(2.0))))


def _proj_and_split_heads(x, w_ref, bw_ref, out_refs, num_heads, n_out):
    # x: (S, H_in); w_ref: (H_in, n_out*H); bw_ref: (1, n_out*H)
    y = jnp.dot(x, w_ref[...], preferred_element_type=jnp.float32) + bw_ref[...]
    H = w_ref.shape[1] // n_out
    d = H // num_heads
    for o in range(n_out):
        for h in range(num_heads):
            c0 = o * H + h * d
            out_refs[o][0, h] = y[:, c0:c0 + d]


# ----------------------------------------------------------------------------
# Kernel factories
# ----------------------------------------------------------------------------
def make_proj_heads_kernel(num_heads, n_out, ln_eps):
    """Fused (optional LayerNorm) + packed linear projection, writing each
    output directly in (1, heads, S, d) head-major layout."""
    if ln_eps is not None:
        def kernel(x_ref, g_ref, bln_ref, w_ref, bw_ref, *out_refs):
            x = _layernorm(x_ref[0], g_ref[...], bln_ref[...], ln_eps)
            _proj_and_split_heads(x, w_ref, bw_ref, out_refs, num_heads, n_out)
    else:
        def kernel(x_ref, w_ref, bw_ref, *out_refs):
            _proj_and_split_heads(x_ref[0].astype(jnp.float32), w_ref, bw_ref,
                                  out_refs, num_heads, n_out)
    return kernel


def make_attention_kernel(scale, use_mask, emit_probs):
    def body(q_ref, k_ref, v_ref, m_ref, ctx_ref, probs_ref):
        # scale folded into q (Sq x d elems) instead of the Sq x Sk scores
        q = q_ref[0, 0].astype(jnp.float32) * scale
        k = k_ref[0, 0]
        v = v_ref[0, 0]
        # contract last dims (A @ B^T) without an explicit transpose of K
        scores = jax.lax.dot_general(
            q, k, (((1,), (1,)), ((), ())), preferred_element_type=jnp.float32)
        if m_ref is not None:
            # large finite negative instead of -inf: no NaN on fully-masked rows
            scores = jnp.where(m_ref[0] > 0.5, jnp.float32(-1e30), scores)
        m = jnp.max(scores, axis=-1, keepdims=True)
        e = jnp.exp(scores - m)
        denom = jnp.sum(e, axis=-1, keepdims=True)
        # EUP reciprocal; use the exact path when probs are returned to user
        p = e * pl.reciprocal(denom, approx=(probs_ref is None))
        if probs_ref is not None:
            probs_ref[0, 0] = p
        ctx_ref[0, 0] = jnp.dot(p, v, preferred_element_type=jnp.float32)

    if use_mask and emit_probs:
        def kernel(q, k, v, msk, ctx, probs): body(q, k, v, msk, ctx, probs)
    elif use_mask:
        def kernel(q, k, v, msk, ctx): body(q, k, v, msk, ctx, None)
    elif emit_probs:
        def kernel(q, k, v, ctx, probs): body(q, k, v, None, ctx, probs)
    else:
        def kernel(q, k, v, ctx): body(q, k, v, None, ctx, None)
    return kernel


def make_out_proj_residual_kernel():
    def kernel(ctx_ref, w_ref, b_ref, res_ref, o_ref):
        # ctx_ref: (1, heads, S, d); w_ref: (H, H); fuse head re-merge,
        # output projection, bias and residual add into one epilogue.
        _, nh, S, d = ctx_ref.shape
        H = w_ref.shape[1]
        acc = jnp.zeros((S, H), jnp.float32)
        for h in range(nh):
            acc = acc + jnp.dot(ctx_ref[0, h], w_ref[h * d:(h + 1) * d, :],
                                preferred_element_type=jnp.float32)
        o_ref[0] = acc + b_ref[...] + res_ref[0]
    return kernel


def make_ln_mlp_residual_kernel(ln_eps):
    def kernel(x_ref, g_ref, bln_ref, w1_ref, b1_ref, w2_ref, b2_ref, o_ref):
        x = x_ref[0].astype(jnp.float32)
        h = _layernorm(x, g_ref[...], bln_ref[...], ln_eps)
        h = jnp.dot(h, w1_ref[...], preferred_element_type=jnp.float32) + b1_ref[...]
        h = _gelu_exact(h)
        h = jnp.dot(h, w2_ref[...], preferred_element_type=jnp.float32) + b2_ref[...]
        o_ref[0] = h + x
    return kernel


# ----------------------------------------------------------------------------
# pallas_call wrappers
# ----------------------------------------------------------------------------
def ln_proj_heads(x, ln_g, ln_b, ws, bs, num_heads, ln_eps):
    """(optional LN) + packed projection; outputs n_out tensors of shape
    (B, heads, S, d) in head-major layout (no HBM transpose)."""
    B, S, H_in = x.shape
    n_out = len(ws)
    H = ws[0].shape[1]
    d = H // num_heads
    w = jnp.concatenate(ws, axis=1)                      # (H_in, n_out*H)
    bw = jnp.concatenate(bs, axis=0).reshape(1, n_out * H)

    in_specs = [pl.BlockSpec((1, S, H_in), lambda i: (i, 0, 0))]
    args = [x]
    if ln_eps is not None:
        in_specs += [pl.BlockSpec((1, H_in), lambda i: (0, 0)),
                     pl.BlockSpec((1, H_in), lambda i: (0, 0))]
        args += [ln_g.reshape(1, H_in), ln_b.reshape(1, H_in)]
    in_specs += [pl.BlockSpec((H_in, n_out * H), lambda i: (0, 0)),
                 pl.BlockSpec((1, n_out * H), lambda i: (0, 0))]
    args += [w, bw]

    out_shape = tuple(jax.ShapeDtypeStruct((B, num_heads, S, d), jnp.float32)
                      for _ in range(n_out))
    out_specs = tuple(pl.BlockSpec((1, num_heads, S, d), lambda i: (i, 0, 0, 0))
                      for _ in range(n_out))

    outs = pl.pallas_call(
        make_proj_heads_kernel(num_heads, n_out, ln_eps),
        out_shape=out_shape,
        grid=(B,),
        in_specs=in_specs,
        out_specs=out_specs,
        compiler_params=pltpu.CompilerParams(dimension_semantics=("parallel",)),
    )(*args)
    return tuple(outs)


def attention_heads(qh, kh, vh, mask, emit_probs, scale):
    """Per-(batch, head) scaled-dot-product attention.  Probs are only
    materialized/written when emit_probs=True (cross-attention / vis)."""
    B, nh, Sq, d = qh.shape
    Sk = kh.shape[2]
    use_mask = mask is not None

    in_specs = [pl.BlockSpec((1, 1, Sq, d), lambda b, h: (b, h, 0, 0)),
                pl.BlockSpec((1, 1, Sk, d), lambda b, h: (b, h, 0, 0)),
                pl.BlockSpec((1, 1, Sk, d), lambda b, h: (b, h, 0, 0))]
    args = [qh, kh, vh]
    if use_mask:
        # heads is the fastest grid axis -> the mask block index stays fixed
        # across heads of one batch, so its DMA is not re-issued per head.
        in_specs.append(pl.BlockSpec((1, Sq, Sk), lambda b, h: (b, 0, 0)))
        args.append(mask)

    out_shape = [jax.ShapeDtypeStruct((B, nh, Sq, d), jnp.float32)]
    out_specs = [pl.BlockSpec((1, 1, Sq, d), lambda b, h: (b, h, 0, 0))]
    if emit_probs:
        out_shape.append(jax.ShapeDtypeStruct((B, nh, Sq, Sk), jnp.float32))
        out_specs.append(pl.BlockSpec((1, 1, Sq, Sk), lambda b, h: (b, h, 0, 0)))

    outs = pl.pallas_call(
        make_attention_kernel(scale, use_mask, emit_probs),
        out_shape=tuple(out_shape),
        grid=(B, nh),
        in_specs=in_specs,
        out_specs=tuple(out_specs),
        compiler_params=pltpu.CompilerParams(
            dimension_semantics=("parallel", "parallel")),
    )(*args)
    if emit_probs:
        return outs[0], outs[1]
    return outs[0], None


def out_proj_residual(ctx, wo, bo, residual):
    B, nh, S, d = ctx.shape
    H = nh * d
    return pl.pallas_call(
        make_out_proj_residual_kernel(),
        out_shape=jax.ShapeDtypeStruct((B, S, H), jnp.float32),
        grid=(B,),
        in_specs=[
            pl.BlockSpec((1, nh, S, d), lambda i: (i, 0, 0, 0)),
            pl.BlockSpec((H, H), lambda i: (0, 0)),
            pl.BlockSpec((1, H), lambda i: (0, 0)),
            pl.BlockSpec((1, S, H), lambda i: (i, 0, 0)),
        ],
        out_specs=pl.BlockSpec((1, S, H), lambda i: (i, 0, 0)),
        compiler_params=pltpu.CompilerParams(dimension_semantics=("parallel",)),
    )(ctx, wo, bo.reshape(1, H), residual)


def ln_mlp_residual(x, ln_g, ln_b, w1, b1, w2, b2):
    B, S, H = x.shape
    M = w1.shape[1]
    return pl.pallas_call(
        make_ln_mlp_residual_kernel(_LN_EPS),
        out_shape=jax.ShapeDtypeStruct((B, S, H), jnp.float32),
        grid=(B,),
        in_specs=[
            pl.BlockSpec((1, S, H), lambda i: (i, 0, 0)),
            pl.BlockSpec((1, H), lambda i: (0, 0)),
            pl.BlockSpec((1, H), lambda i: (0, 0)),
            pl.BlockSpec((H, M), lambda i: (0, 0)),
            pl.BlockSpec((1, M), lambda i: (0, 0)),
            pl.BlockSpec((M, H), lambda i: (0, 0)),
            pl.BlockSpec((1, H), lambda i: (0, 0)),
        ],
        out_specs=pl.BlockSpec((1, S, H), lambda i: (i, 0, 0)),
        compiler_params=pltpu.CompilerParams(dimension_semantics=("parallel",)),
    )(x, ln_g.reshape(1, H), ln_b.reshape(1, H), w1, b1.reshape(1, M),
      w2, b2.reshape(1, H))


# ----------------------------------------------------------------------------
# DecoderBlock forward
# ----------------------------------------------------------------------------
def decoder_block(x, encoder_y, self_attn_mask, params, num_heads):
    """Matches DecoderBlock.forward (vis=True -> cross-attention weights
    returned; self-attention weights are never used, so never materialized)."""
    H = x.shape[-1]
    d = H // num_heads
    scale = 1.0 / math.sqrt(d)

    # --- self attention: fused LN + packed QKV, attention, fused out-proj+res
    sa = params["self_attn"]
    qh, kh, vh = ln_proj_heads(
        x, params["ln1_g"], params["ln1_b"],
        [sa["wq"], sa["wk"], sa["wv"]], [sa["bq"], sa["bk"], sa["bv"]],
        num_heads, ln_eps=_LN_EPS)
    ctx, _ = attention_heads(qh, kh, vh, self_attn_mask,
                             emit_probs=False, scale=scale)
    x = out_proj_residual(ctx, sa["wo"], sa["bo"], x)

    # --- cross attention: LN only on the query side; K/V from encoder_y
    ca = params["cross_attn"]
    (qh,) = ln_proj_heads(x, params["ln2_g"], params["ln2_b"],
                          [ca["wq"]], [ca["bq"]], num_heads, ln_eps=_LN_EPS)
    kh, vh = ln_proj_heads(encoder_y, None, None,
                           [ca["wk"], ca["wv"]], [ca["bk"], ca["bv"]],
                           num_heads, ln_eps=None)
    ctx, cross_weights = attention_heads(qh, kh, vh, None,
                                         emit_probs=True, scale=scale)
    x = out_proj_residual(ctx, ca["wo"], ca["bo"], x)

    # --- feed forward: fused LN + fc1 + GELU + fc2 + residual
    x = ln_mlp_residual(x, params["ln3_g"], params["ln3_b"],
                        params["fc1_w"], params["fc1_b"],
                        params["fc2_w"], params["fc2_b"])
    return x, cross_weights


# ----------------------------------------------------------------------------
# Deterministic parameter construction
# ----------------------------------------------------------------------------
def init_params(key, hidden, mlp_dim):
    ks = jax.random.split(key, 16)

    def w(k, shape, scale=0.02):
        return (scale * jax.random.normal(k, shape)).astype(jnp.float32)

    def attn_params(k4):
        k0, k1, k2, k3 = k4
        return {
            "wq": w(k0, (hidden, hidden)), "bq": jnp.zeros((hidden,), jnp.float32),
            "wk": w(k1, (hidden, hidden)), "bk": jnp.zeros((hidden,), jnp.float32),
            "wv": w(k2, (hidden, hidden)), "bv": jnp.zeros((hidden,), jnp.float32),
            "wo": w(k3, (hidden, hidden)), "bo": jnp.zeros((hidden,), jnp.float32),
        }

    return {
        "ln1_g": jnp.ones((hidden,), jnp.float32), "ln1_b": jnp.zeros((hidden,), jnp.float32),
        "ln2_g": jnp.ones((hidden,), jnp.float32), "ln2_b": jnp.zeros((hidden,), jnp.float32),
        "ln3_g": jnp.ones((hidden,), jnp.float32), "ln3_b": jnp.zeros((hidden,), jnp.float32),
        "self_attn": attn_params(ks[0:4]),
        "cross_attn": attn_params(ks[4:8]),
        "fc1_w": w(ks[8], (hidden, mlp_dim)),
        "fc1_b": (1e-6 * jax.random.normal(ks[9], (mlp_dim,))).astype(jnp.float32),
        "fc2_w": w(ks[10], (mlp_dim, hidden)),
        "fc2_b": (1e-6 * jax.random.normal(ks[11], (hidden,))).astype(jnp.float32),
    }


# ----------------------------------------------------------------------------
if __name__ == "__main__":
    B, S, S_ENC, HIDDEN, NUM_HEADS, MLP_DIM = 2, 8, 8, 32, 4, 64

    key = jax.random.PRNGKey(0)
    k_x, k_y, k_p = jax.random.split(key, 3)

    x = jax.random.normal(k_x, (B, S, HIDDEN), dtype=jnp.float32)
    encoder_y = jax.random.normal(k_y, (B, S_ENC, HIDDEN), dtype=jnp.float32)
    # causal self-attention mask: 1.0 where attention is disallowed
    causal = (jnp.arange(S)[None, :] > jnp.arange(S)[:, None]).astype(jnp.float32)
    self_attn_mask = jnp.broadcast_to(causal, (B, S, S))

    params = init_params(k_p, HIDDEN, MLP_DIM)

    fwd = jax.jit(functools.partial(decoder_block, num_heads=NUM_HEADS))
    out, cross_weights = fwd(x, encoder_y, self_attn_mask, params)
    jax.block_until_ready((out, cross_weights))

    assert out.shape == (B, S, HIDDEN)
    assert cross_weights.shape == (B, NUM_HEADS, S, S_ENC)
    assert bool(jnp.all(jnp.isfinite(out)))
    assert bool(jnp.all(jnp.isfinite(cross_weights)))
    print("KERNEL_OK")
</pallas_src>

<mosaic_0001>
module attributes {stable_mosaic.version = 11 : i64} {
  func.func @kernel(%arg0: i32, %arg1: memref<1x8x32xf32, #tpu.memory_space<vmem>>, %arg2: memref<1x32xf32, #tpu.memory_space<vmem>>, %arg3: memref<1x32xf32, #tpu.memory_space<vmem>>, %arg4: memref<32x96xf32, #tpu.memory_space<vmem>>, %arg5: memref<1x96xf32, #tpu.memory_space<vmem>>, %arg6: memref<1x4x8x8xf32, #tpu.memory_space<vmem>>, %arg7: memref<1x4x8x8xf32, #tpu.memory_space<vmem>>, %arg8: memref<1x4x8x8xf32, #tpu.memory_space<vmem>>) attributes {dimension_semantics = [#tpu.dimension_semantics<parallel>], iteration_bounds = array<i64: 2>, scalar_prefetch = 0 : i64, scratch_operands = 0 : i64, tpu.core_type = #tpu.core_type<tc>, window_params = [{transform_indices = @transform_0, window_bounds = array<i64: 1, 8, 32>}, {pipeline_mode = #tpu.pipeline_mode<synchronous>, transform_indices = @transform_1, window_bounds = array<i64: 1, 32>}, {pipeline_mode = #tpu.pipeline_mode<synchronous>, transform_indices = @transform_2, window_bounds = array<i64: 1, 32>}, {pipeline_mode = #tpu.pipeline_mode<synchronous>, transform_indices = @transform_3, window_bounds = array<i64: 32, 96>}, {pipeline_mode = #tpu.pipeline_mode<synchronous>, transform_indices = @transform_4, window_bounds = array<i64: 1, 96>}, {transform_indices = @transform_5, window_bounds = array<i64: 1, 4, 8, 8>}, {transform_indices = @transform_6, window_bounds = array<i64: 1, 4, 8, 8>}, {transform_indices = @transform_7, window_bounds = array<i64: 1, 4, 8, 8>}]} {
    %c0 = arith.constant 0 : index
    %c0_0 = arith.constant 0 : index
    %c0_1 = arith.constant 0 : index
    %0 = vector.load %arg1[%c0, %c0_0, %c0_1] : memref<1x8x32xf32, #tpu.memory_space<vmem>>, vector<1x8x32xf32>
    %1 = vector.shape_cast %0 : vector<1x8x32xf32> to vector<8x32xf32>
    %c0_2 = arith.constant 0 : index
    %c0_3 = arith.constant 0 : index
    %2 = vector.load %arg2[%c0_2, %c0_3] : memref<1x32xf32, #tpu.memory_space<vmem>>, vector<1x32xf32>
    %c0_4 = arith.constant 0 : index
    %c0_5 = arith.constant 0 : index
    %3 = vector.load %arg3[%c0_4, %c0_5] : memref<1x32xf32, #tpu.memory_space<vmem>>, vector<1x32xf32>
    %cst = arith.constant dense<0.000000e+00> : vector<8xf32>
    %4 = vector.multi_reduction <add>, %1, %cst [1] : vector<8x32xf32> to vector<8xf32>
    %5 = vector.shape_cast %4 : vector<8xf32> to vector<8x1xf32>
    %cst_6 = arith.constant 3.200000e+01 : f32
    %6 = vector.broadcast %cst_6 : f32 to vector<8x1xf32>
    %7 = arith.divf %5, %6 : vector<8x1xf32>
    %8 = vector.broadcast %7 : vector<8x1xf32> to vector<8x32xf32>
    %9 = arith.subf %1, %8 : vector<8x32xf32>
    %10 = arith.mulf %9, %9 : vector<8x32xf32>
    %cst_7 = arith.constant dense<0.000000e+00> : vector<8xf32>
    %11 = vector.multi_reduction <add>, %10, %cst_7 [1] : vector<8x32xf32> to vector<8xf32>
    %12 = vector.shape_cast %11 : vector<8xf32> to vector<8x1xf32>
    %cst_8 = arith.constant 3.200000e+01 : f32
    %13 = vector.broadcast %cst_8 : f32 to vector<8x1xf32>
    %14 = arith.divf %12, %13 : vector<8x1xf32>
    %15 = vector.broadcast %7 : vector<8x1xf32> to vector<8x32xf32>
    %16 = arith.subf %1, %15 : vector<8x32xf32>
    %cst_9 = arith.constant 9.99999997E-7 : f32
    %17 = vector.broadcast %cst_9 : f32 to vector<8x1xf32>
    %18 = arith.addf %14, %17 : vector<8x1xf32>
    %19 = math.rsqrt %18 : vector<8x1xf32>
    %20 = vector.broadcast %19 : vector<8x1xf32> to vector<8x32xf32>
    %21 = arith.mulf %16, %20 : vector<8x32xf32>
    %22 = vector.broadcast %2 : vector<1x32xf32> to vector<8x32xf32>
    %23 = arith.mulf %21, %22 : vector<8x32xf32>
    %24 = vector.broadcast %3 : vector<1x32xf32> to vector<8x32xf32>
    %25 = arith.addf %23, %24 : vector<8x32xf32>
    %c0_10 = arith.constant 0 : index
    %c0_11 = arith.constant 0 : index
    %26 = vector.load %arg4[%c0_10, %c0_11] : memref<32x96xf32, #tpu.memory_space<vmem>>, vector<32x96xf32>
    %cst_12 = arith.constant dense<0.000000e+00> : vector<8x96xf32>
    %27 = tpu.matmul %25, %26, %cst_12 {dimension_numbers = #tpu.dot_dimension_numbers<[1], [0], [0], [1], [0, 0, 1, 1], [], []>} : vector<8x32xf32>, vector<32x96xf32>, vector<8x96xf32> -> vector<8x96xf32>
    %c0_13 = arith.constant 0 : index
    %c0_14 = arith.constant 0 : index
    %28 = vector.load %arg5[%c0_13, %c0_14] : memref<1x96xf32, #tpu.memory_space<vmem>>, vector<1x96xf32>
    %29 = vector.broadcast %28 : vector<1x96xf32> to vector<8x96xf32>
    %30 = arith.addf %27, %29 : vector<8x96xf32>
    %31 = vector.extract_strided_slice %30 {offsets = [0, 0], sizes = [8, 8], strides = [1, 1]} : vector<8x96xf32> to vector<8x8xf32>
    %c0_15 = arith.constant 0 : index
    %c0_16 = arith.constant 0 : index
    %c0_17 = arith.constant 0 : index
    %c0_18 = arith.constant 0 : index
    %32 = vector.load %arg6[%c0_15, %c0_16, %c0_17, %c0_18] : memref<1x4x8x8xf32, #tpu.memory_space<vmem>>, vector<1x1x8x8xf32>
    %33 = vector.shape_cast %32 : vector<1x1x8x8xf32> to vector<8x8xf32>
    %34 = vector.shape_cast %31 : vector<8x8xf32> to vector<1x1x8x8xf32>
    tpu.vector_store %arg6[%c0_15, %c0_16, %c0_17, %c0_18], %34 {strides = array<i32>} : memref<1x4x8x8xf32, #tpu.memory_space<vmem>>, vector<1x1x8x8xf32>,
    %35 = vector.extract_strided_slice %30 {offsets = [0, 8], sizes = [8, 8], strides = [1, 1]} : vector<8x96xf32> to vector<8x8xf32>
    %c0_19 = arith.constant 0 : index
    %c1 = arith.constant 1 : index
    %c0_20 = arith.constant 0 : index
    %c0_21 = arith.constant 0 : index
    %36 = vector.load %arg6[%c0_19, %c1, %c0_20, %c0_21] : memref<1x4x8x8xf32, #tpu.memory_space<vmem>>, vector<1x1x8x8xf32>
    %37 = vector.shape_cast %36 : vector<1x1x8x8xf32> to vector<8x8xf32>
    %38 = vector.shape_cast %35 : vector<8x8xf32> to vector<1x1x8x8xf32>
    tpu.vector_store %arg6[%c0_19, %c1, %c0_20, %c0_21], %38 {strides = array<i32>} : memref<1x4x8x8xf32, #tpu.memory_space<vmem>>, vector<1x1x8x8xf32>,
    %39 = vector.extract_strided_slice %30 {offsets = [0, 16], sizes = [8, 8], strides = [1, 1]} : vector<8x96xf32> to vector<8x8xf32>
    %c0_22 = arith.constant 0 : index
    %c2 = arith.constant 2 : index
    %c0_23 = arith.constant 0 : index
    %c0_24 = arith.constant 0 : index
    %40 = vector.load %arg6[%c0_22, %c2, %c0_23, %c0_24] : memref<1x4x8x8xf32, #tpu.memory_space<vmem>>, vector<1x1x8x8xf32>
    %41 = vector.shape_cast %40 : vector<1x1x8x8xf32> to vector<8x8xf32>
    %42 = vector.shape_cast %39 : vector<8x8xf32> to vector<1x1x8x8xf32>
    tpu.vector_store %arg6[%c0_22, %c2, %c0_23, %c0_24], %42 {strides = array<i32>} : memref<1x4x8x8xf32, #tpu.memory_space<vmem>>, vector<1x1x8x8xf32>,
    %43 = vector.extract_strided_slice %30 {offsets = [0, 24], sizes = [8, 8], strides = [1, 1]} : vector<8x96xf32> to vector<8x8xf32>
    %c0_25 = arith.constant 0 : index
    %c3 = arith.constant 3 : index
    %c0_26 = arith.constant 0 : index
    %c0_27 = arith.constant 0 : index
    %44 = vector.load %arg6[%c0_25, %c3, %c0_26, %c0_27] : memref<1x4x8x8xf32, #tpu.memory_space<vmem>>, vector<1x1x8x8xf32>
    %45 = vector.shape_cast %44 : vector<1x1x8x8xf32> to vector<8x8xf32>
    %46 = vector.shape_cast %43 : vector<8x8xf32> to vector<1x1x8x8xf32>
    tpu.vector_store %arg6[%c0_25, %c3, %c0_26, %c0_27], %46 {strides = array<i32>} : memref<1x4x8x8xf32, #tpu.memory_space<vmem>>, vector<1x1x8x8xf32>,
    %47 = vector.extract_strided_slice %30 {offsets = [0, 32], sizes = [8, 8], strides = [1, 1]} : vector<8x96xf32> to vector<8x8xf32>
    %c0_28 = arith.constant 0 : index
    %c0_29 = arith.constant 0 : index
    %c0_30 = arith.constant 0 : index
    %c0_31 = arith.constant 0 : index
    %48 = vector.load %arg7[%c0_28, %c0_29, %c0_30, %c0_31] : memref<1x4x8x8xf32, #tpu.memory_space<vmem>>, vector<1x1x8x8xf32>
    %49 = vector.shape_cast %48 : vector<1x1x8x8xf32> to vector<8x8xf32>
    %50 = vector.shape_cast %47 : vector<8x8xf32> to vector<1x1x8x8xf32>
    tpu.vector_store %arg7[%c0_28, %c0_29, %c0_30, %c0_31], %50 {strides = array<i32>} : memref<1x4x8x8xf32, #tpu.memory_space<vmem>>, vector<1x1x8x8xf32>,
    %51 = vector.extract_strided_slice %30 {offsets = [0, 40], sizes = [8, 8], strides = [1, 1]} : vector<8x96xf32> to vector<8x8xf32>
    %c0_32 = arith.constant 0 : index
    %c1_33 = arith.constant 1 : index
    %c0_34 = arith.constant 0 : index
    %c0_35 = arith.constant 0 : index
    %52 = vector.load %arg7[%c0_32, %c1_33, %c0_34, %c0_35] : memref<1x4x8x8xf32, #tpu.memory_space<vmem>>, vector<1x1x8x8xf32>
    %53 = vector.shape_cast %52 : vector<1x1x8x8xf32> to vector<8x8xf32>
    %54 = vector.shape_cast %51 : vector<8x8xf32> to vector<1x1x8x8xf32>
    tpu.vector_store %arg7[%c0_32, %c1_33, %c0_34, %c0_35], %54 {strides = array<i32>} : memref<1x4x8x8xf32, #tpu.memory_space<vmem>>, vector<1x1x8x8xf32>,
    %55 = vector.extract_strided_slice %30 {offsets = [0, 48], sizes = [8, 8], strides = [1, 1]} : vector<8x96xf32> to vector<8x8xf32>
    %c0_36 = arith.constant 0 : index
    %c2_37 = arith.constant 2 : index
    %c0_38 = arith.constant 0 : index
    %c0_39 = arith.constant 0 : index
    %56 = vector.load %arg7[%c0_36, %c2_37, %c0_38, %c0_39] : memref<1x4x8x8xf32, #tpu.memory_space<vmem>>, vector<1x1x8x8xf32>
    %57 = vector.shape_cast %56 : vector<1x1x8x8xf32> to vector<8x8xf32>
    %58 = vector.shape_cast %55 : vector<8x8xf32> to vector<1x1x8x8xf32>
    tpu.vector_store %arg7[%c0_36, %c2_37, %c0_38, %c0_39], %58 {strides = array<i32>} : memref<1x4x8x8xf32, #tpu.memory_space<vmem>>, vector<1x1x8x8xf32>,
    %59 = vector.extract_strided_slice %30 {offsets = [0, 56], sizes = [8, 8], strides = [1, 1]} : vector<8x96xf32> to vector<8x8xf32>
    %c0_40 = arith.constant 0 : index
    %c3_41 = arith.constant 3 : index
    %c0_42 = arith.constant 0 : index
    %c0_43 = arith.constant 0 : index
    %60 = vector.load %arg7[%c0_40, %c3_41, %c0_42, %c0_43] : memref<1x4x8x8xf32, #tpu.memory_space<vmem>>, vector<1x1x8x8xf32>
    %61 = vector.shape_cast %60 : vector<1x1x8x8xf32> to vector<8x8xf32>
    %62 = vector.shape_cast %59 : vector<8x8xf32> to vector<1x1x8x8xf32>
    tpu.vector_store %arg7[%c0_40, %c3_41, %c0_42, %c0_43], %62 {strides = array<i32>} : memref<1x4x8x8xf32, #tpu.memory_space<vmem>>, vector<1x1x8x8xf32>,
    %63 = vector.extract_strided_slice %30 {offsets = [0, 64], sizes = [8, 8], strides = [1, 1]} : vector<8x96xf32> to vector<8x8xf32>
    %c0_44 = arith.constant 0 : index
    %c0_45 = arith.constant 0 : index
    %c0_46 = arith.constant 0 : index
    %c0_47 = arith.constant 0 : index
    %64 = vector.load %arg8[%c0_44, %c0_45, %c0_46, %c0_47] : memref<1x4x8x8xf32, #tpu.memory_space<vmem>>, vector<1x1x8x8xf32>
    %65 = vector.shape_cast %64 : vector<1x1x8x8xf32> to vector<8x8xf32>
    %66 = vector.shape_cast %63 : vector<8x8xf32> to vector<1x1x8x8xf32>
    tpu.vector_store %arg8[%c0_44, %c0_45, %c0_46, %c0_47], %66 {strides = array<i32>} : memref<1x4x8x8xf32, #tpu.memory_space<vmem>>, vector<1x1x8x8xf32>,
    %67 = vector.extract_strided_slice %30 {offsets = [0, 72], sizes = [8, 8], strides = [1, 1]} : vector<8x96xf32> to vector<8x8xf32>
    %c0_48 = arith.constant 0 : index
    %c1_49 = arith.constant 1 : index
    %c0_50 = arith.constant 0 : index
    %c0_51 = arith.constant 0 : index
    %68 = vector.load %arg8[%c0_48, %c1_49, %c0_50, %c0_51] : memref<1x4x8x8xf32, #tpu.memory_space<vmem>>, vector<1x1x8x8xf32>
    %69 = vector.shape_cast %68 : vector<1x1x8x8xf32> to vector<8x8xf32>
    %70 = vector.shape_cast %67 : vector<8x8xf32> to vector<1x1x8x8xf32>
    tpu.vector_store %arg8[%c0_48, %c1_49, %c0_50, %c0_51], %70 {strides = array<i32>} : memref<1x4x8x8xf32, #tpu.memory_space<vmem>>, vector<1x1x8x8xf32>,
    %71 = vector.extract_strided_slice %30 {offsets = [0, 80], sizes = [8, 8], strides = [1, 1]} : vector<8x96xf32> to vector<8x8xf32>
    %c0_52 = arith.constant 0 : index
    %c2_53 = arith.constant 2 : index
    %c0_54 = arith.constant 0 : index
    %c0_55 = arith.constant 0 : index
    %72 = vector.load %arg8[%c0_52, %c2_53, %c0_54, %c0_55] : memref<1x4x8x8xf32, #tpu.memory_space<vmem>>, vector<1x1x8x8xf32>
    %73 = vector.shape_cast %72 : vector<1x1x8x8xf32> to vector<8x8xf32>
    %74 = vector.shape_cast %71 : vector<8x8xf32> to vector<1x1x8x8xf32>
    tpu.vector_store %arg8[%c0_52, %c2_53, %c0_54, %c0_55], %74 {strides = array<i32>} : memref<1x4x8x8xf32, #tpu.memory_space<vmem>>, vector<1x1x8x8xf32>,
    %75 = vector.extract_strided_slice %30 {offsets = [0, 88], sizes = [8, 8], strides = [1, 1]} : vector<8x96xf32> to vector<8x8xf32>
    %c0_56 = arith.constant 0 : index
    %c3_57 = arith.constant 3 : index
    %c0_58 = arith.constant 0 : index
    %c0_59 = arith.constant 0 : index
    %76 = vector.load %arg8[%c0_56, %c3_57, %c0_58, %c0_59] : memref<1x4x8x8xf32, #tpu.memory_space<vmem>>, vector<1x1x8x8xf32>
    %77 = vector.shape_cast %76 : vector<1x1x8x8xf32> to vector<8x8xf32>
    %78 = vector.shape_cast %75 : vector<8x8xf32> to vector<1x1x8x8xf32>
    tpu.vector_store %arg8[%c0_56, %c3_57, %c0_58, %c0_59], %78 {strides = array<i32>} : memref<1x4x8x8xf32, #tpu.memory_space<vmem>>, vector<1x1x8x8xf32>,
    return
  }
  func.func @transform_0(%arg0: i32) -> (i32, i32, i32) {
    %c0_i32 = arith.constant 0 : i32
    %c0_i32_0 = arith.constant 0 : i32
    %c0_i32_1 = arith.constant 0 : i32
    return %arg0, %c0_i32, %c0_i32_0 : i32, i32, i32
  }
  func.func @transform_1(%arg0: i32) -> (i32, i32) {
    %c0_i32 = arith.constant 0 : i32
    %c0_i32_0 = arith.constant 0 : i32
    %c0_i32_1 = arith.constant 0 : i32
    return %c0_i32, %c0_i32_0 : i32, i32
  }
  func.func @transform_2(%arg0: i32) -> (i32, i32) {
    %c0_i32 = arith.constant 0 : i32
    %c0_i32_0 = arith.constant 0 : i32
    %c0_i32_1 = arith.constant 0 : i32
    return %c0_i32, %c0_i32_0 : i32, i32
  }
  func.func @transform_3(%arg0: i32) -> (i32, i32) {
    %c0_i32 = arith.constant 0 : i32
    %c0_i32_0 = arith.constant 0 : i32
    %c0_i32_1 = arith.constant 0 : i32
    return %c0_i32, %c0_i32_0 : i32, i32
  }
  func.func @transform_4(%arg0: i32) -> (i32, i32) {
    %c0_i32 = arith.constant 0 : i32
    %c0_i32_0 = arith.constant 0 : i32
    %c0_i32_1 = arith.constant 0 : i32
    return %c0_i32, %c0_i32_0 : i32, i32
  }
  func.func @transform_5(%arg0: i32) -> (i32, i32, i32, i32) {
    %c0_i32 = arith.constant 0 : i32
    %c0_i32_0 = arith.constant 0 : i32
    %c0_i32_1 = arith.constant 0 : i32
    %c0_i32_2 = arith.constant 0 : i32
    return %arg0, %c0_i32, %c0_i32_0, %c0_i32_1 : i32, i32, i32, i32
  }
  func.func @transform_6(%arg0: i32) -> (i32, i32, i32, i32) {
    %c0_i32 = arith.constant 0 : i32
    %c0_i32_0 = arith.constant 0 : i32
    %c0_i32_1 = arith.constant 0 : i32
    %c0_i32_2 = arith.constant 0 : i32
    return %arg0, %c0_i32, %c0_i32_0, %c0_i32_1 : i32, i32, i32, i32
  }
  func.func @transform_7(%arg0: i32) -> (i32, i32, i32, i32) {
    %c0_i32 = arith.constant 0 : i32
    %c0_i32_0 = arith.constant 0 : i32
    %c0_i32_1 = arith.constant 0 : i32
    %c0_i32_2 = arith.constant 0 : i32
    return %arg0, %c0_i32, %c0_i32_0, %c0_i32_1 : i32, i32, i32, i32
  }
}

module attributes {stable_mosaic.version = 11 : i64} {
  func.func @kernel(%arg0: i32, %arg1: i32, %arg2: memref<1x1x8x8xf32, #tpu.memory_space<vmem>>, %arg3: memref<1x1x8x8xf32, #tpu.memory_space<vmem>>, %arg4: memref<1x1x8x8xf32, #tpu.memory_space<vmem>>, %arg5: memref<1x8x8xf32, #tpu.memory_space<vmem>>, %arg6: memref<1x1x8x8xf32, #tpu.memory_space<vmem>>) attributes {dimension_semantics = [#tpu.dimension_semantics<parallel>, #tpu.dimension_semantics<parallel>], iteration_bounds = array<i64: 2, 4>, scalar_prefetch = 0 : i64, scratch_operands = 0 : i64, tpu.core_type = #tpu.core_type<tc>, window_params = [{transform_indices = @transform_0, window_bounds = array<i64: 1, 1, 8, 8>}, {transform_indices = @transform_1, window_bounds = array<i64: 1, 1, 8, 8>}, {transform_indices = @transform_2, window_bounds = array<i64: 1, 1, 8, 8>}, {transform_indices = @transform_3, window_bounds = array<i64: 1, 8, 8>}, {transform_indices = @transform_4, window_bounds = array<i64: 1, 1, 8, 8>}]} {
    %c0 = arith.constant 0 : index
    %c0_0 = arith.constant 0 : index
    %c0_1 = arith.constant 0 : index
    %c0_2 = arith.constant 0 : index
    %0 = vector.load %arg2[%c0, %c0_0, %c0_1, %c0_2] : memref<1x1x8x8xf32, #tpu.memory_space<vmem>>, vector<1x1x8x8xf32>
    %1 = vector.shape_cast %0 : vector<1x1x8x8xf32> to vector<8x8xf32>
    %cst = arith.constant 0.353553385 : f32
    %2 = vector.broadcast %cst : f32 to vector<8x8xf32>
    %3 = arith.mulf %1, %2 : vector<8x8xf32>
    %c0_3 = arith.constant 0 : index
    %c0_4 = arith.constant 0 : index
    %c0_5 = arith.constant 0 : index
    %c0_6 = arith.constant 0 : index
    %4 = vector.load %arg3[%c0_3, %c0_4, %c0_5, %c0_6] : memref<1x1x8x8xf32, #tpu.memory_space<vmem>>, vector<1x1x8x8xf32>
    %5 = vector.shape_cast %4 : vector<1x1x8x8xf32> to vector<8x8xf32>
    %c0_7 = arith.constant 0 : index
    %c0_8 = arith.constant 0 : index
    %c0_9 = arith.constant 0 : index
    %c0_10 = arith.constant 0 : index
    %6 = vector.load %arg4[%c0_7, %c0_8, %c0_9, %c0_10] : memref<1x1x8x8xf32, #tpu.memory_space<vmem>>, vector<1x1x8x8xf32>
    %7 = vector.shape_cast %6 : vector<1x1x8x8xf32> to vector<8x8xf32>
    %cst_11 = arith.constant dense<0.000000e+00> : vector<8x8xf32>
    %8 = tpu.matmul %3, %5, %cst_11 {dimension_numbers = #tpu.dot_dimension_numbers<[1], [1], [0], [0], [0, 0, 1, 0], [], []>} : vector<8x8xf32>, vector<8x8xf32>, vector<8x8xf32> -> vector<8x8xf32>
    %c0_12 = arith.constant 0 : index
    %c0_13 = arith.constant 0 : index
    %c0_14 = arith.constant 0 : index
    %9 = vector.load %arg5[%c0_12, %c0_13, %c0_14] : memref<1x8x8xf32, #tpu.memory_space<vmem>>, vector<1x8x8xf32>
    %10 = vector.shape_cast %9 : vector<1x8x8xf32> to vector<8x8xf32>
    %cst_15 = arith.constant 5.000000e-01 : f32
    %11 = vector.broadcast %cst_15 : f32 to vector<8x8xf32>
    %12 = arith.cmpf ogt, %10, %11 : vector<8x8xf32>
    %cst_16 = arith.constant -1.000000e+30 : f32
    %13 = vector.broadcast %cst_16 : f32 to vector<8x8xf32>
    %14 = arith.select %12, %13, %8 : vector<8x8xi1>, vector<8x8xf32>
    %cst_17 = arith.constant dense<0xFF800000> : vector<8xf32>
    %15 = vector.multi_reduction <maximumf>, %14, %cst_17 [1] : vector<8x8xf32> to vector<8xf32>
    %16 = vector.shape_cast %15 : vector<8xf32> to vector<8x1xf32>
    %17 = vector.broadcast %16 : vector<8x1xf32> to vector<8x8xf32>
    %18 = arith.subf %14, %17 : vector<8x8xf32>
    %19 = math.exp %18 : vector<8x8xf32>
    %cst_18 = arith.constant dense<0.000000e+00> : vector<8xf32>
    %20 = vector.multi_reduction <add>, %19, %cst_18 [1] : vector<8x8xf32> to vector<8xf32>
    %21 = vector.shape_cast %20 : vector<8xf32> to vector<8x1xf32>
    %22 = tpu.reciprocal %21 {approx = true} : vector<8x1xf32> -> vector<8x1xf32>
    %23 = vector.broadcast %22 : vector<8x1xf32> to vector<8x8xf32>
    %24 = arith.mulf %19, %23 : vector<8x8xf32>
    %cst_19 = arith.constant dense<0.000000e+00> : vector<8x8xf32>
    %25 = tpu.matmul %24, %7, %cst_19 {dimension_numbers = #tpu.dot_dimension_numbers<[1], [0], [0], [1], [0, 0, 1, 1], [], []>} : vector<8x8xf32>, vector<8x8xf32>, vector<8x8xf32> -> vector<8x8xf32>
    %c0_20 = arith.constant 0 : index
    %c0_21 = arith.constant 0 : index
    %c0_22 = arith.constant 0 : index
    %c0_23 = arith.constant 0 : index
    %26 = vector.load %arg6[%c0_20, %c0_21, %c0_22, %c0_23] : memref<1x1x8x8xf32, #tpu.memory_space<vmem>>, vector<1x1x8x8xf32>
    %27 = vector.shape_cast %26 : vector<1x1x8x8xf32> to vector<8x8xf32>
    %28 = vector.shape_cast %25 : vector<8x8xf32> to vector<1x1x8x8xf32>
    tpu.vector_store %arg6[%c0_20, %c0_21, %c0_22, %c0_23], %28 {strides = array<i32>} : memref<1x1x8x8xf32, #tpu.memory_space<vmem>>, vector<1x1x8x8xf32>,
    return
  }
  func.func @transform_0(%arg0: i32, %arg1: i32) -> (i32, i32, i32, i32) {
    %c0_i32 = arith.constant 0 : i32
    %c0_i32_0 = arith.constant 0 : i32
    %c0_i32_1 = arith.constant 0 : i32
    return %arg0, %arg1, %c0_i32, %c0_i32_0 : i32, i32, i32, i32
  }
  func.func @transform_1(%arg0: i32, %arg1: i32) -> (i32, i32, i32, i32) {
    %c0_i32 = arith.constant 0 : i32
    %c0_i32_0 = arith.constant 0 : i32
    %c0_i32_1 = arith.constant 0 : i32
    return %arg0, %arg1, %c0_i32, %c0_i32_0 : i32, i32, i32, i32
  }
  func.func @transform_2(%arg0: i32, %arg1: i32) -> (i32, i32, i32, i32) {
    %c0_i32 = arith.constant 0 : i32
    %c0_i32_0 = arith.constant 0 : i32
    %c0_i32_1 = arith.constant 0 : i32
    return %arg0, %arg1, %c0_i32, %c0_i32_0 : i32, i32, i32, i32
  }
  func.func @transform_3(%arg0: i32, %arg1: i32) -> (i32, i32, i32) {
    %c0_i32 = arith.constant 0 : i32
    %c0_i32_0 = arith.constant 0 : i32
    %c0_i32_1 = arith.constant 0 : i32
    return %arg0, %c0_i32, %c0_i32_0 : i32, i32, i32
  }
  func.func @transform_4(%arg0: i32, %arg1: i32) -> (i32, i32, i32, i32) {
    %c0_i32 = arith.constant 0 : i32
    %c0_i32_0 = arith.constant 0 : i32
    %c0_i32_1 = arith.constant 0 : i32
    return %arg0, %arg1, %c0_i32, %c0_i32_0 : i32, i32, i32, i32
  }
}

module attributes {stable_mosaic.version = 11 : i64} {
  func.func @kernel(%arg0: i32, %arg1: memref<1x8x32xf32, #tpu.memory_space<vmem>>, %arg2: memref<1x32xf32, #tpu.memory_space<vmem>>, %arg3: memref<1x32xf32, #tpu.memory_space<vmem>>, %arg4: memref<32x32xf32, #tpu.memory_space<vmem>>, %arg5: memref<1x32xf32, #tpu.memory_space<vmem>>, %arg6: memref<1x4x8x8xf32, #tpu.memory_space<vmem>>) attributes {dimension_semantics = [#tpu.dimension_semantics<parallel>], iteration_bounds = array<i64: 2>, scalar_prefetch = 0 : i64, scratch_operands = 0 : i64, tpu.core_type = #tpu.core_type<tc>, window_params = [{transform_indices = @transform_0, window_bounds = array<i64: 1, 8, 32>}, {pipeline_mode = #tpu.pipeline_mode<synchronous>, transform_indices = @transform_1, window_bounds = array<i64: 1, 32>}, {pipeline_mode = #tpu.pipeline_mode<synchronous>, transform_indices = @transform_2, window_bounds = array<i64: 1, 32>}, {pipeline_mode = #tpu.pipeline_mode<synchronous>, transform_indices = @transform_3, window_bounds = array<i64: 32, 32>}, {pipeline_mode = #tpu.pipeline_mode<synchronous>, transform_indices = @transform_4, window_bounds = array<i64: 1, 32>}, {transform_indices = @transform_5, window_bounds = array<i64: 1, 4, 8, 8>}]} {
    %c0 = arith.constant 0 : index
    %c0_0 = arith.constant 0 : index
    %c0_1 = arith.constant 0 : index
    %0 = vector.load %arg1[%c0, %c0_0, %c0_1] : memref<1x8x32xf32, #tpu.memory_space<vmem>>, vector<1x8x32xf32>
    %1 = vector.shape_cast %0 : vector<1x8x32xf32> to vector<8x32xf32>
    %c0_2 = arith.constant 0 : index
    %c0_3 = arith.constant 0 : index
    %2 = vector.load %arg2[%c0_2, %c0_3] : memref<1x32xf32, #tpu.memory_space<vmem>>, vector<1x32xf32>
    %c0_4 = arith.constant 0 : index
    %c0_5 = arith.constant 0 : index
    %3 = vector.load %arg3[%c0_4, %c0_5] : memref<1x32xf32, #tpu.memory_space<vmem>>, vector<1x32xf32>
    %cst = arith.constant dense<0.000000e+00> : vector<8xf32>
    %4 = vector.multi_reduction <add>, %1, %cst [1] : vector<8x32xf32> to vector<8xf32>
    %5 = vector.shape_cast %4 : vector<8xf32> to vector<8x1xf32>
    %cst_6 = arith.constant 3.200000e+01 : f32
    %6 = vector.broadcast %cst_6 : f32 to vector<8x1xf32>
    %7 = arith.divf %5, %6 : vector<8x1xf32>
    %8 = vector.broadcast %7 : vector<8x1xf32> to vector<8x32xf32>
    %9 = arith.subf %1, %8 : vector<8x32xf32>
    %10 = arith.mulf %9, %9 : vector<8x32xf32>
    %cst_7 = arith.constant dense<0.000000e+00> : vector<8xf32>
    %11 = vector.multi_reduction <add>, %10, %cst_7 [1] : vector<8x32xf32> to vector<8xf32>
    %12 = vector.shape_cast %11 : vector<8xf32> to vector<8x1xf32>
    %cst_8 = arith.constant 3.200000e+01 : f32
    %13 = vector.broadcast %cst_8 : f32 to vector<8x1xf32>
    %14 = arith.divf %12, %13 : vector<8x1xf32>
    %15 = vector.broadcast %7 : vector<8x1xf32> to vector<8x32xf32>
    %16 = arith.subf %1, %15 : vector<8x32xf32>
    %cst_9 = arith.constant 9.99999997E-7 : f32
    %17 = vector.broadcast %cst_9 : f32 to vector<8x1xf32>
    %18 = arith.addf %14, %17 : vector<8x1xf32>
    %19 = math.rsqrt %18 : vector<8x1xf32>
    %20 = vector.broadcast %19 : vector<8x1xf32> to vector<8x32xf32>
    %21 = arith.mulf %16, %20 : vector<8x32xf32>
    %22 = vector.broadcast %2 : vector<1x32xf32> to vector<8x32xf32>
    %23 = arith.mulf %21, %22 : vector<8x32xf32>
    %24 = vector.broadcast %3 : vector<1x32xf32> to vector<8x32xf32>
    %25 = arith.addf %23, %24 : vector<8x32xf32>
    %c0_10 = arith.constant 0 : index
    %c0_11 = arith.constant 0 : index
    %26 = vector.load %arg4[%c0_10, %c0_11] : memref<32x32xf32, #tpu.memory_space<vmem>>, vector<32x32xf32>
    %cst_12 = arith.constant dense<0.000000e+00> : vector<8x32xf32>
    %27 = tpu.matmul %25, %26, %cst_12 {dimension_numbers = #tpu.dot_dimension_numbers<[1], [0], [0], [1], [0, 0, 1, 1], [], []>} : vector<8x32xf32>, vector<32x32xf32>, vector<8x32xf32> -> vector<8x32xf32>
    %c0_13 = arith.constant 0 : index
    %c0_14 = arith.constant 0 : index
    %28 = vector.load %arg5[%c0_13, %c0_14] : memref<1x32xf32, #tpu.memory_space<vmem>>, vector<1x32xf32>
    %29 = vector.broadcast %28 : vector<1x32xf32> to vector<8x32xf32>
    %30 = arith.addf %27, %29 : vector<8x32xf32>
    %31 = vector.extract_strided_slice %30 {offsets = [0, 0], sizes = [8, 8], strides = [1, 1]} : vector<8x32xf32> to vector<8x8xf32>
    %c0_15 = arith.constant 0 : index
    %c0_16 = arith.constant 0 : index
    %c0_17 = arith.constant 0 : index
    %c0_18 = arith.constant 0 : index
    %32 = vector.load %arg6[%c0_15, %c0_16, %c0_17, %c0_18] : memref<1x4x8x8xf32, #tpu.memory_space<vmem>>, vector<1x1x8x8xf32>
    %33 = vector.shape_cast %32 : vector<1x1x8x8xf32> to vector<8x8xf32>
    %34 = vector.shape_cast %31 : vector<8x8xf32> to vector<1x1x8x8xf32>
    tpu.vector_store %arg6[%c0_15, %c0_16, %c0_17, %c0_18], %34 {strides = array<i32>} : memref<1x4x8x8xf32, #tpu.memory_space<vmem>>, vector<1x1x8x8xf32>,
    %35 = vector.extract_strided_slice %30 {offsets = [0, 8], sizes = [8, 8], strides = [1, 1]} : vector<8x32xf32> to vector<8x8xf32>
    %c0_19 = arith.constant 0 : index
    %c1 = arith.constant 1 : index
    %c0_20 = arith.constant 0 : index
    %c0_21 = arith.constant 0 : index
    %36 = vector.load %arg6[%c0_19, %c1, %c0_20, %c0_21] : memref<1x4x8x8xf32, #tpu.memory_space<vmem>>, vector<1x1x8x8xf32>
    %37 = vector.shape_cast %36 : vector<1x1x8x8xf32> to vector<8x8xf32>
    %38 = vector.shape_cast %35 : vector<8x8xf32> to vector<1x1x8x8xf32>
    tpu.vector_store %arg6[%c0_19, %c1, %c0_20, %c0_21], %38 {strides = array<i32>} : memref<1x4x8x8xf32, #tpu.memory_space<vmem>>, vector<1x1x8x8xf32>,
    %39 = vector.extract_strided_slice %30 {offsets = [0, 16], sizes = [8, 8], strides = [1, 1]} : vector<8x32xf32> to vector<8x8xf32>
    %c0_22 = arith.constant 0 : index
    %c2 = arith.constant 2 : index
    %c0_23 = arith.constant 0 : index
    %c0_24 = arith.constant 0 : index
    %40 = vector.load %arg6[%c0_22, %c2, %c0_23, %c0_24] : memref<1x4x8x8xf32, #tpu.memory_space<vmem>>, vector<1x1x8x8xf32>
    %41 = vector.shape_cast %40 : vector<1x1x8x8xf32> to vector<8x8xf32>
    %42 = vector.shape_cast %39 : vector<8x8xf32> to vector<1x1x8x8xf32>
    tpu.vector_store %arg6[%c0_22, %c2, %c0_23, %c0_24], %42 {strides = array<i32>} : memref<1x4x8x8xf32, #tpu.memory_space<vmem>>, vector<1x1x8x8xf32>,
    %43 = vector.extract_strided_slice %30 {offsets = [0, 24], sizes = [8, 8], strides = [1, 1]} : vector<8x32xf32> to vector<8x8xf32>
    %c0_25 = arith.constant 0 : index
    %c3 = arith.constant 3 : index
    %c0_26 = arith.constant 0 : index
    %c0_27 = arith.constant 0 : index
    %44 = vector.load %arg6[%c0_25, %c3, %c0_26, %c0_27] : memref<1x4x8x8xf32, #tpu.memory_space<vmem>>, vector<1x1x8x8xf32>
    %45 = vector.shape_cast %44 : vector<1x1x8x8xf32> to vector<8x8xf32>
    %46 = vector.shape_cast %43 : vector<8x8xf32> to vector<1x1x8x8xf32>
    tpu.vector_store %arg6[%c0_25, %c3, %c0_26, %c0_27], %46 {strides = array<i32>} : memref<1x4x8x8xf32, #tpu.memory_space<vmem>>, vector<1x1x8x8xf32>,
    return
  }
  func.func @transform_0(%arg0: i32) -> (i32, i32, i32) {
    %c0_i32 = arith.constant 0 : i32
    %c0_i32_0 = arith.constant 0 : i32
    %c0_i32_1 = arith.constant 0 : i32
    return %arg0, %c0_i32, %c0_i32_0 : i32, i32, i32
  }
  func.func @transform_1(%arg0: i32) -> (i32, i32) {
    %c0_i32 = arith.constant 0 : i32
    %c0_i32_0 = arith.constant 0 : i32
    %c0_i32_1 = arith.constant 0 : i32
    return %c0_i32, %c0_i32_0 : i32, i32
  }
  func.func @transform_2(%arg0: i32) -> (i32, i32) {
    %c0_i32 = arith.constant 0 : i32
    %c0_i32_0 = arith.constant 0 : i32
    %c0_i32_1 = arith.constant 0 : i32
    return %c0_i32, %c0_i32_0 : i32, i32
  }
  func.func @transform_3(%arg0: i32) -> (i32, i32) {
    %c0_i32 = arith.constant 0 : i32
    %c0_i32_0 = arith.constant 0 : i32
    %c0_i32_1 = arith.constant 0 : i32
    return %c0_i32, %c0_i32_0 : i32, i32
  }
  func.func @transform_4(%arg0: i32) -> (i32, i32) {
    %c0_i32 = arith.constant 0 : i32
    %c0_i32_0 = arith.constant 0 : i32
    %c0_i32_1 = arith.constant 0 : i32
    return %c0_i32, %c0_i32_0 : i32, i32
  }
  func.func @transform_5(%arg0: i32) -> (i32, i32, i32, i32) {
    %c0_i32 = arith.constant 0 : i32
    %c0_i32_0 = arith.constant 0 : i32
    %c0_i32_1 = arith.constant 0 : i32
    %c0_i32_2 = arith.constant 0 : i32
    return %arg0, %c0_i32, %c0_i32_0, %c0_i32_1 : i32, i32, i32, i32
  }
}

module attributes {stable_mosaic.version = 11 : i64} {
  func.func @kernel(%arg0: i32, %arg1: memref<1x4x8x8xf32, #tpu.memory_space<vmem>>, %arg2: memref<32x32xf32, #tpu.memory_space<vmem>>, %arg3: memref<1x32xf32, #tpu.memory_space<vmem>>, %arg4: memref<1x8x32xf32, #tpu.memory_space<vmem>>, %arg5: memref<1x8x32xf32, #tpu.memory_space<vmem>>) attributes {dimension_semantics = [#tpu.dimension_semantics<parallel>], iteration_bounds = array<i64: 2>, scalar_prefetch = 0 : i64, scratch_operands = 0 : i64, tpu.core_type = #tpu.core_type<tc>, window_params = [{transform_indices = @transform_0, window_bounds = array<i64: 1, 4, 8, 8>}, {pipeline_mode = #tpu.pipeline_mode<synchronous>, transform_indices = @transform_1, window_bounds = array<i64: 32, 32>}, {pipeline_mode = #tpu.pipeline_mode<synchronous>, transform_indices = @transform_2, window_bounds = array<i64: 1, 32>}, {transform_indices = @transform_3, window_bounds = array<i64: 1, 8, 32>}, {transform_indices = @transform_4, window_bounds = array<i64: 1, 8, 32>}]} {
    %cst = arith.constant 0.000000e+00 : f32
    %0 = vector.broadcast %cst : f32 to vector<8x32xf32>
    %c0 = arith.constant 0 : index
    %c0_0 = arith.constant 0 : index
    %c0_1 = arith.constant 0 : index
    %c0_2 = arith.constant 0 : index
    %1 = vector.load %arg1[%c0, %c0_0, %c0_1, %c0_2] : memref<1x4x8x8xf32, #tpu.memory_space<vmem>>, vector<1x1x8x8xf32>
    %2 = vector.shape_cast %1 : vector<1x1x8x8xf32> to vector<8x8xf32>
    %c0_3 = arith.constant 0 : index
    %c0_4 = arith.constant 0 : index
    %3 = vector.load %arg2[%c0_3, %c0_4] : memref<32x32xf32, #tpu.memory_space<vmem>>, vector<8x32xf32>
    %cst_5 = arith.constant dense<0.000000e+00> : vector<8x32xf32>
    %4 = tpu.matmul %2, %3, %cst_5 {dimension_numbers = #tpu.dot_dimension_numbers<[1], [0], [0], [1], [0, 0, 1, 1], [], []>} : vector<8x8xf32>, vector<8x32xf32>, vector<8x32xf32> -> vector<8x32xf32>
    %5 = arith.addf %0, %4 : vector<8x32xf32>
    %c0_6 = arith.constant 0 : index
    %c1 = arith.constant 1 : index
    %c0_7 = arith.constant 0 : index
    %c0_8 = arith.constant 0 : index
    %6 = vector.load %arg1[%c0_6, %c1, %c0_7, %c0_8] : memref<1x4x8x8xf32, #tpu.memory_space<vmem>>, vector<1x1x8x8xf32>
    %7 = vector.shape_cast %6 : vector<1x1x8x8xf32> to vector<8x8xf32>
    %c8 = arith.constant 8 : index
    %c0_9 = arith.constant 0 : index
    %8 = vector.load %arg2[%c8, %c0_9] : memref<32x32xf32, #tpu.memory_space<vmem>>, vector<8x32xf32>
    %cst_10 = arith.constant dense<0.000000e+00> : vector<8x32xf32>
    %9 = tpu.matmul %7, %8, %cst_10 {dimension_numbers = #tpu.dot_dimension_numbers<[1], [0], [0], [1], [0, 0, 1, 1], [], []>} : vector<8x8xf32>, vector<8x32xf32>, vector<8x32xf32> -> vector<8x32xf32>
    %10 = arith.addf %5, %9 : vector<8x32xf32>
    %c0_11 = arith.constant 0 : index
    %c2 = arith.constant 2 : index
    %c0_12 = arith.constant 0 : index
    %c0_13 = arith.constant 0 : index
    %11 = vector.load %arg1[%c0_11, %c2, %c0_12, %c0_13] : memref<1x4x8x8xf32, #tpu.memory_space<vmem>>, vector<1x1x8x8xf32>
    %12 = vector.shape_cast %11 : vector<1x1x8x8xf32> to vector<8x8xf32>
    %c16 = arith.constant 16 : index
    %c0_14 = arith.constant 0 : index
    %13 = vector.load %arg2[%c16, %c0_14] : memref<32x32xf32, #tpu.memory_space<vmem>>, vector<8x32xf32>
    %cst_15 = arith.constant dense<0.000000e+00> : vector<8x32xf32>
    %14 = tpu.matmul %12, %13, %cst_15 {dimension_numbers = #tpu.dot_dimension_numbers<[1], [0], [0], [1], [0, 0, 1, 1], [], []>} : vector<8x8xf32>, vector<8x32xf32>, vector<8x32xf32> -> vector<8x32xf32>
    %15 = arith.addf %10, %14 : vector<8x32xf32>
    %c0_16 = arith.constant 0 : index
    %c3 = arith.constant 3 : index
    %c0_17 = arith.constant 0 : index
    %c0_18 = arith.constant 0 : index
    %16 = vector.load %arg1[%c0_16, %c3, %c0_17, %c0_18] : memref<1x4x8x8xf32, #tpu.memory_space<vmem>>, vector<1x1x8x8xf32>
    %17 = vector.shape_cast %16 : vector<1x1x8x8xf32> to vector<8x8xf32>
    %c24 = arith.constant 24 : index
    %c0_19 = arith.constant 0 : index
    %18 = vector.load %arg2[%c24, %c0_19] : memref<32x32xf32, #tpu.memory_space<vmem>>, vector<8x32xf32>
    %cst_20 = arith.constant dense<0.000000e+00> : vector<8x32xf32>
    %19 = tpu.matmul %17, %18, %cst_20 {dimension_numbers = #tpu.dot_dimension_numbers<[1], [0], [0], [1], [0, 0, 1, 1], [], []>} : vector<8x8xf32>, vector<8x32xf32>, vector<8x32xf32> -> vector<8x32xf32>
    %20 = arith.addf %15, %19 : vector<8x32xf32>
    %c0_21 = arith.constant 0 : index
    %c0_22 = arith.constant 0 : index
    %21 = vector.load %arg3[%c0_21, %c0_22] : memref<1x32xf32, #tpu.memory_space<vmem>>, vector<1x32xf32>
    %22 = vector.broadcast %21 : vector<1x32xf32> to vector<8x32xf32>
    %23 = arith.addf %20, %22 : vector<8x32xf32>
    %c0_23 = arith.constant 0 : index
    %c0_24 = arith.constant 0 : index
    %c0_25 = arith.constant 0 : index
    %24 = vector.load %arg4[%c0_23, %c0_24, %c0_25] : memref<1x8x32xf32, #tpu.memory_space<vmem>>, vector<1x8x32xf32>
    %25 = vector.shape_cast %24 : vector<1x8x32xf32> to vector<8x32xf32>
    %26 = arith.addf %23, %25 : vector<8x32xf32>
    %c0_26 = arith.constant 0 : index
    %c0_27 = arith.constant 0 : index
    %c0_28 = arith.constant 0 : index
    %27 = vector.load %arg5[%c0_26, %c0_27, %c0_28] : memref<1x8x32xf32, #tpu.memory_space<vmem>>, vector<1x8x32xf32>
    %28 = vector.shape_cast %27 : vector<1x8x32xf32> to vector<8x32xf32>
    %29 = vector.shape_cast %26 : vector<8x32xf32> to vector<1x8x32xf32>
    tpu.vector_store %arg5[%c0_26, %c0_27, %c0_28], %29 {strides = array<i32>} : memref<1x8x32xf32, #tpu.memory_space<vmem>>, vector<1x8x32xf32>,
    return
  }
  func.func @transform_0(%arg0: i32) -> (i32, i32, i32, i32) {
    %c0_i32 = arith.constant 0 : i32
    %c0_i32_0 = arith.constant 0 : i32
    %c0_i32_1 = arith.constant 0 : i32
    %c0_i32_2 = arith.constant 0 : i32
    return %arg0, %c0_i32, %c0_i32_0, %c0_i32_1 : i32, i32, i32, i32
  }
  func.func @transform_1(%arg0: i32) -> (i32, i32) {
    %c0_i32 = arith.constant 0 : i32
    %c0_i32_0 = arith.constant 0 : i32
    %c0_i32_1 = arith.constant 0 : i32
    return %c0_i32, %c0_i32_0 : i32, i32
  }
  func.func @transform_2(%arg0: i32) -> (i32, i32) {
    %c0_i32 = arith.constant 0 : i32
    %c0_i32_0 = arith.constant 0 : i32
    %c0_i32_1 = arith.constant 0 : i32
    return %c0_i32, %c0_i32_0 : i32, i32
  }
  func.func @transform_3(%arg0: i32) -> (i32, i32, i32) {
    %c0_i32 = arith.constant 0 : i32
    %c0_i32_0 = arith.constant 0 : i32
    %c0_i32_1 = arith.constant 0 : i32
    return %arg0, %c0_i32, %c0_i32_0 : i32, i32, i32
  }
  func.func @transform_4(%arg0: i32) -> (i32, i32, i32) {
    %c0_i32 = arith.constant 0 : i32
    %c0_i32_0 = arith.constant 0 : i32
    %c0_i32_1 = arith.constant 0 : i32
    return %arg0, %c0_i32, %c0_i32_0 : i32, i32, i32
  }
}

module attributes {stable_mosaic.version = 11 : i64} {
  func.func @kernel(%arg0: i32, %arg1: memref<1x8x32xf32, #tpu.memory_space<vmem>>, %arg2: memref<32x64xf32, #tpu.memory_space<vmem>>, %arg3: memref<1x64xf32, #tpu.memory_space<vmem>>, %arg4: memref<1x4x8x8xf32, #tpu.memory_space<vmem>>, %arg5: memref<1x4x8x8xf32, #tpu.memory_space<vmem>>) attributes {dimension_semantics = [#tpu.dimension_semantics<parallel>], iteration_bounds = array<i64: 2>, scalar_prefetch = 0 : i64, scratch_operands = 0 : i64, tpu.core_type = #tpu.core_type<tc>, window_params = [{transform_indices = @transform_0, window_bounds = array<i64: 1, 8, 32>}, {pipeline_mode = #tpu.pipeline_mode<synchronous>, transform_indices = @transform_1, window_bounds = array<i64: 32, 64>}, {pipeline_mode = #tpu.pipeline_mode<synchronous>, transform_indices = @transform_2, window_bounds = array<i64: 1, 64>}, {transform_indices = @transform_3, window_bounds = array<i64: 1, 4, 8, 8>}, {transform_indices = @transform_4, window_bounds = array<i64: 1, 4, 8, 8>}]} {
    %c0 = arith.constant 0 : index
    %c0_0 = arith.constant 0 : index
    %c0_1 = arith.constant 0 : index
    %0 = vector.load %arg1[%c0, %c0_0, %c0_1] : memref<1x8x32xf32, #tpu.memory_space<vmem>>, vector<1x8x32xf32>
    %1 = vector.shape_cast %0 : vector<1x8x32xf32> to vector<8x32xf32>
    %c0_2 = arith.constant 0 : index
    %c0_3 = arith.constant 0 : index
    %2 = vector.load %arg2[%c0_2, %c0_3] : memref<32x64xf32, #tpu.memory_space<vmem>>, vector<32x64xf32>
    %cst = arith.constant dense<0.000000e+00> : vector<8x64xf32>
    %3 = tpu.matmul %1, %2, %cst {dimension_numbers = #tpu.dot_dimension_numbers<[1], [0], [0], [1], [0, 0, 1, 1], [], []>} : vector<8x32xf32>, vector<32x64xf32>, vector<8x64xf32> -> vector<8x64xf32>
    %c0_4 = arith.constant 0 : index
    %c0_5 = arith.constant 0 : index
    %4 = vector.load %arg3[%c0_4, %c0_5] : memref<1x64xf32, #tpu.memory_space<vmem>>, vector<1x64xf32>
    %5 = vector.broadcast %4 : vector<1x64xf32> to vector<8x64xf32>
    %6 = arith.addf %3, %5 : vector<8x64xf32>
    %7 = vector.extract_strided_slice %6 {offsets = [0, 0], sizes = [8, 8], strides = [1, 1]} : vector<8x64xf32> to vector<8x8xf32>
    %c0_6 = arith.constant 0 : index
    %c0_7 = arith.constant 0 : index
    %c0_8 = arith.constant 0 : index
    %c0_9 = arith.constant 0 : index
    %8 = vector.load %arg4[%c0_6, %c0_7, %c0_8, %c0_9] : memref<1x4x8x8xf32, #tpu.memory_space<vmem>>, vector<1x1x8x8xf32>
    %9 = vector.shape_cast %8 : vector<1x1x8x8xf32> to vector<8x8xf32>
    %10 = vector.shape_cast %7 : vector<8x8xf32> to vector<1x1x8x8xf32>
    tpu.vector_store %arg4[%c0_6, %c0_7, %c0_8, %c0_9], %10 {strides = array<i32>} : memref<1x4x8x8xf32, #tpu.memory_space<vmem>>, vector<1x1x8x8xf32>,
    %11 = vector.extract_strided_slice %6 {offsets = [0, 8], sizes = [8, 8], strides = [1, 1]} : vector<8x64xf32> to vector<8x8xf32>
    %c0_10 = arith.constant 0 : index
    %c1 = arith.constant 1 : index
    %c0_11 = arith.constant 0 : index
    %c0_12 = arith.constant 0 : index
    %12 = vector.load %arg4[%c0_10, %c1, %c0_11, %c0_12] : memref<1x4x8x8xf32, #tpu.memory_space<vmem>>, vector<1x1x8x8xf32>
    %13 = vector.shape_cast %12 : vector<1x1x8x8xf32> to vector<8x8xf32>
    %14 = vector.shape_cast %11 : vector<8x8xf32> to vector<1x1x8x8xf32>
    tpu.vector_store %arg4[%c0_10, %c1, %c0_11, %c0_12], %14 {strides = array<i32>} : memref<1x4x8x8xf32, #tpu.memory_space<vmem>>, vector<1x1x8x8xf32>,
    %15 = vector.extract_strided_slice %6 {offsets = [0, 16], sizes = [8, 8], strides = [1, 1]} : vector<8x64xf32> to vector<8x8xf32>
    %c0_13 = arith.constant 0 : index
    %c2 = arith.constant 2 : index
    %c0_14 = arith.constant 0 : index
    %c0_15 = arith.constant 0 : index
    %16 = vector.load %arg4[%c0_13, %c2, %c0_14, %c0_15] : memref<1x4x8x8xf32, #tpu.memory_space<vmem>>, vector<1x1x8x8xf32>
    %17 = vector.shape_cast %16 : vector<1x1x8x8xf32> to vector<8x8xf32>
    %18 = vector.shape_cast %15 : vector<8x8xf32> to vector<1x1x8x8xf32>
    tpu.vector_store %arg4[%c0_13, %c2, %c0_14, %c0_15], %18 {strides = array<i32>} : memref<1x4x8x8xf32, #tpu.memory_space<vmem>>, vector<1x1x8x8xf32>,
    %19 = vector.extract_strided_slice %6 {offsets = [0, 24], sizes = [8, 8], strides = [1, 1]} : vector<8x64xf32> to vector<8x8xf32>
    %c0_16 = arith.constant 0 : index
    %c3 = arith.constant 3 : index
    %c0_17 = arith.constant 0 : index
    %c0_18 = arith.constant 0 : index
    %20 = vector.load %arg4[%c0_16, %c3, %c0_17, %c0_18] : memref<1x4x8x8xf32, #tpu.memory_space<vmem>>, vector<1x1x8x8xf32>
    %21 = vector.shape_cast %20 : vector<1x1x8x8xf32> to vector<8x8xf32>
    %22 = vector.shape_cast %19 : vector<8x8xf32> to vector<1x1x8x8xf32>
    tpu.vector_store %arg4[%c0_16, %c3, %c0_17, %c0_18], %22 {strides = array<i32>} : memref<1x4x8x8xf32, #tpu.memory_space<vmem>>, vector<1x1x8x8xf32>,
    %23 = vector.extract_strided_slice %6 {offsets = [0, 32], sizes = [8, 8], strides = [1, 1]} : vector<8x64xf32> to vector<8x8xf32>
    %c0_19 = arith.constant 0 : index
    %c0_20 = arith.constant 0 : index
    %c0_21 = arith.constant 0 : index
    %c0_22 = arith.constant 0 : index
    %24 = vector.load %arg5[%c0_19, %c0_20, %c0_21, %c0_22] : memref<1x4x8x8xf32, #tpu.memory_space<vmem>>, vector<1x1x8x8xf32>
    %25 = vector.shape_cast %24 : vector<1x1x8x8xf32> to vector<8x8xf32>
    %26 = vector.shape_cast %23 : vector<8x8xf32> to vector<1x1x8x8xf32>
    tpu.vector_store %arg5[%c0_19, %c0_20, %c0_21, %c0_22], %26 {strides = array<i32>} : memref<1x4x8x8xf32, #tpu.memory_space<vmem>>, vector<1x1x8x8xf32>,
    %27 = vector.extract_strided_slice %6 {offsets = [0, 40], sizes = [8, 8], strides = [1, 1]} : vector<8x64xf32> to vector<8x8xf32>
    %c0_23 = arith.constant 0 : index
    %c1_24 = arith.constant 1 : index
    %c0_25 = arith.constant 0 : index
    %c0_26 = arith.constant 0 : index
    %28 = vector.load %arg5[%c0_23, %c1_24, %c0_25, %c0_26] : memref<1x4x8x8xf32, #tpu.memory_space<vmem>>, vector<1x1x8x8xf32>
    %29 = vector.shape_cast %28 : vector<1x1x8x8xf32> to vector<8x8xf32>
    %30 = vector.shape_cast %27 : vector<8x8xf32> to vector<1x1x8x8xf32>
    tpu.vector_store %arg5[%c0_23, %c1_24, %c0_25, %c0_26], %30 {strides = array<i32>} : memref<1x4x8x8xf32, #tpu.memory_space<vmem>>, vector<1x1x8x8xf32>,
    %31 = vector.extract_strided_slice %6 {offsets = [0, 48], sizes = [8, 8], strides = [1, 1]} : vector<8x64xf32> to vector<8x8xf32>
    %c0_27 = arith.constant 0 : index
    %c2_28 = arith.constant 2 : index
    %c0_29 = arith.constant 0 : index
    %c0_30 = arith.constant 0 : index
    %32 = vector.load %arg5[%c0_27, %c2_28, %c0_29, %c0_30] : memref<1x4x8x8xf32, #tpu.memory_space<vmem>>, vector<1x1x8x8xf32>
    %33 = vector.shape_cast %32 : vector<1x1x8x8xf32> to vector<8x8xf32>
    %34 = vector.shape_cast %31 : vector<8x8xf32> to vector<1x1x8x8xf32>
    tpu.vector_store %arg5[%c0_27, %c2_28, %c0_29, %c0_30], %34 {strides = array<i32>} : memref<1x4x8x8xf32, #tpu.memory_space<vmem>>, vector<1x1x8x8xf32>,
    %35 = vector.extract_strided_slice %6 {offsets = [0, 56], sizes = [8, 8], strides = [1, 1]} : vector<8x64xf32> to vector<8x8xf32>
    %c0_31 = arith.constant 0 : index
    %c3_32 = arith.constant 3 : index
    %c0_33 = arith.constant 0 : index
    %c0_34 = arith.constant 0 : index
    %36 = vector.load %arg5[%c0_31, %c3_32, %c0_33, %c0_34] : memref<1x4x8x8xf32, #tpu.memory_space<vmem>>, vector<1x1x8x8xf32>
    %37 = vector.shape_cast %36 : vector<1x1x8x8xf32> to vector<8x8xf32>
    %38 = vector.shape_cast %35 : vector<8x8xf32> to vector<1x1x8x8xf32>
    tpu.vector_store %arg5[%c0_31, %c3_32, %c0_33, %c0_34], %38 {strides = array<i32>} : memref<1x4x8x8xf32, #tpu.memory_space<vmem>>, vector<1x1x8x8xf32>,
    return
  }
  func.func @transform_0(%arg0: i32) -> (i32, i32, i32) {
    %c0_i32 = arith.constant 0 : i32
    %c0_i32_0 = arith.constant 0 : i32
    %c0_i32_1 = arith.constant 0 : i32
    return %arg0, %c0_i32, %c0_i32_0 : i32, i32, i32
  }
  func.func @transform_1(%arg0: i32) -> (i32, i32) {
    %c0_i32 = arith.constant 0 : i32
    %c0_i32_0 = arith.constant 0 : i32
    %c0_i32_1 = arith.constant 0 : i32
    return %c0_i32, %c0_i32_0 : i32, i32
  }
  func.func @transform_2(%arg0: i32) -> (i32, i32) {
    %c0_i32 = arith.constant 0 : i32
    %c0_i32_0 = arith.constant 0 : i32
    %c0_i32_1 = arith.constant 0 : i32
    return %c0_i32, %c0_i32_0 : i32, i32
  }
  func.func @transform_3(%arg0: i32) -> (i32, i32, i32, i32) {
    %c0_i32 = arith.constant 0 : i32
    %c0_i32_0 = arith.constant 0 : i32
    %c0_i32_1 = arith.constant 0 : i32
    %c0_i32_2 = arith.constant 0 : i32
    return %arg0, %c0_i32, %c0_i32_0, %c0_i32_1 : i32, i32, i32, i32
  }
  func.func @transform_4(%arg0: i32) -> (i32, i32, i32, i32) {
    %c0_i32 = arith.constant 0 : i32
    %c0_i32_0 = arith.constant 0 : i32
    %c0_i32_1 = arith.constant 0 : i32
    %c0_i32_2 = arith.constant 0 : i32
    return %arg0, %c0_i32, %c0_i32_0, %c0_i32_1 : i32, i32, i32, i32
  }
}

module attributes {stable_mosaic.version = 11 : i64} {
  func.func @kernel(%arg0: i32, %arg1: i32, %arg2: memref<1x1x8x8xf32, #tpu.memory_space<vmem>>, %arg3: memref<1x1x8x8xf32, #tpu.memory_space<vmem>>, %arg4: memref<1x1x8x8xf32, #tpu.memory_space<vmem>>, %arg5: memref<1x1x8x8xf32, #tpu.memory_space<vmem>>, %arg6: memref<1x1x8x8xf32, #tpu.memory_space<vmem>>) attributes {dimension_semantics = [#tpu.dimension_semantics<parallel>, #tpu.dimension_semantics<parallel>], iteration_bounds = array<i64: 2, 4>, scalar_prefetch = 0 : i64, scratch_operands = 0 : i64, tpu.core_type = #tpu.core_type<tc>, window_params = [{transform_indices = @transform_0, window_bounds = array<i64: 1, 1, 8, 8>}, {transform_indices = @transform_1, window_bounds = array<i64: 1, 1, 8, 8>}, {transform_indices = @transform_2, window_bounds = array<i64: 1, 1, 8, 8>}, {transform_indices = @transform_3, window_bounds = array<i64: 1, 1, 8, 8>}, {transform_indices = @transform_4, window_bounds = array<i64: 1, 1, 8, 8>}]} {
    %c0 = arith.constant 0 : index
    %c0_0 = arith.constant 0 : index
    %c0_1 = arith.constant 0 : index
    %c0_2 = arith.constant 0 : index
    %0 = vector.load %arg2[%c0, %c0_0, %c0_1, %c0_2] : memref<1x1x8x8xf32, #tpu.memory_space<vmem>>, vector<1x1x8x8xf32>
    %1 = vector.shape_cast %0 : vector<1x1x8x8xf32> to vector<8x8xf32>
    %cst = arith.constant 0.353553385 : f32
    %2 = vector.broadcast %cst : f32 to vector<8x8xf32>
    %3 = arith.mulf %1, %2 : vector<8x8xf32>
    %c0_3 = arith.constant 0 : index
    %c0_4 = arith.constant 0 : index
    %c0_5 = arith.constant 0 : index
    %c0_6 = arith.constant 0 : index
    %4 = vector.load %arg3[%c0_3, %c0_4, %c0_5, %c0_6] : memref<1x1x8x8xf32, #tpu.memory_space<vmem>>, vector<1x1x8x8xf32>
    %5 = vector.shape_cast %4 : vector<1x1x8x8xf32> to vector<8x8xf32>
    %c0_7 = arith.constant 0 : index
    %c0_8 = arith.constant 0 : index
    %c0_9 = arith.constant 0 : index
    %c0_10 = arith.constant 0 : index
    %6 = vector.load %arg4[%c0_7, %c0_8, %c0_9, %c0_10] : memref<1x1x8x8xf32, #tpu.memory_space<vmem>>, vector<1x1x8x8xf32>
    %7 = vector.shape_cast %6 : vector<1x1x8x8xf32> to vector<8x8xf32>
    %cst_11 = arith.constant dense<0.000000e+00> : vector<8x8xf32>
    %8 = tpu.matmul %3, %5, %cst_11 {dimension_numbers = #tpu.dot_dimension_numbers<[1], [1], [0], [0], [0, 0, 1, 0], [], []>} : vector<8x8xf32>, vector<8x8xf32>, vector<8x8xf32> -> vector<8x8xf32>
    %cst_12 = arith.constant dense<0xFF800000> : vector<8xf32>
    %9 = vector.multi_reduction <maximumf>, %8, %cst_12 [1] : vector<8x8xf32> to vector<8xf32>
    %10 = vector.shape_cast %9 : vector<8xf32> to vector<8x1xf32>
    %11 = vector.broadcast %10 : vector<8x1xf32> to vector<8x8xf32>
    %12 = arith.subf %8, %11 : vector<8x8xf32>
    %13 = math.exp %12 : vector<8x8xf32>
    %cst_13 = arith.constant dense<0.000000e+00> : vector<8xf32>
    %14 = vector.multi_reduction <add>, %13, %cst_13 [1] : vector<8x8xf32> to vector<8xf32>
    %15 = vector.shape_cast %14 : vector<8xf32> to vector<8x1xf32>
    %16 = tpu.reciprocal %15 : vector<8x1xf32> -> vector<8x1xf32>
    %17 = vector.broadcast %16 : vector<8x1xf32> to vector<8x8xf32>
    %18 = arith.mulf %13, %17 : vector<8x8xf32>
    %c0_14 = arith.constant 0 : index
    %c0_15 = arith.constant 0 : index
    %c0_16 = arith.constant 0 : index
    %c0_17 = arith.constant 0 : index
    %19 = vector.load %arg6[%c0_14, %c0_15, %c0_16, %c0_17] : memref<1x1x8x8xf32, #tpu.memory_space<vmem>>, vector<1x1x8x8xf32>
    %20 = vector.shape_cast %19 : vector<1x1x8x8xf32> to vector<8x8xf32>
    %21 = vector.shape_cast %18 : vector<8x8xf32> to vector<1x1x8x8xf32>
    tpu.vector_store %arg6[%c0_14, %c0_15, %c0_16, %c0_17], %21 {strides = array<i32>} : memref<1x1x8x8xf32, #tpu.memory_space<vmem>>, vector<1x1x8x8xf32>,
    %cst_18 = arith.constant dense<0.000000e+00> : vector<8x8xf32>
    %22 = tpu.matmul %18, %7, %cst_18 {dimension_numbers = #tpu.dot_dimension_numbers<[1], [0], [0], [1], [0, 0, 1, 1], [], []>} : vector<8x8xf32>, vector<8x8xf32>, vector<8x8xf32> -> vector<8x8xf32>
    %c0_19 = arith.constant 0 : index
    %c0_20 = arith.constant 0 : index
    %c0_21 = arith.constant 0 : index
    %c0_22 = arith.constant 0 : index
    %23 = vector.load %arg5[%c0_19, %c0_20, %c0_21, %c0_22] : memref<1x1x8x8xf32, #tpu.memory_space<vmem>>, vector<1x1x8x8xf32>
    %24 = vector.shape_cast %23 : vector<1x1x8x8xf32> to vector<8x8xf32>
    %25 = vector.shape_cast %22 : vector<8x8xf32> to vector<1x1x8x8xf32>
    tpu.vector_store %arg5[%c0_19, %c0_20, %c0_21, %c0_22], %25 {strides = array<i32>} : memref<1x1x8x8xf32, #tpu.memory_space<vmem>>, vector<1x1x8x8xf32>,
    return
  }
  func.func @transform_0(%arg0: i32, %arg1: i32) -> (i32, i32, i32, i32) {
    %c0_i32 = arith.constant 0 : i32
    %c0_i32_0 = arith.constant 0 : i32
    %c0_i32_1 = arith.constant 0 : i32
    return %arg0, %arg1, %c0_i32, %c0_i32_0 : i32, i32, i32, i32
  }
  func.func @transform_1(%arg0: i32, %arg1: i32) -> (i32, i32, i32, i32) {
    %c0_i32 = arith.constant 0 : i32
    %c0_i32_0 = arith.constant 0 : i32
    %c0_i32_1 = arith.constant 0 : i32
    return %arg0, %arg1, %c0_i32, %c0_i32_0 : i32, i32, i32, i32
  }
  func.func @transform_2(%arg0: i32, %arg1: i32) -> (i32, i32, i32, i32) {
    %c0_i32 = arith.constant 0 : i32
    %c0_i32_0 = arith.constant 0 : i32
    %c0_i32_1 = arith.constant 0 : i32
    return %arg0, %arg1, %c0_i32, %c0_i32_0 : i32, i32, i32, i32
  }
  func.func @transform_3(%arg0: i32, %arg1: i32) -> (i32, i32, i32, i32) {
    %c0_i32 = arith.constant 0 : i32
    %c0_i32_0 = arith.constant 0 : i32
    %c0_i32_1 = arith.constant 0 : i32
    return %arg0, %arg1, %c0_i32, %c0_i32_0 : i32, i32, i32, i32
  }
  func.func @transform_4(%arg0: i32, %arg1: i32) -> (i32, i32, i32, i32) {
    %c0_i32 = arith.constant 0 : i32
    %c0_i32_0 = arith.constant 0 : i32
    %c0_i32_1 = arith.constant 0 : i32
    return %arg0, %arg1, %c0_i32, %c0_i32_0 : i32, i32, i32, i32
  }
}

module attributes {stable_mosaic.version = 11 : i64} {
  func.func @kernel(%arg0: i32, %arg1: memref<1x8x32xf32, #tpu.memory_space<vmem>>, %arg2: memref<1x32xf32, #tpu.memory_space<vmem>>, %arg3: memref<1x32xf32, #tpu.memory_space<vmem>>, %arg4: memref<32x64xf32, #tpu.memory_space<vmem>>, %arg5: memref<1x64xf32, #tpu.memory_space<vmem>>, %arg6: memref<64x32xf32, #tpu.memory_space<vmem>>, %arg7: memref<1x32xf32, #tpu.memory_space<vmem>>, %arg8: memref<1x8x32xf32, #tpu.memory_space<vmem>>) attributes {dimension_semantics = [#tpu.dimension_semantics<parallel>], iteration_bounds = array<i64: 2>, scalar_prefetch = 0 : i64, scratch_operands = 0 : i64, tpu.core_type = #tpu.core_type<tc>, window_params = [{transform_indices = @transform_0, window_bounds = array<i64: 1, 8, 32>}, {pipeline_mode = #tpu.pipeline_mode<synchronous>, transform_indices = @transform_1, window_bounds = array<i64: 1, 32>}, {pipeline_mode = #tpu.pipeline_mode<synchronous>, transform_indices = @transform_2, window_bounds = array<i64: 1, 32>}, {pipeline_mode = #tpu.pipeline_mode<synchronous>, transform_indices = @transform_3, window_bounds = array<i64: 32, 64>}, {pipeline_mode = #tpu.pipeline_mode<synchronous>, transform_indices = @transform_4, window_bounds = array<i64: 1, 64>}, {pipeline_mode = #tpu.pipeline_mode<synchronous>, transform_indices = @transform_5, window_bounds = array<i64: 64, 32>}, {pipeline_mode = #tpu.pipeline_mode<synchronous>, transform_indices = @transform_6, window_bounds = array<i64: 1, 32>}, {transform_indices = @transform_7, window_bounds = array<i64: 1, 8, 32>}]} {
    %c0 = arith.constant 0 : index
    %c0_0 = arith.constant 0 : index
    %c0_1 = arith.constant 0 : index
    %0 = vector.load %arg1[%c0, %c0_0, %c0_1] : memref<1x8x32xf32, #tpu.memory_space<vmem>>, vector<1x8x32xf32>
    %1 = vector.shape_cast %0 : vector<1x8x32xf32> to vector<8x32xf32>
    %c0_2 = arith.constant 0 : index
    %c0_3 = arith.constant 0 : index
    %2 = vector.load %arg2[%c0_2, %c0_3] : memref<1x32xf32, #tpu.memory_space<vmem>>, vector<1x32xf32>
    %c0_4 = arith.constant 0 : index
    %c0_5 = arith.constant 0 : index
    %3 = vector.load %arg3[%c0_4, %c0_5] : memref<1x32xf32, #tpu.memory_space<vmem>>, vector<1x32xf32>
    %cst = arith.constant dense<0.000000e+00> : vector<8xf32>
    %4 = vector.multi_reduction <add>, %1, %cst [1] : vector<8x32xf32> to vector<8xf32>
    %5 = vector.shape_cast %4 : vector<8xf32> to vector<8x1xf32>
    %cst_6 = arith.constant 3.200000e+01 : f32
    %6 = vector.broadcast %cst_6 : f32 to vector<8x1xf32>
    %7 = arith.divf %5, %6 : vector<8x1xf32>
    %8 = vector.broadcast %7 : vector<8x1xf32> to vector<8x32xf32>
    %9 = arith.subf %1, %8 : vector<8x32xf32>
    %10 = arith.mulf %9, %9 : vector<8x32xf32>
    %cst_7 = arith.constant dense<0.000000e+00> : vector<8xf32>
    %11 = vector.multi_reduction <add>, %10, %cst_7 [1] : vector<8x32xf32> to vector<8xf32>
    %12 = vector.shape_cast %11 : vector<8xf32> to vector<8x1xf32>
    %cst_8 = arith.constant 3.200000e+01 : f32
    %13 = vector.broadcast %cst_8 : f32 to vector<8x1xf32>
    %14 = arith.divf %12, %13 : vector<8x1xf32>
    %15 = vector.broadcast %7 : vector<8x1xf32> to vector<8x32xf32>
    %16 = arith.subf %1, %15 : vector<8x32xf32>
    %cst_9 = arith.constant 9.99999997E-7 : f32
    %17 = vector.broadcast %cst_9 : f32 to vector<8x1xf32>
    %18 = arith.addf %14, %17 : vector<8x1xf32>
    %19 = math.rsqrt %18 : vector<8x1xf32>
    %20 = vector.broadcast %19 : vector<8x1xf32> to vector<8x32xf32>
    %21 = arith.mulf %16, %20 : vector<8x32xf32>
    %22 = vector.broadcast %2 : vector<1x32xf32> to vector<8x32xf32>
    %23 = arith.mulf %21, %22 : vector<8x32xf32>
    %24 = vector.broadcast %3 : vector<1x32xf32> to vector<8x32xf32>
    %25 = arith.addf %23, %24 : vector<8x32xf32>
    %c0_10 = arith.constant 0 : index
    %c0_11 = arith.constant 0 : index
    %26 = vector.load %arg4[%c0_10, %c0_11] : memref<32x64xf32, #tpu.memory_space<vmem>>, vector<32x64xf32>
    %cst_12 = arith.constant dense<0.000000e+00> : vector<8x64xf32>
    %27 = tpu.matmul %25, %26, %cst_12 {dimension_numbers = #tpu.dot_dimension_numbers<[1], [0], [0], [1], [0, 0, 1, 1], [], []>} : vector<8x32xf32>, vector<32x64xf32>, vector<8x64xf32> -> vector<8x64xf32>
    %c0_13 = arith.constant 0 : index
    %c0_14 = arith.constant 0 : index
    %28 = vector.load %arg5[%c0_13, %c0_14] : memref<1x64xf32, #tpu.memory_space<vmem>>, vector<1x64xf32>
    %29 = vector.broadcast %28 : vector<1x64xf32> to vector<8x64xf32>
    %30 = arith.addf %27, %29 : vector<8x64xf32>
    %cst_15 = arith.constant 5.000000e-01 : f32
    %31 = vector.broadcast %cst_15 : f32 to vector<8x64xf32>
    %32 = arith.mulf %31, %30 : vector<8x64xf32>
    %cst_16 = arith.constant 0.707106769 : f32
    %33 = vector.broadcast %cst_16 : f32 to vector<8x64xf32>
    %34 = arith.mulf %30, %33 : vector<8x64xf32>
    %35 = math.erf %34 : vector<8x64xf32>
    %cst_17 = arith.constant 1.000000e+00 : f32
    %36 = vector.broadcast %cst_17 : f32 to vector<8x64xf32>
    %37 = arith.addf %36, %35 : vector<8x64xf32>
    %38 = arith.mulf %32, %37 : vector<8x64xf32>
    %c0_18 = arith.constant 0 : index
    %c0_19 = arith.constant 0 : index
    %39 = vector.load %arg6[%c0_18, %c0_19] : memref<64x32xf32, #tpu.memory_space<vmem>>, vector<64x32xf32>
    %cst_20 = arith.constant dense<0.000000e+00> : vector<8x32xf32>
    %40 = tpu.matmul %38, %39, %cst_20 {dimension_numbers = #tpu.dot_dimension_numbers<[1], [0], [0], [1], [0, 0, 1, 1], [], []>} : vector<8x64xf32>, vector<64x32xf32>, vector<8x32xf32> -> vector<8x32xf32>
    %c0_21 = arith.constant 0 : index
    %c0_22 = arith.constant 0 : index
    %41 = vector.load %arg7[%c0_21, %c0_22] : memref<1x32xf32, #tpu.memory_space<vmem>>, vector<1x32xf32>
    %42 = vector.broadcast %41 : vector<1x32xf32> to vector<8x32xf32>
    %43 = arith.addf %40, %42 : vector<8x32xf32>
    %44 = arith.addf %43, %1 : vector<8x32xf32>
    %c0_23 = arith.constant 0 : index
    %c0_24 = arith.constant 0 : index
    %c0_25 = arith.constant 0 : index
    %45 = vector.load %arg8[%c0_23, %c0_24, %c0_25] : memref<1x8x32xf32, #tpu.memory_space<vmem>>, vector<1x8x32xf32>
    %46 = vector.shape_cast %45 : vector<1x8x32xf32> to vector<8x32xf32>
    %47 = vector.shape_cast %44 : vector<8x32xf32> to vector<1x8x32xf32>
    tpu.vector_store %arg8[%c0_23, %c0_24, %c0_25], %47 {strides = array<i32>} : memref<1x8x32xf32, #tpu.memory_space<vmem>>, vector<1x8x32xf32>,
    return
  }
  func.func @transform_0(%arg0: i32) -> (i32, i32, i32) {
    %c0_i32 = arith.constant 0 : i32
    %c0_i32_0 = arith.constant 0 : i32
    %c0_i32_1 = arith.constant 0 : i32
    return %arg0, %c0_i32, %c0_i32_0 : i32, i32, i32
  }
  func.func @transform_1(%arg0: i32) -> (i32, i32) {
    %c0_i32 = arith.constant 0 : i32
    %c0_i32_0 = arith.constant 0 : i32
    %c0_i32_1 = arith.constant 0 : i32
    return %c0_i32, %c0_i32_0 : i32, i32
  }
  func.func @transform_2(%arg0: i32) -> (i32, i32) {
    %c0_i32 = arith.constant 0 : i32
    %c0_i32_0 = arith.constant 0 : i32
    %c0_i32_1 = arith.constant 0 : i32
    return %c0_i32, %c0_i32_0 : i32, i32
  }
  func.func @transform_3(%arg0: i32) -> (i32, i32) {
    %c0_i32 = arith.constant 0 : i32
    %c0_i32_0 = arith.constant 0 : i32
    %c0_i32_1 = arith.constant 0 : i32
    return %c0_i32, %c0_i32_0 : i32, i32
  }
  func.func @transform_4(%arg0: i32) -> (i32, i32) {
    %c0_i32 = arith.constant 0 : i32
    %c0_i32_0 = arith.constant 0 : i32
    %c0_i32_1 = arith.constant 0 : i32
    return %c0_i32, %c0_i32_0 : i32, i32
  }
  func.func @transform_5(%arg0: i32) -> (i32, i32) {
    %c0_i32 = arith.constant 0 : i32
    %c0_i32_0 = arith.constant 0 : i32
    %c0_i32_1 = arith.constant 0 : i32
    return %c0_i32, %c0_i32_0 : i32, i32
  }
  func.func @transform_6(%arg0: i32) -> (i32, i32) {
    %c0_i32 = arith.constant 0 : i32
    %c0_i32_0 = arith.constant 0 : i32
    %c0_i32_1 = arith.constant 0 : i32
    return %c0_i32, %c0_i32_0 : i32, i32
  }
  func.func @transform_7(%arg0: i32) -> (i32, i32, i32) {
    %c0_i32 = arith.constant 0 : i32
    %c0_i32_0 = arith.constant 0 : i32
    %c0_i32_1 = arith.constant 0 : i32
    return %arg0, %c0_i32, %c0_i32_0 : i32, i32, i32
  }
}

</mosaic_0001>

<llo_original>
// kernel: decoder_block.8
$region0: #{decoder_block.8}
  #allocation0 [shape = 'u32[]', space=smem, size = 0x4, offset = 0x4, fixed_abs, tag = 'smem constant byte address 0x4 - core index']
  #allocation1 [shape = 'u32[144,128]{1,0:T(1,128)}', space=vmem, size = 0x12000, scoped, tag = 'internal scratch']
  %s0 = inlined_call_operand.vmem [shape: f32[2,8,32], index: 0, kind: input, shape index: {}]
  %s1 = inlined_call_operand.vmem [shape: f32[1,32], index: 1, kind: input, shape index: {}]
  %s2 = inlined_call_operand.vmem [shape: f32[1,32], index: 2, kind: input, shape index: {}]
  %s3 = inlined_call_operand.vmem [shape: f32[32,96], index: 3, kind: input, shape index: {}]
  %s4 = inlined_call_operand.vmem [shape: f32[1,96], index: 4, kind: input, shape index: {}]
  %s5 = inlined_call_operand.vmem [shape: f32[2,4,8,8], index: 5, kind: output, shape index: {0}]
  %s6 = inlined_call_operand.vmem [shape: f32[2,4,8,8], index: 6, kind: output, shape index: {1}]
  %s7 = inlined_call_operand.vmem [shape: f32[2,4,8,8], index: 7, kind: output, shape index: {2}]
  %8 = xla_tuple %s5, %s6, %s7
  %s9 = sld [smem:[#allocation0]]
  $region69: #{decoder_block.8} parent=0
    _
  %s11 = ssub.s32 1, %s9
  %s12 = scalar_select 0, %s11, %s9
  loop: start=0, step=1, limit=4
  $region2: #{decoder_block.8} parent=0 // loop_pre_header
    _
  $region3: #{decoder_block.8} parent=0 // loop_header
    %s14 = sphi 0, %s18
    %p15 = scmp.ge.s32.totalorder %s14, 4
    %s24 = sphi 0, %s26
    %s27 = sphi 0, %s24
    %s28 = sphi 0, %s27
    %s44 = sphi 0, %s28
    %s48 = sphi 0, %s48
    %s50 = sphi 0, %s48
    %s51 = sphi 0, %s50
    %s65 = sphi 0, %s51
    %s69 = sphi 0, %s69
    %s71 = sphi 0, %s69
    %s72 = sphi 0, %s71
    %s86 = sphi 0, %s72
    %s90 = sphi 0, %s90
    %s92 = sphi 0, %s90
    %s93 = sphi 0, %s92
    %s107 = sphi 0, %s93
    %s111 = sphi 0, %s111
    %s113 = sphi 0, %s111
    %s114 = sphi 0, %s113
    %s128 = sphi 0, %s114
    %s134 = sphi 0, %s136
    %s137 = sphi 0, %s134
    %s138 = sphi 0, %s137
    %s154 = sphi 0, %s138
    %s160 = sphi 0, %s162
    %s163 = sphi 0, %s160
    %s164 = sphi 0, %s163
    %s180 = sphi 0, %s164
    %s186 = sphi 0, %s188
    %s189 = sphi 0, %s186
    %s190 = sphi 0, %s189
    %s206 = sphi 0, %s190
  $region4: #{decoder_block.8} parent=0 // loop_header_branch
    %17 = sbr.rel (%p15) target = $region8
  $region5: #{decoder_block.8} parent=0 // loop_body
    %s19 = ssub.s32 %s14, 1
    %s20 = ssub.s32 %s14, 2
    %s21 = sadd.s32 %s14, 1
    %s22 = ssub.s32 %s14, %s21
    %p23 = scmp.eq.s32.totalorder %s22, 0
    %s25 = sadd.s32 %s24, 1
    %s26 = scalar_select %p23, %s24, %s25
    %p29 = pneg %p23
    %p30 = scmp.eq.s32.totalorder %s14, 1
    %p31 = por %p29, %p30
    %p32 = scmp.ne.s32.totalorder %s24, %s27
    %p33 = scmp.eq.s32.totalorder %s14, 0
    %p34 = por %p32, %p33
    %p35 = scmp.ne.s32.totalorder %s24, %s27
    %p36 = scmp.eq.s32.totalorder %s19, 1
    %p37 = por %p35, %p36
    %p38 = scmp.ne.s32.totalorder %s27, %s28
    %p39 = scmp.eq.s32.totalorder %s19, 0
    %p40 = por %p38, %p39
    %p41 = scmp.ne.s32.totalorder %s27, %s28
    %p42 = scmp.eq.s32.totalorder %s20, 1
    %p43 = por %p41, %p42
    %p45 = scmp.ne.s32.totalorder %s28, %s44
    %p46 = scmp.eq.s32.totalorder %s20, 0
    %p47 = por %p45, %p46
    %s49 = sadd.s32 %s48, 1
    %p52 = scmp.eq.s32.totalorder %s14, 1
    %p53 = scmp.ne.s32.totalorder %s48, %s50
    %p54 = scmp.eq.s32.totalorder %s14, 0
    %p55 = por %p53, %p54
    %p56 = scmp.ne.s32.totalorder %s48, %s50
    %p57 = scmp.eq.s32.totalorder %s19, 1
    %p58 = por %p56, %p57
    %p59 = scmp.ne.s32.totalorder %s50, %s51
    %p60 = scmp.eq.s32.totalorder %s19, 0
    %p61 = por %p59, %p60
    %p62 = scmp.ne.s32.totalorder %s50, %s51
    %p63 = scmp.eq.s32.totalorder %s20, 1
    %p64 = por %p62, %p63
    %p66 = scmp.ne.s32.totalorder %s51, %s65
    %p67 = scmp.eq.s32.totalorder %s20, 0
    %p68 = por %p66, %p67
    %s70 = sadd.s32 %s69, 1
    %p73 = scmp.eq.s32.totalorder %s14, 1
    %p74 = scmp.ne.s32.totalorder %s69, %s71
    %p75 = scmp.eq.s32.totalorder %s14, 0
    %p76 = por %p74, %p75
    %p77 = scmp.ne.s32.totalorder %s69, %s71
    %p78 = scmp.eq.s32.totalorder %s19, 1
    %p79 = por %p77, %p78
    %p80 = scmp.ne.s32.totalorder %s71, %s72
    %p81 = scmp.eq.s32.totalorder %s19, 0
    %p82 = por %p80, %p81
    %p83 = scmp.ne.s32.totalorder %s71, %s72
    %p84 = scmp.eq.s32.totalorder %s20, 1
    %p85 = por %p83, %p84
    %p87 = scmp.ne.s32.totalorder %s72, %s86
    %p88 = scmp.eq.s32.totalorder %s20, 0
    %p89 = por %p87, %p88
    %s91 = sadd.s32 %s90, 1
    %p94 = scmp.eq.s32.totalorder %s14, 1
    %p95 = scmp.ne.s32.totalorder %s90, %s92
    %p96 = scmp.eq.s32.totalorder %s14, 0
    %p97 = por %p95, %p96
    %p98 = scmp.ne.s32.totalorder %s90, %s92
    %p99 = scmp.eq.s32.totalorder %s19, 1
    %p100 = por %p98, %p99
    %p101 = scmp.ne.s32.totalorder %s92, %s93
    %p102 = scmp.eq.s32.totalorder %s19, 0
    %p103 = por %p101, %p102
    %p104 = scmp.ne.s32.totalorder %s92, %s93
    %p105 = scmp.eq.s32.totalorder %s20, 1
    %p106 = por %p104, %p105
    %p108 = scmp.ne.s32.totalorder %s93, %s107
    %p109 = scmp.eq.s32.totalorder %s20, 0
    %p110 = por %p108, %p109
    %s112 = sadd.s32 %s111, 1
    %p115 = scmp.eq.s32.totalorder %s14, 1
    %p116 = scmp.ne.s32.totalorder %s111, %s113
    %p117 = scmp.eq.s32.totalorder %s14, 0
    %p118 = por %p116, %p117
    %p119 = scmp.ne.s32.totalorder %s111, %s113
    %p120 = scmp.eq.s32.totalorder %s19, 1
    %p121 = por %p119, %p120
    %p122 = scmp.ne.s32.totalorder %s113, %s114
    %p123 = scmp.eq.s32.totalorder %s19, 0
    %p124 = por %p122, %p123
    %p125 = scmp.ne.s32.totalorder %s113, %s114
    %p126 = scmp.eq.s32.totalorder %s20, 1
    %p127 = por %p125, %p126
    %p129 = scmp.ne.s32.totalorder %s114, %s128
    %p130 = scmp.eq.s32.totalorder %s20, 0
    %p131 = por %p129, %p130
    %s132 = ssub.s32 %s14, %s21
    %p133 = scmp.eq.s32.totalorder %s132, 0
    %s135 = sadd.s32 %s134, 1
    %s136 = scalar_select %p133, %s134, %s135
    %p139 = pneg %p133
    %p140 = scmp.eq.s32.totalorder %s14, 1
    %p141 = por %p139, %p140
    %p142 = scmp.ne.s32.totalorder %s134, %s137
    %p143 = scmp.eq.s32.totalorder %s14, 0
    %p144 = por %p142, %p143
    %p145 = scmp.ne.s32.totalorder %s134, %s137
    %p146 = scmp.eq.s32.totalorder %s19, 1
    %p147 = por %p145, %p146
    %p148 = scmp.ne.s32.totalorder %s137, %s138
    %p149 = scmp.eq.s32.totalorder %s19, 0
    %p150 = por %p148, %p149
    %p151 = scmp.ne.s32.totalorder %s137, %s138
    %p152 = scmp.eq.s32.totalorder %s20, 1
    %p153 = por %p151, %p152
    %p155 = scmp.ne.s32.totalorder %s138, %s154
    %p156 = scmp.eq.s32.totalorder %s20, 0
    %p157 = por %p155, %p156
    %s158 = ssub.s32 %s14, %s21
    %p159 = scmp.eq.s32.totalorder %s158, 0
    %s161 = sadd.s32 %s160, 1
    %s162 = scalar_select %p159, %s160, %s161
    %p165 = pneg %p159
    %p166 = scmp.eq.s32.totalorder %s14, 1
    %p167 = por %p165, %p166
    %p168 = scmp.ne.s32.totalorder %s160, %s163
    %p169 = scmp.eq.s32.totalorder %s14, 0
    %p170 = por %p168, %p169
    %p171 = scmp.ne.s32.totalorder %s160, %s163
    %p172 = scmp.eq.s32.totalorder %s19, 1
    %p173 = por %p171, %p172
    %p174 = scmp.ne.s32.totalorder %s163, %s164
    %p175 = scmp.eq.s32.totalorder %s19, 0
    %p176 = por %p174, %p175
    %p177 = scmp.ne.s32.totalorder %s163, %s164
    %p178 = scmp.eq.s32.totalorder %s20, 1
    %p179 = por %p177, %p178
    %p181 = scmp.ne.s32.totalorder %s164, %s180
    %p182 = scmp.eq.s32.totalorder %s20, 0
    %p183 = por %p181, %p182
    %s184 = ssub.s32 %s14, %s21
    %p185 = scmp.eq.s32.totalorder %s184, 0
    %s187 = sadd.s32 %s186, 1
    %s188 = scalar_select %p185, %s186, %s187
    %p191 = pneg %p185
    %p192 = scmp.eq.s32.totalorder %s14, 1
    %p193 = por %p191, %p192
    %p194 = scmp.ne.s32.totalorder %s186, %s189
    %p195 = scmp.eq.s32.totalorder %s14, 0
    %p196 = por %p194, %p195
    %p197 = scmp.ne.s32.totalorder %s186, %s189
    %p198 = scmp.eq.s32.totalorder %s19, 1
    %p199 = por %p197, %p198
    %p200 = scmp.ne.s32.totalorder %s189, %s190
    %p201 = scmp.eq.s32.totalorder %s19, 0
    %p202 = por %p200, %p201
    %p203 = scmp.ne.s32.totalorder %s189, %s190
    %p204 = scmp.eq.s32.totalorder %s20, 1
    %p205 = por %p203, %p204
    %p207 = scmp.ne.s32.totalorder %s190, %s206
    %p208 = scmp.eq.s32.totalorder %s20, 0
    %p209 = por %p207, %p208
    %p210 = scmp.le.s32.totalorder 1, %s14
    %p211 = scmp.lt.s32.totalorder %s14, 3
    %p212 = pnand %p210, %p211
    %p213 = pneg %p212
    // Predicated region
    $region9: #{decoder_block.8} parent=5 // pred_check
      _
    $region10: #{decoder_block.8} parent=5 // pred_check_branch
      %215 = sbr.rel (%p212) target = $region12
    $region11: #{decoder_block.8} parent=5 // pred_region
      %s216 = ssub.s32 %s14, 1
      // Predicated region
      $region13: #{decoder_block.8} parent=11 // pred_check
        %p217 = pneg %p61
      $region14: #{decoder_block.8} parent=11 // pred_check_branch
        %219 = sbr.rel (%p217) target = $region16
      $region15: #{decoder_block.8} parent=11 // pred_region
        _
      $region16: #{decoder_block.8} parent=11 // pred_fallthru
        _
      // Predicated region
      $region17: #{decoder_block.8} parent=11 // pred_check
        %p220 = pneg %p82
      $region18: #{decoder_block.8} parent=11 // pred_check_branch
        %222 = sbr.rel (%p220) target = $region20
      $region19: #{decoder_block.8} parent=11 // pred_region
        _
      $region20: #{decoder_block.8} parent=11 // pred_fallthru
        _
      // Predicated region
      $region21: #{decoder_block.8} parent=11 // pred_check
        %p223 = pneg %p103
      $region22: #{decoder_block.8} parent=11 // pred_check_branch
        %225 = sbr.rel (%p223) target = $region24
      $region23: #{decoder_block.8} parent=11 // pred_region
        _
      $region24: #{decoder_block.8} parent=11 // pred_fallthru
        _
      // Predicated region
      $region25: #{decoder_block.8} parent=11 // pred_check
        %p226 = pneg %p124
      $region26: #{decoder_block.8} parent=11 // pred_check_branch
        %228 = sbr.rel (%p226) target = $region28
      $region27: #{decoder_block.8} parent=11 // pred_region
        _
      $region28: #{decoder_block.8} parent=11 // pred_fallthru
        _
    $region12: #{decoder_block.8} parent=5 // pred_fallthru
      _
    %p229 = scmp.lt.s32.totalorder %s14, 2
    // Predicated region
    $region29: #{decoder_block.8} parent=5 // pred_check
      %p230 = pneg %p229
    $region30: #{decoder_block.8} parent=5 // pred_check_branch
      %232 = sbr.rel (%p230) target = $region32
    $region31: #{decoder_block.8} parent=5 // pred_region
      // Predicated region
      $region33: #{decoder_block.8} parent=31 // pred_check
        %p233 = pneg %p34
      $region34: #{decoder_block.8} parent=31 // pred_check_branch
        %235 = sbr.rel (%p233) target = $region36
      $region35: #{decoder_block.8} parent=31 // pred_region
        %p236 = scmp.lt.s32.totalorder %s14, 1
        %s237 = scalar_select %p236, %s14, 1
        %s238 = smul.addr %s237, 8
        %s239 = scalar_lea.vmem %s0, %s238
      $region36: #{decoder_block.8} parent=31 // pred_fallthru
        _
    $region32: #{decoder_block.8} parent=5 // pred_fallthru
      _
    %p240 = scmp.le.s32.totalorder 1, %s14
    %p241 = scmp.lt.s32.totalorder %s14, 3
    %p242 = pnand %p240, %p241
    %p243 = pneg %p242
    // Predicated region
    $region37: #{decoder_block.8} parent=5 // pred_check
      _
    $region38: #{decoder_block.8} parent=5 // pred_check_branch
      %245 = sbr.rel (%p242) target = $region40
    $region39: #{decoder_block.8} parent=5 // pred_region
      %s246 = ssub.s32 %s14, 1
      %p247 = scmp.lt.s32.totalorder %s19, 1
      %s248 = scalar_select %p247, %s19, 1
      %s249 = smul.addr %s248, 8
      %s250 = scalar_lea.vmem %s0, %s249
      %p251 = pneg %p40
      %p252 = pneg %p37
      %p253 = pneg %p61
      %p254 = pneg %p58
      %p255 = pneg %p82
      %p256 = pneg %p79
      %p257 = pneg %p103
      %p258 = pneg %p100
      %p259 = pneg %p124
      %p260 = pneg %p121
      %p261 = pneg %p150
      %p262 = pneg %p147
      %p263 = scmp.lt.s32.totalorder %s19, 1
      %s264 = scalar_select %p263, %s19, 1
      %s265 = smul.addr %s264, 4
      %s266 = smul.addr %s265, 8
      %s267 = scalar_lea.vmem %s5, %s266
      %p268 = pneg %p176
      %p269 = pneg %p173
      %p270 = scmp.lt.s32.totalorder %s19, 1
      %s271 = scalar_select %p270, %s19, 1
      %s272 = smul.addr %s271, 4
      %s273 = smul.addr %s272, 8
      %s274 = scalar_lea.vmem %s6, %s273
      %p275 = pneg %p202
      %p276 = pneg %p199
      %p277 = scmp.lt.s32.totalorder %s19, 1
      %s278 = scalar_select %p277, %s19, 1
      %s279 = smul.addr %s278, 4
      %s280 = smul.addr %s279, 8
      %s281 = scalar_lea.vmem %s7, %s280
      %p282 = scmp.lt.s32.totalorder %s19, 1
      %s283 = scalar_select %p282, %s19, 1
      %s284 = smul.addr %s283, 8
      %s285 = scalar_lea.vmem %s0, %s284
      %p286 = scmp.lt.s32.totalorder %s19, 1
      %s287 = scalar_select %p286, %s19, 1
      %s288 = smul.addr %s287, 4
      %s289 = smul.addr %s288, 8
      %s290 = scalar_lea.vmem %s5, %s289
      %p291 = scmp.lt.s32.totalorder %s19, 1
      %s292 = scalar_select %p291, %s19, 1
      %s293 = smul.addr %s292, 4
      %s294 = smul.addr %s293, 8
      %s295 = scalar_lea.vmem %s6, %s294
      %p296 = scmp.lt.s32.totalorder %s19, 1
      %s297 = scalar_select %p296, %s19, 1
      %s298 = smul.addr %s297, 4
      %s299 = smul.addr %s298, 8
      %s300 = scalar_lea.vmem %s7, %s299
      %v301 = vld [vmem:[%s285] sm:$0xff]
      %v302 = vld [vmem:[%s1] sm:$0x1]
      %v303 = vld [vmem:[%s2] sm:$0x1]
      %vm304 = vcmask 261120
      %v305 = vsel %vm304, %v301, 0.0
      %306 = vadd.xlane.f32.xlu0 %v305
      %v307 = vpop.xlane.xlu0 %306
      %v308 = vrcp.pop 32.0
      %v309 = vmul.f32 %v307, %v308
      %v310 = vsub.f32 %v301, %v309
      %v311 = vmul.f32 %v310, %v310
      %v312 = vsel %vm304, %v311, 0.0
      %313 = vadd.xlane.f32.xlu0 %v312
      %v314 = vpop.xlane.xlu0 %313
      %v315 = vmul.f32 %v314, %v308
      %v316 = vadd.f32 %v315, 1e-06
      %v317 = vrsqrt.pop %v316
      %v318 = vmul.f32 %v310, %v317
      %v320 = vlaneseq
      %v321 = vshrl.u32 %v320, 7
      %v322 = vsub.s32 0, %v321
      %v323 = vrot.slane %v302, %v322
      %v325 = vmul.f32 %v318, %v323
      %v327 = vlaneseq
      %v328 = vshrl.u32 %v327, 7
      %v329 = vsub.s32 0, %v328
      %v330 = vrot.slane %v303, %v329
      %v332 = vadd.f32 %v325, %v330
      %v333 = vld [vmem:[%s3] sm:$0xff]
      %v334 = vld [vmem:[%s3 + $0x8] sm:$0xff]
      %v335 = vld [vmem:[%s3 + $0x10] sm:$0xff]
      %v336 = vld [vmem:[%s3 + $0x18] sm:$0xff]
      %v337 = vld [vmem:[%s4] sm:$0x1]
      %v339 = vlaneseq
      %v340 = vshrl.u32 %v339, 7
      %v341 = vsub.s32 0, %v340
      %v342 = vrot.slane %v337, %v341
      %v345 = vsel %vm304, %v332, 0
      %347 = vmatprep.subr.mxu0 0.0
      %348 = vmatpush1.msra.mxu0 %v333
      %349 = vmatprep.subr.mxu0 0.0
      %350 = vmatpush1.msra.mxu0 %v334
      %351 = vmatprep.subr.mxu0 0.0
      %352 = vmatpush1.msra.mxu0 %v335
      %353 = vmatprep.subr.mxu0 0.0
      %354 = vmatpush1.msra.mxu0 %v336
      %355 = vmatprep.subr.mxu0 0.0
      %356 = vmatpush1.msra.mxu0 0.0
      %357 = vmatprep.subr.mxu0 0.0
      %358 = vmatpush1.msra.mxu0 0.0
      %359 = vmatprep.subr.mxu0 0.0
      %360 = vmatpush1.msra.mxu0 0.0
      %361 = vmatprep.subr.mxu0 0.0
      %362 = vmatpush1.msra.mxu0 0.0
      %363 = vmatprep.subr.mxu0 0.0
      %364 = vmatpush1.msra.mxu0 0.0
      %365 = vmatprep.subr.mxu0 0.0
      %366 = vmatpush1.msra.mxu0 0.0
      %367 = vmatprep.subr.mxu0 0.0
      %368 = vmatpush1.msra.mxu0 0.0
      %369 = vmatprep.subr.mxu0 0.0
      %370 = vmatpush1.msra.mxu0 0.0
      %371 = vmatprep.subr.mxu0 0.0
      %372 = vmatpush1.msra.mxu0 0.0
      %373 = vmatprep.subr.mxu0 0.0
      %374 = vmatpush1.msra.mxu0 0.0
      %375 = vmatprep.subr.mxu0 0.0
      %376 = vmatpush1.msra.mxu0 0.0
      %377 = vmatprep.subr.mxu0 0.0
      %378 = vmatpush1.msra.mxu0 0.0
      %379 = vmatprep.subr.mxu0 0.0
      %380 = vmatpush1.msra.mxu0 0.0
      %381 = vmatprep.subr.mxu0 0.0
      %382 = vmatpush1.msra.mxu0 0.0
      %383 = vmatprep.subr.mxu0 0.0
      %384 = vmatpush1.msra.mxu0 0.0
      %385 = vmatprep.subr.mxu0 0.0
      %386 = vmatpush1.msra.mxu0 0.0
      %387 = vmatprep.subr.mxu0 0.0
      %388 = vmatpush1.msra.mxu0 0.0
      %389 = vmatprep.subr.mxu0 0.0
      %390 = vmatpush1.msra.mxu0 0.0
      %391 = vmatprep.subr.mxu0 0.0
      %392 = vmatpush1.msra.mxu0 0.0
      %393 = vmatprep.subr.mxu0 0.0
      %394 = vmatpush1.msra.mxu0 0.0
      %395 = vmatprep.subr.mxu0 0.0
      %396 = vmatpush1.msra.mxu0 0.0
      %397 = vmatprep.subr.mxu0 0.0
      %398 = vmatpush1.msra.mxu0 0.0
      %399 = vmatprep.subr.mxu0 0.0
      %400 = vmatpush1.msra.mxu0 0.0
      %401 = vmatprep.subr.mxu0 0.0
      %402 = vmatpush1.msra.mxu0 0.0
      %403 = vmatprep.subr.mxu0 0.0
      %404 = vmatpush1.msra.mxu0 0.0
      %405 = vmatprep.subr.mxu0 0.0
      %406 = vmatpush1.msra.mxu0 0.0
      %407 = vmatprep.subr.mxu0 0.0
      %408 = vmatpush1.msra.mxu0 0.0
      %409 = vmatprep.subr.mxu0 0.0
      %410 = vmatpush1.msra.mxu0 0.0
      %411 = vmatprep.mubr.f32.mxu0 0.0
      %412 = vmatmul.mubr.f32.gmra.mrb[0].mxu0 %v345
      %v413 = vpop.f32.mrb[0].mxu0
      %v414 = vadd.f32 %v342, %v413
      %v415 = vpop.f32.mrb[0].mxu0
      %416 = vdwg.mxu0
      %vm417 = vcmask 64512
      %418 = vst.msk [vmem:[%s290] sm:$0xff] %vm417, %v414
      %420 = vrot.lane.b32.xlu0 %v414, 120
      %v421 = vpop.permute.xlu0 %420
      %s423 = scalar_lea.vmem %s290, 8
      %424 = vst.msk [vmem:[%s423] sm:$0xff] %vm417, %v421
      %425 = vrot.lane.b32.xlu0 %v414, 112
      %v426 = vpop.permute.xlu0 %425
      %s428 = scalar_lea.vmem %s290, 16
      %429 = vst.msk [vmem:[%s428] sm:$0xff] %vm417, %v426
      %430 = vrot.lane.b32.xlu0 %v414, 104
      %v431 = vpop.permute.xlu0 %430
      %s433 = scalar_lea.vmem %s290, 24
      %434 = vst.msk [vmem:[%s433] sm:$0xff] %vm417, %v431
      %435 = vrot.lane.b32.xlu0 %v414, 96
      %v436 = vpop.permute.xlu0 %435
      %438 = vst.msk [vmem:[%s295] sm:$0xff] %vm417, %v436
      %439 = vrot.lane.b32.xlu0 %v414, 88
      %v440 = vpop.permute.xlu0 %439
      %s442 = scalar_lea.vmem %s295, 8
      %443 = vst.msk [vmem:[%s442] sm:$0xff] %vm417, %v440
      %444 = vrot.lane.b32.xlu0 %v414, 80
      %v445 = vpop.permute.xlu0 %444
      %s447 = scalar_lea.vmem %s295, 16
      %448 = vst.msk [vmem:[%s447] sm:$0xff] %vm417, %v445
      %449 = vrot.lane.b32.xlu0 %v414, 72
      %v450 = vpop.permute.xlu0 %449
      %s452 = scalar_lea.vmem %s295, 24
      %453 = vst.msk [vmem:[%s452] sm:$0xff] %vm417, %v450
      %454 = vrot.lane.b32.xlu0 %v414, 64
      %v455 = vpop.permute.xlu0 %454
      %457 = vst.msk [vmem:[%s300] sm:$0xff] %vm417, %v455
      %458 = vrot.lane.b32.xlu0 %v414, 56
      %v459 = vpop.permute.xlu0 %458
      %s461 = scalar_lea.vmem %s300, 8
      %462 = vst.msk [vmem:[%s461] sm:$0xff] %vm417, %v459
      %463 = vrot.lane.b32.xlu0 %v414, 48
      %v464 = vpop.permute.xlu0 %463
      %s466 = scalar_lea.vmem %s300, 16
      %467 = vst.msk [vmem:[%s466] sm:$0xff] %vm417, %v464
      %468 = vrot.lane.b32.xlu0 %v414, 40
      %v469 = vpop.permute.xlu0 %468
      %s471 = scalar_lea.vmem %s300, 24
      %472 = vst.msk [vmem:[%s471] sm:$0xff] %vm417, %v469
      %p473 = scmp.lt.s32.totalorder %s19, 1
      %s474 = scalar_select %p473, %s19, 1
      %s475 = smul.addr %s474, 4
      %s476 = smul.addr %s475, 8
      %s477 = scalar_lea.vmem %s5, %s476
      %p478 = scmp.lt.s32.totalorder %s19, 1
      %s479 = scalar_select %p478, %s19, 1
      %s480 = smul.addr %s479, 4
      %s481 = smul.addr %s480, 8
      %s482 = scalar_lea.vmem %s6, %s481
      %p483 = scmp.lt.s32.totalorder %s19, 1
      %s484 = scalar_select %p483, %s19, 1
      %s485 = smul.addr %s484, 4
      %s486 = smul.addr %s485, 8
      %s487 = scalar_lea.vmem %s7, %s486
      // Predicated region
      $region41: #{decoder_block.8} parent=39 // pred_check
        %p488 = pneg %p147
      $region42: #{decoder_block.8} parent=39 // pred_check_branch
        %490 = sbr.rel (%p488) target = $region44
      $region43: #{decoder_block.8} parent=39 // pred_region
        _
      $region44: #{decoder_block.8} parent=39 // pred_fallthru
        _
      // Predicated region
      $region45: #{decoder_block.8} parent=39 // pred_check
        %p491 = pneg %p173
      $region46: #{decoder_block.8} parent=39 // pred_check_branch
        %493 = sbr.rel (%p491) target = $region48
      $region47: #{decoder_block.8} parent=39 // pred_region
        _
      $region48: #{decoder_block.8} parent=39 // pred_fallthru
        _
      // Predicated region
      $region49: #{decoder_block.8} parent=39 // pred_check
        %p494 = pneg %p199
      $region50: #{decoder_block.8} parent=39 // pred_check_branch
        %496 = sbr.rel (%p494) target = $region52
      $region51: #{decoder_block.8} parent=39 // pred_region
        _
      $region52: #{decoder_block.8} parent=39 // pred_fallthru
        _
    $region40: #{decoder_block.8} parent=5 // pred_fallthru
      _
    %p497 = scmp.le.s32.totalorder 2, %s14
    // Predicated region
    $region53: #{decoder_block.8} parent=5 // pred_check
      %p498 = pneg %p497
    $region54: #{decoder_block.8} parent=5 // pred_check_branch
      %500 = sbr.rel (%p498) target = $region56
    $region55: #{decoder_block.8} parent=5 // pred_region
      %s501 = ssub.s32 %s14, 2
      // Predicated region
      $region57: #{decoder_block.8} parent=55 // pred_check
        %p502 = pneg %p153
      $region58: #{decoder_block.8} parent=55 // pred_check_branch
        %504 = sbr.rel (%p502) target = $region60
      $region59: #{decoder_block.8} parent=55 // pred_region
        %p505 = scmp.lt.s32.totalorder %s20, 1
        %s506 = scalar_select %p505, %s20, 1
        %s507 = smul.addr %s506, 4
        %s508 = smul.addr %s507, 8
        %s509 = scalar_lea.vmem %s5, %s508
      $region60: #{decoder_block.8} parent=55 // pred_fallthru
        _
      // Predicated region
      $region61: #{decoder_block.8} parent=55 // pred_check
        %p510 = pneg %p179
      $region62: #{decoder_block.8} parent=55 // pred_check_branch
        %512 = sbr.rel (%p510) target = $region64
      $region63: #{decoder_block.8} parent=55 // pred_region
        %p513 = scmp.lt.s32.totalorder %s20, 1
        %s514 = scalar_select %p513, %s20, 1
        %s515 = smul.addr %s514, 4
        %s516 = smul.addr %s515, 8
        %s517 = scalar_lea.vmem %s6, %s516
      $region64: #{decoder_block.8} parent=55 // pred_fallthru
        _
      // Predicated region
      $region65: #{decoder_block.8} parent=55 // pred_check
        %p518 = pneg %p205
      $region66: #{decoder_block.8} parent=55 // pred_check_branch
        %520 = sbr.rel (%p518) target = $region68
      $region67: #{decoder_block.8} parent=55 // pred_region
        %p521 = scmp.lt.s32.totalorder %s20, 1
        %s522 = scalar_select %p521, %s20, 1
        %s523 = smul.addr %s522, 4
        %s524 = smul.addr %s523, 8
        %s525 = scalar_lea.vmem %s7, %s524
      $region68: #{decoder_block.8} parent=55 // pred_fallthru
        _
    $region56: #{decoder_block.8} parent=5 // pred_fallthru
      _
  $region6: #{decoder_block.8} parent=0 // loop_footer
    %s18 = sadd.s32 1, %s14
  $region7: #{decoder_block.8} parent=0 // loop_footer_branch
    %13 = sbr.rel target = $region3
  $region8: #{decoder_block.8} parent=0 // loop_exit
    _

// kernel: decoder_block.9
$region0: #{decoder_block.9}
  #allocation0 [shape = 'u32[]', space=smem, size = 0x4, offset = 0x4, fixed_abs, tag = 'smem constant byte address 0x4 - core index']
  #allocation1 [shape = 'u32[144,128]{1,0:T(1,128)}', space=vmem, size = 0x12000, scoped, tag = 'internal scratch']
  %s0 = inlined_call_operand.vmem [shape: f32[2,4,8,8], index: 0, kind: input, shape index: {}]
  %s1 = inlined_call_operand.vmem [shape: f32[2,4,8,8], index: 1, kind: input, shape index: {}]
  %s2 = inlined_call_operand.vmem [shape: f32[2,4,8,8], index: 2, kind: input, shape index: {}]
  %s3 = inlined_call_operand.vmem [shape: f32[2,8,8], index: 3, kind: input, shape index: {}]
  %s4 = inlined_call_operand.vmem [shape: f32[2,4,8,8], index: 4, kind: output, shape index: {}]
  %s5 = sld [smem:[#allocation0]]
  $region49: #{decoder_block.9} parent=0
    _
  %s7 = ssub.s32 1, %s5
  %s8 = scalar_select 0, %s7, %s5
  loop: start=0, step=1, limit=10
  $region2: #{decoder_block.9} parent=0 // loop_pre_header
    _
  $region3: #{decoder_block.9} parent=0 // loop_header
    %s10 = sphi 0, %s14
    %p11 = scmp.ge.s32.totalorder %s10, 10
    %s17 = sphi 0, %s29
    %s18 = sphi 0, %s25
    %s19 = sphi 0, %s17
    %s20 = sphi 0, %s18
    %s21 = sphi 0, %s19
    %s22 = sphi 0, %s20
    %s34 = sphi 0, %s36
    %s37 = sphi 0, %s34
    %s38 = sphi 0, %s37
    %s54 = sphi 0, %s38
    %s62 = sphi 0, %s64
    %s65 = sphi 0, %s62
    %s66 = sphi 0, %s65
    %s82 = sphi 0, %s66
    %s90 = sphi 0, %s92
    %s93 = sphi 0, %s90
    %s94 = sphi 0, %s93
    %s110 = sphi 0, %s94
    %s116 = sphi 0, %s118
    %s119 = sphi 0, %s116
    %s120 = sphi 0, %s119
    %s136 = sphi 0, %s120
    %s144 = sphi 0, %s146
    %s147 = sphi 0, %s144
    %s148 = sphi 0, %s147
    %s164 = sphi 0, %s148
  $region4: #{decoder_block.9} parent=0 // loop_header_branch
    %13 = sbr.rel (%p11) target = $region8
  $region5: #{decoder_block.9} parent=0 // loop_body
    %s15 = ssub.s32 %s10, 1
    %s16 = ssub.s32 %s10, 2
    %s23 = sadd.s32 1, %s18
    %p24 = scmp.ge.s32.totalorder %s23, 4
    %s25 = scalar_select %p24, 0, %s23
    %s26 = sadd.s32 1, %s17
    %s27 = scalar_select %p24, %s26, %s17
    %p28 = scmp.ge.s32.totalorder %s27, 2
    %s29 = scalar_select %p28, 0, %s27
    %s30 = ssub.s32 %s17, %s29
    %s31 = ssub.s32 %s18, %s25
    %s32 = sor.u32 %s30, %s31
    %p33 = scmp.eq.s32.totalorder %s32, 0
    %s35 = sadd.s32 %s34, 1
    %s36 = scalar_select %p33, %s34, %s35
    %p39 = pneg %p33
    %p40 = scmp.eq.s32.totalorder %s10, 7
    %p41 = por %p39, %p40
    %p42 = scmp.ne.s32.totalorder %s34, %s37
    %p43 = scmp.eq.s32.totalorder %s10, 0
    %p44 = por %p42, %p43
    %p45 = scmp.ne.s32.totalorder %s34, %s37
    %p46 = scmp.eq.s32.totalorder %s15, 7
    %p47 = por %p45, %p46
    %p48 = scmp.ne.s32.totalorder %s37, %s38
    %p49 = scmp.eq.s32.totalorder %s15, 0
    %p50 = por %p48, %p49
    %p51 = scmp.ne.s32.totalorder %s37, %s38
    %p52 = scmp.eq.s32.totalorder %s16, 7
    %p53 = por %p51, %p52
    %p55 = scmp.ne.s32.totalorder %s38, %s54
    %p56 = scmp.eq.s32.totalorder %s16, 0
    %p57 = por %p55, %p56
    %s58 = ssub.s32 %s17, %s29
    %s59 = ssub.s32 %s18, %s25
    %s60 = sor.u32 %s58, %s59
    %p61 = scmp.eq.s32.totalorder %s60, 0
    %s63 = sadd.s32 %s62, 1
    %s64 = scalar_select %p61, %s62, %s63
    %p67 = pneg %p61
    %p68 = scmp.eq.s32.totalorder %s10, 7
    %p69 = por %p67, %p68
    %p70 = scmp.ne.s32.totalorder %s62, %s65
    %p71 = scmp.eq.s32.totalorder %s10, 0
    %p72 = por %p70, %p71
    %p73 = scmp.ne.s32.totalorder %s62, %s65
    %p74 = scmp.eq.s32.totalorder %s15, 7
    %p75 = por %p73, %p74
    %p76 = scmp.ne.s32.totalorder %s65, %s66
    %p77 = scmp.eq.s32.totalorder %s15, 0
    %p78 = por %p76, %p77
    %p79 = scmp.ne.s32.totalorder %s65, %s66
    %p80 = scmp.eq.s32.totalorder %s16, 7
    %p81 = por %p79, %p80
    %p83 = scmp.ne.s32.totalorder %s66, %s82
    %p84 = scmp.eq.s32.totalorder %s16, 0
    %p85 = por %p83, %p84
    %s86 = ssub.s32 %s17, %s29
    %s87 = ssub.s32 %s18, %s25
    %s88 = sor.u32 %s86, %s87
    %p89 = scmp.eq.s32.totalorder %s88, 0
    %s91 = sadd.s32 %s90, 1
    %s92 = scalar_select %p89, %s90, %s91
    %p95 = pneg %p89
    %p96 = scmp.eq.s32.totalorder %s10, 7
    %p97 = por %p95, %p96
    %p98 = scmp.ne.s32.totalorder %s90, %s93
    %p99 = scmp.eq.s32.totalorder %s10, 0
    %p100 = por %p98, %p99
    %p101 = scmp.ne.s32.totalorder %s90, %s93
    %p102 = scmp.eq.s32.totalorder %s15, 7
    %p103 = por %p101, %p102
    %p104 = scmp.ne.s32.totalorder %s93, %s94
    %p105 = scmp.eq.s32.totalorder %s15, 0
    %p106 = por %p104, %p105
    %p107 = scmp.ne.s32.totalorder %s93, %s94
    %p108 = scmp.eq.s32.totalorder %s16, 7
    %p109 = por %p107, %p108
    %p111 = scmp.ne.s32.totalorder %s94, %s110
    %p112 = scmp.eq.s32.totalorder %s16, 0
    %p113 = por %p111, %p112
    %s114 = ssub.s32 %s17, %s29
    %p115 = scmp.eq.s32.totalorder %s114, 0
    %s117 = sadd.s32 %s116, 1
    %s118 = scalar_select %p115, %s116, %s117
    %p121 = pneg %p115
    %p122 = scmp.eq.s32.totalorder %s10, 7
    %p123 = por %p121, %p122
    %p124 = scmp.ne.s32.totalorder %s116, %s119
    %p125 = scmp.eq.s32.totalorder %s10, 0
    %p126 = por %p124, %p125
    %p127 = scmp.ne.s32.totalorder %s116, %s119
    %p128 = scmp.eq.s32.totalorder %s15, 7
    %p129 = por %p127, %p128
    %p130 = scmp.ne.s32.totalorder %s119, %s120
    %p131 = scmp.eq.s32.totalorder %s15, 0
    %p132 = por %p130, %p131
    %p133 = scmp.ne.s32.totalorder %s119, %s120
    %p134 = scmp.eq.s32.totalorder %s16, 7
    %p135 = por %p133, %p134
    %p137 = scmp.ne.s32.totalorder %s120, %s136
    %p138 = scmp.eq.s32.totalorder %s16, 0
    %p139 = por %p137, %p138
    %s140 = ssub.s32 %s17, %s29
    %s141 = ssub.s32 %s18, %s25
    %s142 = sor.u32 %s140, %s141
    %p143 = scmp.eq.s32.totalorder %s142, 0
    %s145 = sadd.s32 %s144, 1
    %s146 = scalar_select %p143, %s144, %s145
    %p149 = pneg %p143
    %p150 = scmp.eq.s32.totalorder %s10, 7
    %p151 = por %p149, %p150
    %p152 = scmp.ne.s32.totalorder %s144, %s147
    %p153 = scmp.eq.s32.totalorder %s10, 0
    %p154 = por %p152, %p153
    %p155 = scmp.ne.s32.totalorder %s144, %s147
    %p156 = scmp.eq.s32.totalorder %s15, 7
    %p157 = por %p155, %p156
    %p158 = scmp.ne.s32.totalorder %s147, %s148
    %p159 = scmp.eq.s32.totalorder %s15, 0
    %p160 = por %p158, %p159
    %p161 = scmp.ne.s32.totalorder %s147, %s148
    %p162 = scmp.eq.s32.totalorder %s16, 7
    %p163 = por %p161, %p162
    %p165 = scmp.ne.s32.totalorder %s148, %s164
    %p166 = scmp.eq.s32.totalorder %s16, 0
    %p167 = por %p165, %p166
    %p168 = scmp.le.s32.totalorder 1, %s10
    %p169 = scmp.lt.s32.totalorder %s10, 9
    %p170 = pnand %p168, %p169
    %p171 = pneg %p170
    // Predicated region
    $region9: #{decoder_block.9} parent=5 // pred_check
      _
    $region10: #{decoder_block.9} parent=5 // pred_check_branch
      %173 = sbr.rel (%p170) target = $region12
    $region11: #{decoder_block.9} parent=5 // pred_region
      %s174 = ssub.s32 %s10, 1
    $region12: #{decoder_block.9} parent=5 // pred_fallthru
      _
    %p175 = scmp.lt.s32.totalorder %s10, 8
    // Predicated region
    $region13: #{decoder_block.9} parent=5 // pred_check
      %p176 = pneg %p175
    $region14: #{decoder_block.9} parent=5 // pred_check_branch
      %178 = sbr.rel (%p176) target = $region16
    $region15: #{decoder_block.9} parent=5 // pred_region
      // Predicated region
      $region17: #{decoder_block.9} parent=15 // pred_check
        %p179 = pneg %p44
      $region18: #{decoder_block.9} parent=15 // pred_check_branch
        %181 = sbr.rel (%p179) target = $region20
      $region19: #{decoder_block.9} parent=15 // pred_region
        %p182 = scmp.lt.s32.totalorder %s17, 1
        %s183 = scalar_select %p182, %s17, 1
        %p184 = scmp.lt.s32.totalorder %s18, 3
        %s185 = scalar_select %p184, %s18, 3
        %s186 = smul.addr %s183, 4
        %s187 = sadd.s32 %s185, %s186
        %s188 = smul.addr %s187, 8
        %s189 = scalar_lea.vmem %s0, %s188
      $region20: #{decoder_block.9} parent=15 // pred_fallthru
        _
      // Predicated region
      $region21: #{decoder_block.9} parent=15 // pred_check
        %p190 = pneg %p72
      $region22: #{decoder_block.9} parent=15 // pred_check_branch
        %192 = sbr.rel (%p190) target = $region24
      $region23: #{decoder_block.9} parent=15 // pred_region
        %p193 = scmp.lt.s32.totalorder %s17, 1
        %s194 = scalar_select %p193, %s17, 1
        %p195 = scmp.lt.s32.totalorder %s18, 3
        %s196 = scalar_select %p195, %s18, 3
        %s197 = smul.addr %s194, 4
        %s198 = sadd.s32 %s196, %s197
        %s199 = smul.addr %s198, 8
        %s200 = scalar_lea.vmem %s1, %s199
      $region24: #{decoder_block.9} parent=15 // pred_fallthru
        _
      // Predicated region
      $region25: #{decoder_block.9} parent=15 // pred_check
        %p201 = pneg %p100
      $region26: #{decoder_block.9} parent=15 // pred_check_branch
        %203 = sbr.rel (%p201) target = $region28
      $region27: #{decoder_block.9} parent=15 // pred_region
        %p204 = scmp.lt.s32.totalorder %s17, 1
        %s205 = scalar_select %p204, %s17, 1
        %p206 = scmp.lt.s32.totalorder %s18, 3
        %s207 = scalar_select %p206, %s18, 3
        %s208 = smul.addr %s205, 4
        %s209 = sadd.s32 %s207, %s208
        %s210 = smul.addr %s209, 8
        %s211 = scalar_lea.vmem %s2, %s210
      $region28: #{decoder_block.9} parent=15 // pred_fallthru
        _
      // Predicated region
      $region29: #{decoder_block.9} parent=15 // pred_check
        %p212 = pneg %p126
      $region30: #{decoder_block.9} parent=15 // pred_check_branch
        %214 = sbr.rel (%p212) target = $region32
      $region31: #{decoder_block.9} parent=15 // pred_region
        %p215 = scmp.lt.s32.totalorder %s17, 1
        %s216 = scalar_select %p215, %s17, 1
        %s217 = smul.addr %s216, 8
        %s218 = scalar_lea.vmem %s3, %s217
      $region32: #{decoder_block.9} parent=15 // pred_fallthru
        _
    $region16: #{decoder_block.9} parent=5 // pred_fallthru
      _
    %p219 = scmp.le.s32.totalorder 1, %s10
    %p220 = scmp.lt.s32.totalorder %s10, 9
    %p221 = pnand %p219, %p220
    %p222 = pneg %p221
    // Predicated region
    $region33: #{decoder_block.9} parent=5 // pred_check
      _
    $region34: #{decoder_block.9} parent=5 // pred_check_branch
      %224 = sbr.rel (%p221) target = $region36
    $region35: #{decoder_block.9} parent=5 // pred_region
      %s225 = ssub.s32 %s10, 1
      %p226 = scmp.lt.s32.totalorder %s19, 1
      %s227 = scalar_select %p226, %s19, 1
      %p228 = scmp.lt.s32.totalorder %s20, 3
      %s229 = scalar_select %p228, %s20, 3
      %s230 = smul.addr %s227, 4
      %s231 = sadd.s32 %s229, %s230
      %s232 = smul.addr %s231, 8
      %s233 = scalar_lea.vmem %s0, %s232
      %p234 = pneg %p50
      %p235 = pneg %p47
      %p236 = scmp.lt.s32.totalorder %s19, 1
      %s237 = scalar_select %p236, %s19, 1
      %p238 = scmp.lt.s32.totalorder %s20, 3
      %s239 = scalar_select %p238, %s20, 3
      %s240 = smul.addr %s237, 4
      %s241 = sadd.s32 %s239, %s240
      %s242 = smul.addr %s241, 8
      %s243 = scalar_lea.vmem %s1, %s242
      %p244 = pneg %p78
      %p245 = pneg %p75
      %p246 = scmp.lt.s32.totalorder %s19, 1
      %s247 = scalar_select %p246, %s19, 1
      %p248 = scmp.lt.s32.totalorder %s20, 3
      %s249 = scalar_select %p248, %s20, 3
      %s250 = smul.addr %s247, 4
      %s251 = sadd.s32 %s249, %s250
      %s252 = smul.addr %s251, 8
      %s253 = scalar_lea.vmem %s2, %s252
      %p254 = pneg %p106
      %p255 = pneg %p103
      %p256 = scmp.lt.s32.totalorder %s19, 1
      %s257 = scalar_select %p256, %s19, 1
      %s258 = smul.addr %s257, 8
      %s259 = scalar_lea.vmem %s3, %s258
      %p260 = pneg %p132
      %p261 = pneg %p129
      %p262 = pneg %p160
      %p263 = pneg %p157
      %p264 = scmp.lt.s32.totalorder %s19, 1
      %s265 = scalar_select %p264, %s19, 1
      %p266 = scmp.lt.s32.totalorder %s20, 3
      %s267 = scalar_select %p266, %s20, 3
      %s268 = smul.addr %s265, 4
      %s269 = sadd.s32 %s267, %s268
      %s270 = smul.addr %s269, 8
      %s271 = scalar_lea.vmem %s4, %s270
      %p272 = scmp.lt.s32.totalorder %s19, 1
      %s273 = scalar_select %p272, %s19, 1
      %p274 = scmp.lt.s32.totalorder %s20, 3
      %s275 = scalar_select %p274, %s20, 3
      %s276 = smul.addr %s273, 4
      %s277 = sadd.s32 %s275, %s276
      %s278 = smul.addr %s277, 8
      %s279 = scalar_lea.vmem %s0, %s278
      %p280 = scmp.lt.s32.totalorder %s19, 1
      %s281 = scalar_select %p280, %s19, 1
      %p282 = scmp.lt.s32.totalorder %s20, 3
      %s283 = scalar_select %p282, %s20, 3
      %s284 = smul.addr %s281, 4
      %s285 = sadd.s32 %s283, %s284
      %s286 = smul.addr %s285, 8
      %s287 = scalar_lea.vmem %s1, %s286
      %p288 = scmp.lt.s32.totalorder %s19, 1
      %s289 = scalar_select %p288, %s19, 1
      %p290 = scmp.lt.s32.totalorder %s20, 3
      %s291 = scalar_select %p290, %s20, 3
      %s292 = smul.addr %s289, 4
      %s293 = sadd.s32 %s291, %s292
      %s294 = smul.addr %s293, 8
      %s295 = scalar_lea.vmem %s2, %s294
      %p296 = scmp.lt.s32.totalorder %s19, 1
      %s297 = scalar_select %p296, %s19, 1
      %s298 = smul.addr %s297, 8
      %s299 = scalar_lea.vmem %s3, %s298
      %p300 = scmp.lt.s32.totalorder %s19, 1
      %s301 = scalar_select %p300, %s19, 1
      %p302 = scmp.lt.s32.totalorder %s20, 3
      %s303 = scalar_select %p302, %s20, 3
      %s304 = smul.addr %s301, 4
      %s305 = sadd.s32 %s303, %s304
      %s306 = smul.addr %s305, 8
      %s307 = scalar_lea.vmem %s4, %s306
      %v308 = vld [vmem:[%s279] sm:$0xff]
      %v309 = vmul.f32 %v308, 0.35355338
      %v310 = vld [vmem:[%s287] sm:$0xff]
      %v311 = vld [vmem:[%s295] sm:$0xff]
      %vm312 = vcmask 64512
      %v314 = vsel %vm312, %v309, 0
      %v317 = vsel %vm312, %v310, 0
      %319 = vmatprep.subr.mxu0 0.0
      %320 = vmatpush1.xpose.msra.mxu0 %v317
      %321 = vmatprep.subr.mxu0 0.0
      %322 = vmatpush1.xpose.msra.mxu0 0.0
      %323 = vmatprep.subr.mxu0 0.0
      %324 = vmatpush1.xpose.msra.mxu0 0.0
      %325 = vmatprep.subr.mxu0 0.0
      %326 = vmatpush1.xpose.msra.mxu0 0.0
      %327 = vmatprep.subr.mxu0 0.0
      %328 = vmatpush1.xpose.msra.mxu0 0.0
      %329 = vmatprep.subr.mxu0 0.0
      %330 = vmatpush1.xpose.msra.mxu0 0.0
      %331 = vmatprep.subr.mxu0 0.0
      %332 = vmatpush1.xpose.msra.mxu0 0.0
      %333 = vmatprep.subr.mxu0 0.0
      %334 = vmatpush1.xpose.msra.mxu0 0.0
      %335 = vmatprep.subr.mxu0 0.0
      %336 = vmatpush1.xpose.msra.mxu0 0.0
      %337 = vmatprep.subr.mxu0 0.0
      %338 = vmatpush1.xpose.msra.mxu0 0.0
      %339 = vmatprep.subr.mxu0 0.0
      %340 = vmatpush1.xpose.msra.mxu0 0.0
      %341 = vmatprep.subr.mxu0 0.0
      %342 = vmatpush1.xpose.msra.mxu0 0.0
      %343 = vmatprep.subr.mxu0 0.0
      %344 = vmatpush1.xpose.msra.mxu0 0.0
      %345 = vmatprep.subr.mxu0 0.0
      %346 = vmatpush1.xpose.msra.mxu0 0.0
      %347 = vmatprep.subr.mxu0 0.0
      %348 = vmatpush1.xpose.msra.mxu0 0.0
      %349 = vmatprep.subr.mxu0 0.0
      %350 = vmatpush1.xpose.msra.mxu0 0.0
      %351 = vmatprep.subr.mxu0 0.0
      %352 = vmatpush1.xpose.msra.mxu0 0.0
      %353 = vmatprep.subr.mxu0 0.0
      %354 = vmatpush1.xpose.msra.mxu0 0.0
      %355 = vmatprep.subr.mxu0 0.0
      %356 = vmatpush1.xpose.msra.mxu0 0.0
      %357 = vmatprep.subr.mxu0 0.0
      %358 = vmatpush1.xpose.msra.mxu0 0.0
      %359 = vmatprep.subr.mxu0 0.0
      %360 = vmatpush1.xpose.msra.mxu0 0.0
      %361 = vmatprep.subr.mxu0 0.0
      %362 = vmatpush1.xpose.msra.mxu0 0.0
      %363 = vmatprep.subr.mxu0 0.0
      %364 = vmatpush1.xpose.msra.mxu0 0.0
      %365 = vmatprep.subr.mxu0 0.0
      %366 = vmatpush1.xpose.msra.mxu0 0.0
      %367 = vmatprep.subr.mxu0 0.0
      %368 = vmatpush1.xpose.msra.mxu0 0.0
      %369 = vmatprep.subr.mxu0 0.0
      %370 = vmatpush1.xpose.msra.mxu0 0.0
      %371 = vmatprep.subr.mxu0 0.0
      %372 = vmatpush1.xpose.msra.mxu0 0.0
      %373 = vmatprep.subr.mxu0 0.0
      %374 = vmatpush1.xpose.msra.mxu0 0.0
      %375 = vmatprep.subr.mxu0 0.0
      %376 = vmatpush1.xpose.msra.mxu0 0.0
      %377 = vmatprep.subr.mxu0 0.0
      %378 = vmatpush1.xpose.msra.mxu0 0.0
      %379 = vmatprep.subr.mxu0 0.0
      %380 = vmatpush1.xpose.msra.mxu0 0.0
      %381 = vmatprep.subr.mxu0 0.0
      %382 = vmatpush1.xpose.msra.mxu0 0.0
      %383 = vmatprep.mubr.f32.mxu0 0.0
      %384 = vmatmul.mubr.f32.gmra.mrb[0].mxu0 %v314
      %v385 = vpop.f32.mrb[0].mxu0
      %v386 = vadd.f32 0.0, %v385
      %v387 = vpop.f32.mrb[0].mxu0
      %388 = vdwg.mxu0
      %v389 = vld [vmem:[%s299] sm:$0xff]
      %vm390 = vcmp.gt.f32.partialorder %v389, 0.5
      %v391 = vsel %vm390, -1e+30, %v386
      %v392 = vsel %vm312, %v391, -inf
      %393 = vmax.xlane.f32.xlu0 %v392
      %v394 = vpop.xlane.xlu0 %393
      %v395 = vsub.f32 %v391, %v394
      %v396 = vmul.f32 %v395, 1.442695
      %v397 = vpow.pop %v396
      %v398 = vsel %vm312, %v397, 0.0
      %399 = vadd.xlane.f32.xlu0 %v398
      %v400 = vpop.xlane.xlu0 %399
      %v401 = vrcp.pop %v400
      %v402 = vmul.f32 %v397, %v401
      %v404 = vsel %vm312, %v402, 0
      %406 = vmatprep.subr.mxu0 0.0
      %407 = vmatpush1.msra.mxu0 %v311
      %408 = vmatprep.subr.mxu0 0.0
      %409 = vmatpush1.msra.mxu0 0.0
      %410 = vmatprep.subr.mxu0 0.0
      %411 = vmatpush1.msra.mxu0 0.0
      %412 = vmatprep.subr.mxu0 0.0
      %413 = vmatpush1.msra.mxu0 0.0
      %414 = vmatprep.subr.mxu0 0.0
      %415 = vmatpush1.msra.mxu0 0.0
      %416 = vmatprep.subr.mxu0 0.0
      %417 = vmatpush1.msra.mxu0 0.0
      %418 = vmatprep.subr.mxu0 0.0
      %419 = vmatpush1.msra.mxu0 0.0
      %420 = vmatprep.subr.mxu0 0.0
      %421 = vmatpush1.msra.mxu0 0.0
      %422 = vmatprep.subr.mxu0 0.0
      %423 = vmatpush1.msra.mxu0 0.0
      %424 = vmatprep.subr.mxu0 0.0
      %425 = vmatpush1.msra.mxu0 0.0
      %426 = vmatprep.subr.mxu0 0.0
      %427 = vmatpush1.msra.mxu0 0.0
      %428 = vmatprep.subr.mxu0 0.0
      %429 = vmatpush1.msra.mxu0 0.0
      %430 = vmatprep.subr.mxu0 0.0
      %431 = vmatpush1.msra.mxu0 0.0
      %432 = vmatprep.subr.mxu0 0.0
      %433 = vmatpush1.msra.mxu0 0.0
      %434 = vmatprep.subr.mxu0 0.0
      %435 = vmatpush1.msra.mxu0 0.0
      %436 = vmatprep.subr.mxu0 0.0
      %437 = vmatpush1.msra.mxu0 0.0
      %438 = vmatprep.subr.mxu0 0.0
      %439 = vmatpush1.msra.mxu0 0.0
      %440 = vmatprep.subr.mxu0 0.0
      %441 = vmatpush1.msra.mxu0 0.0
      %442 = vmatprep.subr.mxu0 0.0
      %443 = vmatpush1.msra.mxu0 0.0
      %444 = vmatprep.subr.mxu0 0.0
      %445 = vmatpush1.msra.mxu0 0.0
      %446 = vmatprep.subr.mxu0 0.0
      %447 = vmatpush1.msra.mxu0 0.0
      %448 = vmatprep.subr.mxu0 0.0
      %449 = vmatpush1.msra.mxu0 0.0
      %450 = vmatprep.subr.mxu0 0.0
      %451 = vmatpush1.msra.mxu0 0.0
      %452 = vmatprep.subr.mxu0 0.0
      %453 = vmatpush1.msra.mxu0 0.0
      %454 = vmatprep.subr.mxu0 0.0
      %455 = vmatpush1.msra.mxu0 0.0
      %456 = vmatprep.subr.mxu0 0.0
      %457 = vmatpush1.msra.mxu0 0.0
      %458 = vmatprep.subr.mxu0 0.0
      %459 = vmatpush1.msra.mxu0 0.0
      %460 = vmatprep.subr.mxu0 0.0
      %461 = vmatpush1.msra.mxu0 0.0
      %462 = vmatprep.subr.mxu0 0.0
      %463 = vmatpush1.msra.mxu0 0.0
      %464 = vmatprep.subr.mxu0 0.0
      %465 = vmatpush1.msra.mxu0 0.0
      %466 = vmatprep.subr.mxu0 0.0
      %467 = vmatpush1.msra.mxu0 0.0
      %468 = vmatprep.subr.mxu0 0.0
      %469 = vmatpush1.msra.mxu0 0.0
      %470 = vmatprep.mubr.f32.mxu0 0.0
      %471 = vmatmul.mubr.f32.gmra.mrb[0].mxu0 %v404
      %v472 = vpop.f32.mrb[0].mxu0
      %v473 = vadd.f32 0.0, %v472
      %v474 = vpop.f32.mrb[0].mxu0
      %475 = vdwg.mxu0
      %476 = vst.msk [vmem:[%s307] sm:$0xff] %vm312, %v473
      %p477 = scmp.lt.s32.totalorder %s19, 1
      %s478 = scalar_select %p477, %s19, 1
      %p479 = scmp.lt.s32.totalorder %s20, 3
      %s480 = scalar_select %p479, %s20, 3
      %s481 = smul.addr %s478, 4
      %s482 = sadd.s32 %s480, %s481
      %s483 = smul.addr %s482, 8
      %s484 = scalar_lea.vmem %s4, %s483
      // Predicated region
      $region37: #{decoder_block.9} parent=35 // pred_check
        %p485 = pneg %p157
      $region38: #{decoder_block.9} parent=35 // pred_check_branch
        %487 = sbr.rel (%p485) target = $region40
      $region39: #{decoder_block.9} parent=35 // pred_region
        _
      $region40: #{decoder_block.9} parent=35 // pred_fallthru
        _
    $region36: #{decoder_block.9} parent=5 // pred_fallthru
      _
    %p488 = scmp.le.s32.totalorder 2, %s10
    // Predicated region
    $region41: #{decoder_block.9} parent=5 // pred_check
      %p489 = pneg %p488
    $region42: #{decoder_block.9} parent=5 // pred_check_branch
      %491 = sbr.rel (%p489) target = $region44
    $region43: #{decoder_block.9} parent=5 // pred_region
      %s492 = ssub.s32 %s10, 2
      // Predicated region
      $region45: #{decoder_block.9} parent=43 // pred_check
        %p493 = pneg %p163
      $region46: #{decoder_block.9} parent=43 // pred_check_branch
        %495 = sbr.rel (%p493) target = $region48
      $region47: #{decoder_block.9} parent=43 // pred_region
        %p496 = scmp.lt.s32.totalorder %s21, 1
        %s497 = scalar_select %p496, %s21, 1
        %p498 = scmp.lt.s32.totalorder %s22, 3
        %s499 = scalar_select %p498, %s22, 3
        %s500 = smul.addr %s497, 4
        %s501 = sadd.s32 %s499, %s500
        %s502 = smul.addr %s501, 8
        %s503 = scalar_lea.vmem %s4, %s502
      $region48: #{decoder_block.9} parent=43 // pred_fallthru
        _
    $region44: #{decoder_block.9} parent=5 // pred_fallthru
      _
  $region6: #{decoder_block.9} parent=0 // loop_footer
    %s14 = sadd.s32 1, %s10
  $region7: #{decoder_block.9} parent=0 // loop_footer_branch
    %9 = sbr.rel target = $region3
  $region8: #{decoder_block.9} parent=0 // loop_exit
    _

// kernel: decoder_block.11
$region0: #{decoder_block.11}
  #allocation0 [shape = 'u32[]', space=smem, size = 0x4, offset = 0x4, fixed_abs, tag = 'smem constant byte address 0x4 - core index']
  #allocation1 [shape = 'u32[144,128]{1,0:T(1,128)}', space=vmem, size = 0x12000, scoped, tag = 'internal scratch']
  %s0 = inlined_call_operand.vmem [shape: f32[2,8,32], index: 0, kind: input, shape index: {}]
  %s1 = inlined_call_operand.vmem [shape: f32[1,32], index: 1, kind: input, shape index: {}]
  %s2 = inlined_call_operand.vmem [shape: f32[1,32], index: 2, kind: input, shape index: {}]
  %s3 = inlined_call_operand.vmem [shape: f32[32,32], index: 3, kind: input, shape index: {}]
  %s4 = inlined_call_operand.vmem [shape: f32[1,32], index: 4, kind: input, shape index: {}]
  %s5 = inlined_call_operand.vmem [shape: f32[2,4,8,8], index: 5, kind: output, shape index: {}]
  %s6 = sld [smem:[#allocation0]]
  $region53: #{decoder_block.11} parent=0
    _
  %s8 = ssub.s32 1, %s6
  %s9 = scalar_select 0, %s8, %s6
  loop: start=0, step=1, limit=4
  $region2: #{decoder_block.11} parent=0 // loop_pre_header
    _
  $region3: #{decoder_block.11} parent=0 // loop_header
    %s11 = sphi 0, %s15
    %p12 = scmp.ge.s32.totalorder %s11, 4
    %s21 = sphi 0, %s23
    %s24 = sphi 0, %s21
    %s25 = sphi 0, %s24
    %s41 = sphi 0, %s25
    %s45 = sphi 0, %s45
    %s47 = sphi 0, %s45
    %s48 = sphi 0, %s47
    %s62 = sphi 0, %s48
    %s66 = sphi 0, %s66
    %s68 = sphi 0, %s66
    %s69 = sphi 0, %s68
    %s83 = sphi 0, %s69
    %s87 = sphi 0, %s87
    %s89 = sphi 0, %s87
    %s90 = sphi 0, %s89
    %s104 = sphi 0, %s90
    %s108 = sphi 0, %s108
    %s110 = sphi 0, %s108
    %s111 = sphi 0, %s110
    %s125 = sphi 0, %s111
    %s131 = sphi 0, %s133
    %s134 = sphi 0, %s131
    %s135 = sphi 0, %s134
    %s151 = sphi 0, %s135
  $region4: #{decoder_block.11} parent=0 // loop_header_branch
    %14 = sbr.rel (%p12) target = $region8
  $region5: #{decoder_block.11} parent=0 // loop_body
    %s16 = ssub.s32 %s11, 1
    %s17 = ssub.s32 %s11, 2
    %s18 = sadd.s32 %s11, 1
    %s19 = ssub.s32 %s11, %s18
    %p20 = scmp.eq.s32.totalorder %s19, 0
    %s22 = sadd.s32 %s21, 1
    %s23 = scalar_select %p20, %s21, %s22
    %p26 = pneg %p20
    %p27 = scmp.eq.s32.totalorder %s11, 1
    %p28 = por %p26, %p27
    %p29 = scmp.ne.s32.totalorder %s21, %s24
    %p30 = scmp.eq.s32.totalorder %s11, 0
    %p31 = por %p29, %p30
    %p32 = scmp.ne.s32.totalorder %s21, %s24
    %p33 = scmp.eq.s32.totalorder %s16, 1
    %p34 = por %p32, %p33
    %p35 = scmp.ne.s32.totalorder %s24, %s25
    %p36 = scmp.eq.s32.totalorder %s16, 0
    %p37 = por %p35, %p36
    %p38 = scmp.ne.s32.totalorder %s24, %s25
    %p39 = scmp.eq.s32.totalorder %s17, 1
    %p40 = por %p38, %p39
    %p42 = scmp.ne.s32.totalorder %s25, %s41
    %p43 = scmp.eq.s32.totalorder %s17, 0
    %p44 = por %p42, %p43
    %s46 = sadd.s32 %s45, 1
    %p49 = scmp.eq.s32.totalorder %s11, 1
    %p50 = scmp.ne.s32.totalorder %s45, %s47
    %p51 = scmp.eq.s32.totalorder %s11, 0
    %p52 = por %p50, %p51
    %p53 = scmp.ne.s32.totalorder %s45, %s47
    %p54 = scmp.eq.s32.totalorder %s16, 1
    %p55 = por %p53, %p54
    %p56 = scmp.ne.s32.totalorder %s47, %s48
    %p57 = scmp.eq.s32.totalorder %s16, 0
    %p58 = por %p56, %p57
    %p59 = scmp.ne.s32.totalorder %s47, %s48
    %p60 = scmp.eq.s32.totalorder %s17, 1
    %p61 = por %p59, %p60
    %p63 = scmp.ne.s32.totalorder %s48, %s62
    %p64 = scmp.eq.s32.totalorder %s17, 0
    %p65 = por %p63, %p64
    %s67 = sadd.s32 %s66, 1
    %p70 = scmp.eq.s32.totalorder %s11, 1
    %p71 = scmp.ne.s32.totalorder %s66, %s68
    %p72 = scmp.eq.s32.totalorder %s11, 0
    %p73 = por %p71, %p72
    %p74 = scmp.ne.s32.totalorder %s66, %s68
    %p75 = scmp.eq.s32.totalorder %s16, 1
    %p76 = por %p74, %p75
    %p77 = scmp.ne.s32.totalorder %s68, %s69
    %p78 = scmp.eq.s32.totalorder %s16, 0
    %p79 = por %p77, %p78
    %p80 = scmp.ne.s32.totalorder %s68, %s69
    %p81 = scmp.eq.s32.totalorder %s17, 1
    %p82 = por %p80, %p81
    %p84 = scmp.ne.s32.totalorder %s69, %s83
    %p85 = scmp.eq.s32.totalorder %s17, 0
    %p86 = por %p84, %p85
    %s88 = sadd.s32 %s87, 1
    %p91 = scmp.eq.s32.totalorder %s11, 1
    %p92 = scmp.ne.s32.totalorder %s87, %s89
    %p93 = scmp.eq.s32.totalorder %s11, 0
    %p94 = por %p92, %p93
    %p95 = scmp.ne.s32.totalorder %s87, %s89
    %p96 = scmp.eq.s32.totalorder %s16, 1
    %p97 = por %p95, %p96
    %p98 = scmp.ne.s32.totalorder %s89, %s90
    %p99 = scmp.eq.s32.totalorder %s16, 0
    %p100 = por %p98, %p99
    %p101 = scmp.ne.s32.totalorder %s89, %s90
    %p102 = scmp.eq.s32.totalorder %s17, 1
    %p103 = por %p101, %p102
    %p105 = scmp.ne.s32.totalorder %s90, %s104
    %p106 = scmp.eq.s32.totalorder %s17, 0
    %p107 = por %p105, %p106
    %s109 = sadd.s32 %s108, 1
    %p112 = scmp.eq.s32.totalorder %s11, 1
    %p113 = scmp.ne.s32.totalorder %s108, %s110
    %p114 = scmp.eq.s32.totalorder %s11, 0
    %p115 = por %p113, %p114
    %p116 = scmp.ne.s32.totalorder %s108, %s110
    %p117 = scmp.eq.s32.totalorder %s16, 1
    %p118 = por %p116, %p117
    %p119 = scmp.ne.s32.totalorder %s110, %s111
    %p120 = scmp.eq.s32.totalorder %s16, 0
    %p121 = por %p119, %p120
    %p122 = scmp.ne.s32.totalorder %s110, %s111
    %p123 = scmp.eq.s32.totalorder %s17, 1
    %p124 = por %p122, %p123
    %p126 = scmp.ne.s32.totalorder %s111, %s125
    %p127 = scmp.eq.s32.totalorder %s17, 0
    %p128 = por %p126, %p127
    %s129 = ssub.s32 %s11, %s18
    %p130 = scmp.eq.s32.totalorder %s129, 0
    %s132 = sadd.s32 %s131, 1
    %s133 = scalar_select %p130, %s131, %s132
    %p136 = pneg %p130
    %p137 = scmp.eq.s32.totalorder %s11, 1
    %p138 = por %p136, %p137
    %p139 = scmp.ne.s32.totalorder %s131, %s134
    %p140 = scmp.eq.s32.totalorder %s11, 0
    %p141 = por %p139, %p140
    %p142 = scmp.ne.s32.totalorder %s131, %s134
    %p143 = scmp.eq.s32.totalorder %s16, 1
    %p144 = por %p142, %p143
    %p145 = scmp.ne.s32.totalorder %s134, %s135
    %p146 = scmp.eq.s32.totalorder %s16, 0
    %p147 = por %p145, %p146
    %p148 = scmp.ne.s32.totalorder %s134, %s135
    %p149 = scmp.eq.s32.totalorder %s17, 1
    %p150 = por %p148, %p149
    %p152 = scmp.ne.s32.totalorder %s135, %s151
    %p153 = scmp.eq.s32.totalorder %s17, 0
    %p154 = por %p152, %p153
    %p155 = scmp.le.s32.totalorder 1, %s11
    %p156 = scmp.lt.s32.totalorder %s11, 3
    %p157 = pnand %p155, %p156
    %p158 = pneg %p157
    // Predicated region
    $region9: #{decoder_block.11} parent=5 // pred_check
      _
    $region10: #{decoder_block.11} parent=5 // pred_check_branch
      %160 = sbr.rel (%p157) target = $region12
    $region11: #{decoder_block.11} parent=5 // pred_region
      %s161 = ssub.s32 %s11, 1
      // Predicated region
      $region13: #{decoder_block.11} parent=11 // pred_check
        %p162 = pneg %p58
      $region14: #{decoder_block.11} parent=11 // pred_check_branch
        %164 = sbr.rel (%p162) target = $region16
      $region15: #{decoder_block.11} parent=11 // pred_region
        _
      $region16: #{decoder_block.11} parent=11 // pred_fallthru
        _
      // Predicated region
      $region17: #{decoder_block.11} parent=11 // pred_check
        %p165 = pneg %p79
      $region18: #{decoder_block.11} parent=11 // pred_check_branch
        %167 = sbr.rel (%p165) target = $region20
      $region19: #{decoder_block.11} parent=11 // pred_region
        _
      $region20: #{decoder_block.11} parent=11 // pred_fallthru
        _
      // Predicated region
      $region21: #{decoder_block.11} parent=11 // pred_check
        %p168 = pneg %p100
      $region22: #{decoder_block.11} parent=11 // pred_check_branch
        %170 = sbr.rel (%p168) target = $region24
      $region23: #{decoder_block.11} parent=11 // pred_region
        _
      $region24: #{decoder_block.11} parent=11 // pred_fallthru
        _
      // Predicated region
      $region25: #{decoder_block.11} parent=11 // pred_check
        %p171 = pneg %p121
      $region26: #{decoder_block.11} parent=11 // pred_check_branch
        %173 = sbr.rel (%p171) target = $region28
      $region27: #{decoder_block.11} parent=11 // pred_region
        _
      $region28: #{decoder_block.11} parent=11 // pred_fallthru
        _
    $region12: #{decoder_block.11} parent=5 // pred_fallthru
      _
    %p174 = scmp.lt.s32.totalorder %s11, 2
    // Predicated region
    $region29: #{decoder_block.11} parent=5 // pred_check
      %p175 = pneg %p174
    $region30: #{decoder_block.11} parent=5 // pred_check_branch
      %177 = sbr.rel (%p175) target = $region32
    $region31: #{decoder_block.11} parent=5 // pred_region
      // Predicated region
      $region33: #{decoder_block.11} parent=31 // pred_check
        %p178 = pneg %p31
      $region34: #{decoder_block.11} parent=31 // pred_check_branch
        %180 = sbr.rel (%p178) target = $region36
      $region35: #{decoder_block.11} parent=31 // pred_region
        %p181 = scmp.lt.s32.totalorder %s11, 1
        %s182 = scalar_select %p181, %s11, 1
        %s183 = smul.addr %s182, 8
        %s184 = scalar_lea.vmem %s0, %s183
      $region36: #{decoder_block.11} parent=31 // pred_fallthru
        _
    $region32: #{decoder_block.11} parent=5 // pred_fallthru
      _
    %p185 = scmp.le.s32.totalorder 1, %s11
    %p186 = scmp.lt.s32.totalorder %s11, 3
    %p187 = pnand %p185, %p186
    %p188 = pneg %p187
    // Predicated region
    $region37: #{decoder_block.11} parent=5 // pred_check
      _
    $region38: #{decoder_block.11} parent=5 // pred_check_branch
      %190 = sbr.rel (%p187) target = $region40
    $region39: #{decoder_block.11} parent=5 // pred_region
      %s191 = ssub.s32 %s11, 1
      %p192 = scmp.lt.s32.totalorder %s16, 1
      %s193 = scalar_select %p192, %s16, 1
      %s194 = smul.addr %s193, 8
      %s195 = scalar_lea.vmem %s0, %s194
      %p196 = pneg %p37
      %p197 = pneg %p34
      %p198 = pneg %p58
      %p199 = pneg %p55
      %p200 = pneg %p79
      %p201 = pneg %p76
      %p202 = pneg %p100
      %p203 = pneg %p97
      %p204 = pneg %p121
      %p205 = pneg %p118
      %p206 = pneg %p147
      %p207 = pneg %p144
      %p208 = scmp.lt.s32.totalorder %s16, 1
      %s209 = scalar_select %p208, %s16, 1
      %s210 = smul.addr %s209, 4
      %s211 = smul.addr %s210, 8
      %s212 = scalar_lea.vmem %s5, %s211
      %p213 = scmp.lt.s32.totalorder %s16, 1
      %s214 = scalar_select %p213, %s16, 1
      %s215 = smul.addr %s214, 8
      %s216 = scalar_lea.vmem %s0, %s215
      %p217 = scmp.lt.s32.totalorder %s16, 1
      %s218 = scalar_select %p217, %s16, 1
      %s219 = smul.addr %s218, 4
      %s220 = smul.addr %s219, 8
      %s221 = scalar_lea.vmem %s5, %s220
      %v222 = vld [vmem:[%s216] sm:$0xff]
      %v223 = vld [vmem:[%s1] sm:$0x1]
      %v224 = vld [vmem:[%s2] sm:$0x1]
      %vm225 = vcmask 261120
      %v226 = vsel %vm225, %v222, 0.0
      %227 = vadd.xlane.f32.xlu0 %v226
      %v228 = vpop.xlane.xlu0 %227
      %v229 = vrcp.pop 32.0
      %v230 = vmul.f32 %v228, %v229
      %v231 = vsub.f32 %v222, %v230
      %v232 = vmul.f32 %v231, %v231
      %v233 = vsel %vm225, %v232, 0.0
      %234 = vadd.xlane.f32.xlu0 %v233
      %v235 = vpop.xlane.xlu0 %234
      %v236 = vmul.f32 %v235, %v229
      %v237 = vadd.f32 %v236, 1e-06
      %v238 = vrsqrt.pop %v237
      %v239 = vmul.f32 %v231, %v238
      %v241 = vlaneseq
      %v242 = vshrl.u32 %v241, 7
      %v243 = vsub.s32 0, %v242
      %v244 = vrot.slane %v223, %v243
      %v246 = vmul.f32 %v239, %v244
      %v248 = vlaneseq
      %v249 = vshrl.u32 %v248, 7
      %v250 = vsub.s32 0, %v249
      %v251 = vrot.slane %v224, %v250
      %v253 = vadd.f32 %v246, %v251
      %v254 = vld [vmem:[%s3] sm:$0xff]
      %v255 = vld [vmem:[%s3 + $0x8] sm:$0xff]
      %v256 = vld [vmem:[%s3 + $0x10] sm:$0xff]
      %v257 = vld [vmem:[%s3 + $0x18] sm:$0xff]
      %v258 = vld [vmem:[%s4] sm:$0x1]
      %v260 = vlaneseq
      %v261 = vshrl.u32 %v260, 7
      %v262 = vsub.s32 0, %v261
      %v263 = vrot.slane %v258, %v262
      %v266 = vsel %vm225, %v253, 0
      %268 = vmatprep.subr.mxu0 0.0
      %269 = vmatpush1.msra.mxu0 %v254
      %270 = vmatprep.subr.mxu0 0.0
      %271 = vmatpush1.msra.mxu0 %v255
      %272 = vmatprep.subr.mxu0 0.0
      %273 = vmatpush1.msra.mxu0 %v256
      %274 = vmatprep.subr.mxu0 0.0
      %275 = vmatpush1.msra.mxu0 %v257
      %276 = vmatprep.subr.mxu0 0.0
      %277 = vmatpush1.msra.mxu0 0.0
      %278 = vmatprep.subr.mxu0 0.0
      %279 = vmatpush1.msra.mxu0 0.0
      %280 = vmatprep.subr.mxu0 0.0
      %281 = vmatpush1.msra.mxu0 0.0
      %282 = vmatprep.subr.mxu0 0.0
      %283 = vmatpush1.msra.mxu0 0.0
      %284 = vmatprep.subr.mxu0 0.0
      %285 = vmatpush1.msra.mxu0 0.0
      %286 = vmatprep.subr.mxu0 0.0
      %287 = vmatpush1.msra.mxu0 0.0
      %288 = vmatprep.subr.mxu0 0.0
      %289 = vmatpush1.msra.mxu0 0.0
      %290 = vmatprep.subr.mxu0 0.0
      %291 = vmatpush1.msra.mxu0 0.0
      %292 = vmatprep.subr.mxu0 0.0
      %293 = vmatpush1.msra.mxu0 0.0
      %294 = vmatprep.subr.mxu0 0.0
      %295 = vmatpush1.msra.mxu0 0.0
      %296 = vmatprep.subr.mxu0 0.0
      %297 = vmatpush1.msra.mxu0 0.0
      %298 = vmatprep.subr.mxu0 0.0
      %299 = vmatpush1.msra.mxu0 0.0
      %300 = vmatprep.subr.mxu0 0.0
      %301 = vmatpush1.msra.mxu0 0.0
      %302 = vmatprep.subr.mxu0 0.0
      %303 = vmatpush1.msra.mxu0 0.0
      %304 = vmatprep.subr.mxu0 0.0
      %305 = vmatpush1.msra.mxu0 0.0
      %306 = vmatprep.subr.mxu0 0.0
      %307 = vmatpush1.msra.mxu0 0.0
      %308 = vmatprep.subr.mxu0 0.0
      %309 = vmatpush1.msra.mxu0 0.0
      %310 = vmatprep.subr.mxu0 0.0
      %311 = vmatpush1.msra.mxu0 0.0
      %312 = vmatprep.subr.mxu0 0.0
      %313 = vmatpush1.msra.mxu0 0.0
      %314 = vmatprep.subr.mxu0 0.0
      %315 = vmatpush1.msra.mxu0 0.0
      %316 = vmatprep.subr.mxu0 0.0
      %317 = vmatpush1.msra.mxu0 0.0
      %318 = vmatprep.subr.mxu0 0.0
      %319 = vmatpush1.msra.mxu0 0.0
      %320 = vmatprep.subr.mxu0 0.0
      %321 = vmatpush1.msra.mxu0 0.0
      %322 = vmatprep.subr.mxu0 0.0
      %323 = vmatpush1.msra.mxu0 0.0
      %324 = vmatprep.subr.mxu0 0.0
      %325 = vmatpush1.msra.mxu0 0.0
      %326 = vmatprep.subr.mxu0 0.0
      %327 = vmatpush1.msra.mxu0 0.0
      %328 = vmatprep.subr.mxu0 0.0
      %329 = vmatpush1.msra.mxu0 0.0
      %330 = vmatprep.subr.mxu0 0.0
      %331 = vmatpush1.msra.mxu0 0.0
      %332 = vmatprep.mubr.f32.mxu0 0.0
      %333 = vmatmul.mubr.f32.gmra.mrb[0].mxu0 %v266
      %v334 = vpop.f32.mrb[0].mxu0
      %v335 = vadd.f32 %v263, %v334
      %v336 = vpop.f32.mrb[0].mxu0
      %337 = vdwg.mxu0
      %vm338 = vcmask 64512
      %339 = vst.msk [vmem:[%s221] sm:$0xff] %vm338, %v335
      %341 = vrot.lane.b32.xlu0 %v335, 120
      %v342 = vpop.permute.xlu0 %341
      %s344 = scalar_lea.vmem %s221, 8
      %345 = vst.msk [vmem:[%s344] sm:$0xff] %vm338, %v342
      %346 = vrot.lane.b32.xlu0 %v335, 112
      %v347 = vpop.permute.xlu0 %346
      %s349 = scalar_lea.vmem %s221, 16
      %350 = vst.msk [vmem:[%s349] sm:$0xff] %vm338, %v347
      %351 = vrot.lane.b32.xlu0 %v335, 104
      %v352 = vpop.permute.xlu0 %351
      %s354 = scalar_lea.vmem %s221, 24
      %355 = vst.msk [vmem:[%s354] sm:$0xff] %vm338, %v352
      %p356 = scmp.lt.s32.totalorder %s16, 1
      %s357 = scalar_select %p356, %s16, 1
      %s358 = smul.addr %s357, 4
      %s359 = smul.addr %s358, 8
      %s360 = scalar_lea.vmem %s5, %s359
      // Predicated region
      $region41: #{decoder_block.11} parent=39 // pred_check
        %p361 = pneg %p144
      $region42: #{decoder_block.11} parent=39 // pred_check_branch
        %363 = sbr.rel (%p361) target = $region44
      $region43: #{decoder_block.11} parent=39 // pred_region
        _
      $region44: #{decoder_block.11} parent=39 // pred_fallthru
        _
    $region40: #{decoder_block.11} parent=5 // pred_fallthru
      _
    %p364 = scmp.le.s32.totalorder 2, %s11
    // Predicated region
    $region45: #{decoder_block.11} parent=5 // pred_check
      %p365 = pneg %p364
    $region46: #{decoder_block.11} parent=5 // pred_check_branch
      %367 = sbr.rel (%p365) target = $region48
    $region47: #{decoder_block.11} parent=5 // pred_region
      %s368 = ssub.s32 %s11, 2
      // Predicated region
      $region49: #{decoder_block.11} parent=47 // pred_check
        %p369 = pneg %p150
      $region50: #{decoder_block.11} parent=47 // pred_check_branch
        %371 = sbr.rel (%p369) target = $region52
      $region51: #{decoder_block.11} parent=47 // pred_region
        %p372 = scmp.lt.s32.totalorder %s17, 1
        %s373 = scalar_select %p372, %s17, 1
        %s374 = smul.addr %s373, 4
        %s375 = smul.addr %s374, 8
        %s376 = scalar_lea.vmem %s5, %s375
      $region52: #{decoder_block.11} parent=47 // pred_fallthru
        _
    $region48: #{decoder_block.11} parent=5 // pred_fallthru
      _
  $region6: #{decoder_block.11} parent=0 // loop_footer
    %s15 = sadd.s32 1, %s11
  $region7: #{decoder_block.11} parent=0 // loop_footer_branch
    %10 = sbr.rel target = $region3
  $region8: #{decoder_block.11} parent=0 // loop_exit
    _

// kernel: decoder_block.10
$region0: #{decoder_block.10}
  #allocation0 [shape = 'u32[]', space=smem, size = 0x4, offset = 0x4, fixed_abs, tag = 'smem constant byte address 0x4 - core index']
  #allocation1 [shape = 'u32[144,128]{1,0:T(1,128)}', space=vmem, size = 0x12000, scoped, tag = 'internal scratch']
  %s0 = inlined_call_operand.vmem [shape: f32[2,4,8,8], index: 0, kind: input, shape index: {}]
  %s1 = inlined_call_operand.vmem [shape: f32[32,32], index: 1, kind: input, shape index: {}]
  %s2 = inlined_call_operand.vmem [shape: f32[1,32], index: 2, kind: input, shape index: {}]
  %s3 = inlined_call_operand.vmem [shape: f32[2,8,32], index: 3, kind: input, shape index: {}]
  %s4 = inlined_call_operand.vmem [shape: f32[2,8,32], index: 4, kind: output, shape index: {}]
  %s5 = sld [smem:[#allocation0]]
  $region49: #{decoder_block.10} parent=0
    _
  %s7 = ssub.s32 1, %s5
  %s8 = scalar_select 0, %s7, %s5
  loop: start=0, step=1, limit=4
  $region2: #{decoder_block.10} parent=0 // loop_pre_header
    _
  $region3: #{decoder_block.10} parent=0 // loop_header
    %s10 = sphi 0, %s14
    %p11 = scmp.ge.s32.totalorder %s10, 4
    %s20 = sphi 0, %s22
    %s23 = sphi 0, %s20
    %s24 = sphi 0, %s23
    %s40 = sphi 0, %s24
    %s44 = sphi 0, %s44
    %s46 = sphi 0, %s44
    %s47 = sphi 0, %s46
    %s61 = sphi 0, %s47
    %s65 = sphi 0, %s65
    %s67 = sphi 0, %s65
    %s68 = sphi 0, %s67
    %s82 = sphi 0, %s68
    %s88 = sphi 0, %s90
    %s91 = sphi 0, %s88
    %s92 = sphi 0, %s91
    %s108 = sphi 0, %s92
    %s114 = sphi 0, %s116
    %s117 = sphi 0, %s114
    %s118 = sphi 0, %s117
    %s134 = sphi 0, %s118
  $region4: #{decoder_block.10} parent=0 // loop_header_branch
    %13 = sbr.rel (%p11) target = $region8
  $region5: #{decoder_block.10} parent=0 // loop_body
    %s15 = ssub.s32 %s10, 1
    %s16 = ssub.s32 %s10, 2
    %s17 = sadd.s32 %s10, 1
    %s18 = ssub.s32 %s10, %s17
    %p19 = scmp.eq.s32.totalorder %s18, 0
    %s21 = sadd.s32 %s20, 1
    %s22 = scalar_select %p19, %s20, %s21
    %p25 = pneg %p19
    %p26 = scmp.eq.s32.totalorder %s10, 1
    %p27 = por %p25, %p26
    %p28 = scmp.ne.s32.totalorder %s20, %s23
    %p29 = scmp.eq.s32.totalorder %s10, 0
    %p30 = por %p28, %p29
    %p31 = scmp.ne.s32.totalorder %s20, %s23
    %p32 = scmp.eq.s32.totalorder %s15, 1
    %p33 = por %p31, %p32
    %p34 = scmp.ne.s32.totalorder %s23, %s24
    %p35 = scmp.eq.s32.totalorder %s15, 0
    %p36 = por %p34, %p35
    %p37 = scmp.ne.s32.totalorder %s23, %s24
    %p38 = scmp.eq.s32.totalorder %s16, 1
    %p39 = por %p37, %p38
    %p41 = scmp.ne.s32.totalorder %s24, %s40
    %p42 = scmp.eq.s32.totalorder %s16, 0
    %p43 = por %p41, %p42
    %s45 = sadd.s32 %s44, 1
    %p48 = scmp.eq.s32.totalorder %s10, 1
    %p49 = scmp.ne.s32.totalorder %s44, %s46
    %p50 = scmp.eq.s32.totalorder %s10, 0
    %p51 = por %p49, %p50
    %p52 = scmp.ne.s32.totalorder %s44, %s46
    %p53 = scmp.eq.s32.totalorder %s15, 1
    %p54 = por %p52, %p53
    %p55 = scmp.ne.s32.totalorder %s46, %s47
    %p56 = scmp.eq.s32.totalorder %s15, 0
    %p57 = por %p55, %p56
    %p58 = scmp.ne.s32.totalorder %s46, %s47
    %p59 = scmp.eq.s32.totalorder %s16, 1
    %p60 = por %p58, %p59
    %p62 = scmp.ne.s32.totalorder %s47, %s61
    %p63 = scmp.eq.s32.totalorder %s16, 0
    %p64 = por %p62, %p63
    %s66 = sadd.s32 %s65, 1
    %p69 = scmp.eq.s32.totalorder %s10, 1
    %p70 = scmp.ne.s32.totalorder %s65, %s67
    %p71 = scmp.eq.s32.totalorder %s10, 0
    %p72 = por %p70, %p71
    %p73 = scmp.ne.s32.totalorder %s65, %s67
    %p74 = scmp.eq.s32.totalorder %s15, 1
    %p75 = por %p73, %p74
    %p76 = scmp.ne.s32.totalorder %s67, %s68
    %p77 = scmp.eq.s32.totalorder %s15, 0
    %p78 = por %p76, %p77
    %p79 = scmp.ne.s32.totalorder %s67, %s68
    %p80 = scmp.eq.s32.totalorder %s16, 1
    %p81 = por %p79, %p80
    %p83 = scmp.ne.s32.totalorder %s68, %s82
    %p84 = scmp.eq.s32.totalorder %s16, 0
    %p85 = por %p83, %p84
    %s86 = ssub.s32 %s10, %s17
    %p87 = scmp.eq.s32.totalorder %s86, 0
    %s89 = sadd.s32 %s88, 1
    %s90 = scalar_select %p87, %s88, %s89
    %p93 = pneg %p87
    %p94 = scmp.eq.s32.totalorder %s10, 1
    %p95 = por %p93, %p94
    %p96 = scmp.ne.s32.totalorder %s88, %s91
    %p97 = scmp.eq.s32.totalorder %s10, 0
    %p98 = por %p96, %p97
    %p99 = scmp.ne.s32.totalorder %s88, %s91
    %p100 = scmp.eq.s32.totalorder %s15, 1
    %p101 = por %p99, %p100
    %p102 = scmp.ne.s32.totalorder %s91, %s92
    %p103 = scmp.eq.s32.totalorder %s15, 0
    %p104 = por %p102, %p103
    %p105 = scmp.ne.s32.totalorder %s91, %s92
    %p106 = scmp.eq.s32.totalorder %s16, 1
    %p107 = por %p105, %p106
    %p109 = scmp.ne.s32.totalorder %s92, %s108
    %p110 = scmp.eq.s32.totalorder %s16, 0
    %p111 = por %p109, %p110
    %s112 = ssub.s32 %s10, %s17
    %p113 = scmp.eq.s32.totalorder %s112, 0
    %s115 = sadd.s32 %s114, 1
    %s116 = scalar_select %p113, %s114, %s115
    %p119 = pneg %p113
    %p120 = scmp.eq.s32.totalorder %s10, 1
    %p121 = por %p119, %p120
    %p122 = scmp.ne.s32.totalorder %s114, %s117
    %p123 = scmp.eq.s32.totalorder %s10, 0
    %p124 = por %p122, %p123
    %p125 = scmp.ne.s32.totalorder %s114, %s117
    %p126 = scmp.eq.s32.totalorder %s15, 1
    %p127 = por %p125, %p126
    %p128 = scmp.ne.s32.totalorder %s117, %s118
    %p129 = scmp.eq.s32.totalorder %s15, 0
    %p130 = por %p128, %p129
    %p131 = scmp.ne.s32.totalorder %s117, %s118
    %p132 = scmp.eq.s32.totalorder %s16, 1
    %p133 = por %p131, %p132
    %p135 = scmp.ne.s32.totalorder %s118, %s134
    %p136 = scmp.eq.s32.totalorder %s16, 0
    %p137 = por %p135, %p136
    %p138 = scmp.le.s32.totalorder 1, %s10
    %p139 = scmp.lt.s32.totalorder %s10, 3
    %p140 = pnand %p138, %p139
    %p141 = pneg %p140
    // Predicated region
    $region9: #{decoder_block.10} parent=5 // pred_check
      _
    $region10: #{decoder_block.10} parent=5 // pred_check_branch
      %143 = sbr.rel (%p140) target = $region12
    $region11: #{decoder_block.10} parent=5 // pred_region
      %s144 = ssub.s32 %s10, 1
      // Predicated region
      $region13: #{decoder_block.10} parent=11 // pred_check
        %p145 = pneg %p57
      $region14: #{decoder_block.10} parent=11 // pred_check_branch
        %147 = sbr.rel (%p145) target = $region16
      $region15: #{decoder_block.10} parent=11 // pred_region
        _
      $region16: #{decoder_block.10} parent=11 // pred_fallthru
        _
      // Predicated region
      $region17: #{decoder_block.10} parent=11 // pred_check
        %p148 = pneg %p78
      $region18: #{decoder_block.10} parent=11 // pred_check_branch
        %150 = sbr.rel (%p148) target = $region20
      $region19: #{decoder_block.10} parent=11 // pred_region
        _
      $region20: #{decoder_block.10} parent=11 // pred_fallthru
        _
    $region12: #{decoder_block.10} parent=5 // pred_fallthru
      _
    %p151 = scmp.lt.s32.totalorder %s10, 2
    // Predicated region
    $region21: #{decoder_block.10} parent=5 // pred_check
      %p152 = pneg %p151
    $region22: #{decoder_block.10} parent=5 // pred_check_branch
      %154 = sbr.rel (%p152) target = $region24
    $region23: #{decoder_block.10} parent=5 // pred_region
      // Predicated region
      $region25: #{decoder_block.10} parent=23 // pred_check
        %p155 = pneg %p30
      $region26: #{decoder_block.10} parent=23 // pred_check_branch
        %157 = sbr.rel (%p155) target = $region28
      $region27: #{decoder_block.10} parent=23 // pred_region
        %p158 = scmp.lt.s32.totalorder %s10, 1
        %s159 = scalar_select %p158, %s10, 1
        %s160 = smul.addr %s159, 4
        %s161 = smul.addr %s160, 8
        %s162 = scalar_lea.vmem %s0, %s161
      $region28: #{decoder_block.10} parent=23 // pred_fallthru
        _
      // Predicated region
      $region29: #{decoder_block.10} parent=23 // pred_check
        %p163 = pneg %p98
      $region30: #{decoder_block.10} parent=23 // pred_check_branch
        %165 = sbr.rel (%p163) target = $region32
      $region31: #{decoder_block.10} parent=23 // pred_region
        %p166 = scmp.lt.s32.totalorder %s10, 1
        %s167 = scalar_select %p166, %s10, 1
        %s168 = smul.addr %s167, 8
        %s169 = scalar_lea.vmem %s3, %s168
      $region32: #{decoder_block.10} parent=23 // pred_fallthru
        _
    $region24: #{decoder_block.10} parent=5 // pred_fallthru
      _
    %p170 = scmp.le.s32.totalorder 1, %s10
    %p171 = scmp.lt.s32.totalorder %s10, 3
    %p172 = pnand %p170, %p171
    %p173 = pneg %p172
    // Predicated region
    $region33: #{decoder_block.10} parent=5 // pred_check
      _
    $region34: #{decoder_block.10} parent=5 // pred_check_branch
      %175 = sbr.rel (%p172) target = $region36
    $region35: #{decoder_block.10} parent=5 // pred_region
      %s176 = ssub.s32 %s10, 1
      %p177 = scmp.lt.s32.totalorder %s15, 1
      %s178 = scalar_select %p177, %s15, 1
      %s179 = smul.addr %s178, 4
      %s180 = smul.addr %s179, 8
      %s181 = scalar_lea.vmem %s0, %s180
      %p182 = pneg %p36
      %p183 = pneg %p33
      %p184 = pneg %p57
      %p185 = pneg %p54
      %p186 = pneg %p78
      %p187 = pneg %p75
      %p188 = scmp.lt.s32.totalorder %s15, 1
      %s189 = scalar_select %p188, %s15, 1
      %s190 = smul.addr %s189, 8
      %s191 = scalar_lea.vmem %s3, %s190
      %p192 = pneg %p104
      %p193 = pneg %p101
      %p194 = pneg %p130
      %p195 = pneg %p127
      %p196 = scmp.lt.s32.totalorder %s15, 1
      %s197 = scalar_select %p196, %s15, 1
      %s198 = smul.addr %s197, 8
      %s199 = scalar_lea.vmem %s4, %s198
      %p200 = scmp.lt.s32.totalorder %s15, 1
      %s201 = scalar_select %p200, %s15, 1
      %s202 = smul.addr %s201, 4
      %s203 = smul.addr %s202, 8
      %s204 = scalar_lea.vmem %s0, %s203
      %p205 = scmp.lt.s32.totalorder %s15, 1
      %s206 = scalar_select %p205, %s15, 1
      %s207 = smul.addr %s206, 8
      %s208 = scalar_lea.vmem %s3, %s207
      %p209 = scmp.lt.s32.totalorder %s15, 1
      %s210 = scalar_select %p209, %s15, 1
      %s211 = smul.addr %s210, 8
      %s212 = scalar_lea.vmem %s4, %s211
      %v213 = vld [vmem:[%s204] sm:$0xff]
      %v214 = vld [vmem:[%s1] sm:$0xff]
      %s215 = scalar_lea.vmem %s204, 8
      %v216 = vld [vmem:[%s215] sm:$0xff]
      %v217 = vld [vmem:[%s1 + $0x8] sm:$0xff]
      %vm218 = vcmask 64512
      %v220 = vsel %vm218, %v216, 0
      %222 = vmatprep.subr.mxu0 0.0
      %223 = vmatpush1.msra.mxu0 %v217
      %224 = vmatprep.subr.mxu0 0.0
      %225 = vmatpush1.msra.mxu0 0.0
      %226 = vmatprep.subr.mxu0 0.0
      %227 = vmatpush1.msra.mxu0 0.0
      %228 = vmatprep.subr.mxu0 0.0
      %229 = vmatpush1.msra.mxu0 0.0
      %230 = vmatprep.subr.mxu0 0.0
      %231 = vmatpush1.msra.mxu0 0.0
      %232 = vmatprep.subr.mxu0 0.0
      %233 = vmatpush1.msra.mxu0 0.0
      %234 = vmatprep.subr.mxu0 0.0
      %235 = vmatpush1.msra.mxu0 0.0
      %236 = vmatprep.subr.mxu0 0.0
      %237 = vmatpush1.msra.mxu0 0.0
      %238 = vmatprep.subr.mxu0 0.0
      %239 = vmatpush1.msra.mxu0 0.0
      %240 = vmatprep.subr.mxu0 0.0
      %241 = vmatpush1.msra.mxu0 0.0
      %242 = vmatprep.subr.mxu0 0.0
      %243 = vmatpush1.msra.mxu0 0.0
      %244 = vmatprep.subr.mxu0 0.0
      %245 = vmatpush1.msra.mxu0 0.0
      %246 = vmatprep.subr.mxu0 0.0
      %247 = vmatpush1.msra.mxu0 0.0
      %248 = vmatprep.subr.mxu0 0.0
      %249 = vmatpush1.msra.mxu0 0.0
      %250 = vmatprep.subr.mxu0 0.0
      %251 = vmatpush1.msra.mxu0 0.0
      %252 = vmatprep.subr.mxu0 0.0
      %253 = vmatpush1.msra.mxu0 0.0
      %254 = vmatprep.subr.mxu0 0.0
      %255 = vmatpush1.msra.mxu0 0.0
      %256 = vmatprep.subr.mxu0 0.0
      %257 = vmatpush1.msra.mxu0 0.0
      %258 = vmatprep.subr.mxu0 0.0
      %259 = vmatpush1.msra.mxu0 0.0
      %260 = vmatprep.subr.mxu0 0.0
      %261 = vmatpush1.msra.mxu0 0.0
      %262 = vmatprep.subr.mxu0 0.0
      %263 = vmatpush1.msra.mxu0 0.0
      %264 = vmatprep.subr.mxu0 0.0
      %265 = vmatpush1.msra.mxu0 0.0
      %266 = vmatprep.subr.mxu0 0.0
      %267 = vmatpush1.msra.mxu0 0.0
      %268 = vmatprep.subr.mxu0 0.0
      %269 = vmatpush1.msra.mxu0 0.0
      %270 = vmatprep.subr.mxu0 0.0
      %271 = vmatpush1.msra.mxu0 0.0
      %272 = vmatprep.subr.mxu0 0.0
      %273 = vmatpush1.msra.mxu0 0.0
      %274 = vmatprep.subr.mxu0 0.0
      %275 = vmatpush1.msra.mxu0 0.0
      %276 = vmatprep.subr.mxu0 0.0
      %277 = vmatpush1.msra.mxu0 0.0
      %278 = vmatprep.subr.mxu0 0.0
      %279 = vmatpush1.msra.mxu0 0.0
      %280 = vmatprep.subr.mxu0 0.0
      %281 = vmatpush1.msra.mxu0 0.0
      %282 = vmatprep.subr.mxu0 0.0
      %283 = vmatpush1.msra.mxu0 0.0
      %284 = vmatprep.subr.mxu0 0.0
      %285 = vmatpush1.msra.mxu0 0.0
      %286 = vmatprep.mubr.f32.mxu0 0.0
      %287 = vmatmul.mubr.f32.gmra.mrb[0].mxu0 %v220
      %v288 = vpop.f32.mrb[0].mxu0
      %v289 = vadd.f32 0.0, %v288
      %v290 = vpop.f32.mrb[0].mxu0
      %291 = vdwg.mxu0
      %v293 = vsel %vm218, %v213, 0
      %295 = vmatprep.subr.mxu0 0.0
      %296 = vmatpush1.msra.mxu0 %v214
      %297 = vmatprep.subr.mxu0 0.0
      %298 = vmatpush1.msra.mxu0 0.0
      %299 = vmatprep.subr.mxu0 0.0
      %300 = vmatpush1.msra.mxu0 0.0
      %301 = vmatprep.subr.mxu0 0.0
      %302 = vmatpush1.msra.mxu0 0.0
      %303 = vmatprep.subr.mxu0 0.0
      %304 = vmatpush1.msra.mxu0 0.0
      %305 = vmatprep.subr.mxu0 0.0
      %306 = vmatpush1.msra.mxu0 0.0
      %307 = vmatprep.subr.mxu0 0.0
      %308 = vmatpush1.msra.mxu0 0.0
      %309 = vmatprep.subr.mxu0 0.0
      %310 = vmatpush1.msra.mxu0 0.0
      %311 = vmatprep.subr.mxu0 0.0
      %312 = vmatpush1.msra.mxu0 0.0
      %313 = vmatprep.subr.mxu0 0.0
      %314 = vmatpush1.msra.mxu0 0.0
      %315 = vmatprep.subr.mxu0 0.0
      %316 = vmatpush1.msra.mxu0 0.0
      %317 = vmatprep.subr.mxu0 0.0
      %318 = vmatpush1.msra.mxu0 0.0
      %319 = vmatprep.subr.mxu0 0.0
      %320 = vmatpush1.msra.mxu0 0.0
      %321 = vmatprep.subr.mxu0 0.0
      %322 = vmatpush1.msra.mxu0 0.0
      %323 = vmatprep.subr.mxu0 0.0
      %324 = vmatpush1.msra.mxu0 0.0
      %325 = vmatprep.subr.mxu0 0.0
      %326 = vmatpush1.msra.mxu0 0.0
      %327 = vmatprep.subr.mxu0 0.0
      %328 = vmatpush1.msra.mxu0 0.0
      %329 = vmatprep.subr.mxu0 0.0
      %330 = vmatpush1.msra.mxu0 0.0
      %331 = vmatprep.subr.mxu0 0.0
      %332 = vmatpush1.msra.mxu0 0.0
      %333 = vmatprep.subr.mxu0 0.0
      %334 = vmatpush1.msra.mxu0 0.0
      %335 = vmatprep.subr.mxu0 0.0
      %336 = vmatpush1.msra.mxu0 0.0
      %337 = vmatprep.subr.mxu0 0.0
      %338 = vmatpush1.msra.mxu0 0.0
      %339 = vmatprep.subr.mxu0 0.0
      %340 = vmatpush1.msra.mxu0 0.0
      %341 = vmatprep.subr.mxu0 0.0
      %342 = vmatpush1.msra.mxu0 0.0
      %343 = vmatprep.subr.mxu0 0.0
      %344 = vmatpush1.msra.mxu0 0.0
      %345 = vmatprep.subr.mxu0 0.0
      %346 = vmatpush1.msra.mxu0 0.0
      %347 = vmatprep.subr.mxu0 0.0
      %348 = vmatpush1.msra.mxu0 0.0
      %349 = vmatprep.subr.mxu0 0.0
      %350 = vmatpush1.msra.mxu0 0.0
      %351 = vmatprep.subr.mxu0 0.0
      %352 = vmatpush1.msra.mxu0 0.0
      %353 = vmatprep.subr.mxu0 0.0
      %354 = vmatpush1.msra.mxu0 0.0
      %355 = vmatprep.subr.mxu0 0.0
      %356 = vmatpush1.msra.mxu0 0.0
      %357 = vmatprep.subr.mxu0 0.0
      %358 = vmatpush1.msra.mxu0 0.0
      %359 = vmatprep.mubr.f32.mxu0 0.0
      %360 = vmatmul.mubr.f32.gmra.mrb[0].mxu0 %v293
      %v361 = vpop.f32.mrb[0].mxu0
      %v362 = vadd.f32 %v289, %v361
      %v363 = vpop.f32.mrb[0].mxu0
      %364 = vdwg.mxu0
      %s365 = scalar_lea.vmem %s204, 16
      %v366 = vld [vmem:[%s365] sm:$0xff]
      %v367 = vld [vmem:[%s1 + $0x10] sm:$0xff]
      %v369 = vsel %vm218, %v366, 0
      %371 = vmatprep.subr.mxu0 0.0
      %372 = vmatpush1.msra.mxu0 %v367
      %373 = vmatprep.subr.mxu0 0.0
      %374 = vmatpush1.msra.mxu0 0.0
      %375 = vmatprep.subr.mxu0 0.0
      %376 = vmatpush1.msra.mxu0 0.0
      %377 = vmatprep.subr.mxu0 0.0
      %378 = vmatpush1.msra.mxu0 0.0
      %379 = vmatprep.subr.mxu0 0.0
      %380 = vmatpush1.msra.mxu0 0.0
      %381 = vmatprep.subr.mxu0 0.0
      %382 = vmatpush1.msra.mxu0 0.0
      %383 = vmatprep.subr.mxu0 0.0
      %384 = vmatpush1.msra.mxu0 0.0
      %385 = vmatprep.subr.mxu0 0.0
      %386 = vmatpush1.msra.mxu0 0.0
      %387 = vmatprep.subr.mxu0 0.0
      %388 = vmatpush1.msra.mxu0 0.0
      %389 = vmatprep.subr.mxu0 0.0
      %390 = vmatpush1.msra.mxu0 0.0
      %391 = vmatprep.subr.mxu0 0.0
      %392 = vmatpush1.msra.mxu0 0.0
      %393 = vmatprep.subr.mxu0 0.0
      %394 = vmatpush1.msra.mxu0 0.0
      %395 = vmatprep.subr.mxu0 0.0
      %396 = vmatpush1.msra.mxu0 0.0
      %397 = vmatprep.subr.mxu0 0.0
      %398 = vmatpush1.msra.mxu0 0.0
      %399 = vmatprep.subr.mxu0 0.0
      %400 = vmatpush1.msra.mxu0 0.0
      %401 = vmatprep.subr.mxu0 0.0
      %402 = vmatpush1.msra.mxu0 0.0
      %403 = vmatprep.subr.mxu0 0.0
      %404 = vmatpush1.msra.mxu0 0.0
      %405 = vmatprep.subr.mxu0 0.0
      %406 = vmatpush1.msra.mxu0 0.0
      %407 = vmatprep.subr.mxu0 0.0
      %408 = vmatpush1.msra.mxu0 0.0
      %409 = vmatprep.subr.mxu0 0.0
      %410 = vmatpush1.msra.mxu0 0.0
      %411 = vmatprep.subr.mxu0 0.0
      %412 = vmatpush1.msra.mxu0 0.0
      %413 = vmatprep.subr.mxu0 0.0
      %414 = vmatpush1.msra.mxu0 0.0
      %415 = vmatprep.subr.mxu0 0.0
      %416 = vmatpush1.msra.mxu0 0.0
      %417 = vmatprep.subr.mxu0 0.0
      %418 = vmatpush1.msra.mxu0 0.0
      %419 = vmatprep.subr.mxu0 0.0
      %420 = vmatpush1.msra.mxu0 0.0
      %421 = vmatprep.subr.mxu0 0.0
      %422 = vmatpush1.msra.mxu0 0.0
      %423 = vmatprep.subr.mxu0 0.0
      %424 = vmatpush1.msra.mxu0 0.0
      %425 = vmatprep.subr.mxu0 0.0
      %426 = vmatpush1.msra.mxu0 0.0
      %427 = vmatprep.subr.mxu0 0.0
      %428 = vmatpush1.msra.mxu0 0.0
      %429 = vmatprep.subr.mxu0 0.0
      %430 = vmatpush1.msra.mxu0 0.0
      %431 = vmatprep.subr.mxu0 0.0
      %432 = vmatpush1.msra.mxu0 0.0
      %433 = vmatprep.subr.mxu0 0.0
      %434 = vmatpush1.msra.mxu0 0.0
      %435 = vmatprep.mubr.f32.mxu0 0.0
      %436 = vmatmul.mubr.f32.gmra.mrb[0].mxu0 %v369
      %v437 = vpop.f32.mrb[0].mxu0
      %v438 = vadd.f32 0.0, %v437
      %v439 = vpop.f32.mrb[0].mxu0
      %440 = vdwg.mxu0
      %v441 = vadd.f32 %v362, %v438
      %s442 = scalar_lea.vmem %s204, 24
      %v443 = vld [vmem:[%s442] sm:$0xff]
      %v444 = vld [vmem:[%s1 + $0x18] sm:$0xff]
      %v446 = vsel %vm218, %v443, 0
      %448 = vmatprep.subr.mxu0 0.0
      %449 = vmatpush1.msra.mxu0 %v444
      %450 = vmatprep.subr.mxu0 0.0
      %451 = vmatpush1.msra.mxu0 0.0
      %452 = vmatprep.subr.mxu0 0.0
      %453 = vmatpush1.msra.mxu0 0.0
      %454 = vmatprep.subr.mxu0 0.0
      %455 = vmatpush1.msra.mxu0 0.0
      %456 = vmatprep.subr.mxu0 0.0
      %457 = vmatpush1.msra.mxu0 0.0
      %458 = vmatprep.subr.mxu0 0.0
      %459 = vmatpush1.msra.mxu0 0.0
      %460 = vmatprep.subr.mxu0 0.0
      %461 = vmatpush1.msra.mxu0 0.0
      %462 = vmatprep.subr.mxu0 0.0
      %463 = vmatpush1.msra.mxu0 0.0
      %464 = vmatprep.subr.mxu0 0.0
      %465 = vmatpush1.msra.mxu0 0.0
      %466 = vmatprep.subr.mxu0 0.0
      %467 = vmatpush1.msra.mxu0 0.0
      %468 = vmatprep.subr.mxu0 0.0
      %469 = vmatpush1.msra.mxu0 0.0
      %470 = vmatprep.subr.mxu0 0.0
      %471 = vmatpush1.msra.mxu0 0.0
      %472 = vmatprep.subr.mxu0 0.0
      %473 = vmatpush1.msra.mxu0 0.0
      %474 = vmatprep.subr.mxu0 0.0
      %475 = vmatpush1.msra.mxu0 0.0
      %476 = vmatprep.subr.mxu0 0.0
      %477 = vmatpush1.msra.mxu0 0.0
      %478 = vmatprep.subr.mxu0 0.0
      %479 = vmatpush1.msra.mxu0 0.0
      %480 = vmatprep.subr.mxu0 0.0
      %481 = vmatpush1.msra.mxu0 0.0
      %482 = vmatprep.subr.mxu0 0.0
      %483 = vmatpush1.msra.mxu0 0.0
      %484 = vmatprep.subr.mxu0 0.0
      %485 = vmatpush1.msra.mxu0 0.0
      %486 = vmatprep.subr.mxu0 0.0
      %487 = vmatpush1.msra.mxu0 0.0
      %488 = vmatprep.subr.mxu0 0.0
      %489 = vmatpush1.msra.mxu0 0.0
      %490 = vmatprep.subr.mxu0 0.0
      %491 = vmatpush1.msra.mxu0 0.0
      %492 = vmatprep.subr.mxu0 0.0
      %493 = vmatpush1.msra.mxu0 0.0
      %494 = vmatprep.subr.mxu0 0.0
      %495 = vmatpush1.msra.mxu0 0.0
      %496 = vmatprep.subr.mxu0 0.0
      %497 = vmatpush1.msra.mxu0 0.0
      %498 = vmatprep.subr.mxu0 0.0
      %499 = vmatpush1.msra.mxu0 0.0
      %500 = vmatprep.subr.mxu0 0.0
      %501 = vmatpush1.msra.mxu0 0.0
      %502 = vmatprep.subr.mxu0 0.0
      %503 = vmatpush1.msra.mxu0 0.0
      %504 = vmatprep.subr.mxu0 0.0
      %505 = vmatpush1.msra.mxu0 0.0
      %506 = vmatprep.subr.mxu0 0.0
      %507 = vmatpush1.msra.mxu0 0.0
      %508 = vmatprep.subr.mxu0 0.0
      %509 = vmatpush1.msra.mxu0 0.0
      %510 = vmatprep.subr.mxu0 0.0
      %511 = vmatpush1.msra.mxu0 0.0
      %512 = vmatprep.mubr.f32.mxu0 0.0
      %513 = vmatmul.mubr.f32.gmra.mrb[0].mxu0 %v446
      %v514 = vpop.f32.mrb[0].mxu0
      %v515 = vadd.f32 0.0, %v514
      %v516 = vpop.f32.mrb[0].mxu0
      %517 = vdwg.mxu0
      %v518 = vadd.f32 %v441, %v515
      %v519 = vld [vmem:[%s2] sm:$0x1]
      %v521 = vlaneseq
      %v522 = vshrl.u32 %v521, 7
      %v523 = vsub.s32 0, %v522
      %v524 = vrot.slane %v519, %v523
      %v526 = vadd.f32 %v518, %v524
      %v527 = vld [vmem:[%s208] sm:$0xff]
      %v528 = vadd.f32 %v526, %v527
      %vm529 = vcmask 261120
      %530 = vst.msk [vmem:[%s212] sm:$0xff] %vm529, %v528
      %p531 = scmp.lt.s32.totalorder %s15, 1
      %s532 = scalar_select %p531, %s15, 1
      %s533 = smul.addr %s532, 8
      %s534 = scalar_lea.vmem %s4, %s533
      // Predicated region
      $region37: #{decoder_block.10} parent=35 // pred_check
        %p535 = pneg %p127
      $region38: #{decoder_block.10} parent=35 // pred_check_branch
        %537 = sbr.rel (%p535) target = $region40
      $region39: #{decoder_block.10} parent=35 // pred_region
        _
      $region40: #{decoder_block.10} parent=35 // pred_fallthru
        _
    $region36: #{decoder_block.10} parent=5 // pred_fallthru
      _
    %p538 = scmp.le.s32.totalorder 2, %s10
    // Predicated region
    $region41: #{decoder_block.10} parent=5 // pred_check
      %p539 = pneg %p538
    $region42: #{decoder_block.10} parent=5 // pred_check_branch
      %541 = sbr.rel (%p539) target = $region44
    $region43: #{decoder_block.10} parent=5 // pred_region
      %s542 = ssub.s32 %s10, 2
      // Predicated region
      $region45: #{decoder_block.10} parent=43 // pred_check
        %p543 = pneg %p133
      $region46: #{decoder_block.10} parent=43 // pred_check_branch
        %545 = sbr.rel (%p543) target = $region48
      $region47: #{decoder_block.10} parent=43 // pred_region
        %p546 = scmp.lt.s32.totalorder %s16, 1
        %s547 = scalar_select %p546, %s16, 1
        %s548 = smul.addr %s547, 8
        %s549 = scalar_lea.vmem %s4, %s548
      $region48: #{decoder_block.10} parent=43 // pred_fallthru
        _
    $region44: #{decoder_block.10} parent=5 // pred_fallthru
      _
  $region6: #{decoder_block.10} parent=0 // loop_footer
    %s14 = sadd.s32 1, %s10
  $region7: #{decoder_block.10} parent=0 // loop_footer_branch
    %9 = sbr.rel target = $region3
  $region8: #{decoder_block.10} parent=0 // loop_exit
    _

// kernel: decoder_block.13
$region0: #{decoder_block.13}
  #allocation0 [shape = 'u32[]', space=smem, size = 0x4, offset = 0x4, fixed_abs, tag = 'smem constant byte address 0x4 - core index']
  #allocation1 [shape = 'u32[144,128]{1,0:T(1,128)}', space=vmem, size = 0x12000, scoped, tag = 'internal scratch']
  %s0 = inlined_call_operand.vmem [shape: f32[2,4,8,8], index: 0, kind: input, shape index: {}]
  %s1 = inlined_call_operand.vmem [shape: f32[2,4,8,8], index: 1, kind: input, shape index: {}]
  %s2 = inlined_call_operand.vmem [shape: f32[2,4,8,8], index: 2, kind: input, shape index: {}]
  %s3 = inlined_call_operand.vmem [shape: f32[2,4,8,8], index: 3, kind: output, shape index: {0}]
  %s4 = inlined_call_operand.hbm [shape: f32[2,4,8,8], index: 4, kind: output, shape index: {1}]
  %5 = xla_tuple %s3, %s4
  %s6 = sld [smem:[#allocation0]]
  $region53: #{decoder_block.13} parent=0
    _
  %s8 = ssub.s32 1, %s6
  %s9 = scalar_select 0, %s8, %s6
  $region1: #{decoder_block.13} parent=0
    #allocation2 [shape = 'u8[8192]{0}', space=vmem, size = 0x2000, scoped, tag = 'output window, operand 1']
    #allocation3 [shape = 's32[2]{0}', space=sflag, size = 0x8, scoped, tag = 'scoped memory for decoder_block.13']
    %10 = vsyncpa [#allocation3], 0
    %s11 = scalar_lea.sflag [#allocation3], 1
    %12 = vsyncpa %s11, 0
    loop: start=0, step=1, limit=10
    $region2: #{decoder_block.13} parent=1 // loop_pre_header
      _
    $region3: #{decoder_block.13} parent=1 // loop_header
      %s14 = sphi 0, %s18
      %p15 = scmp.ge.s32.totalorder %s14, 10
      %s21 = sphi 0, %s33
      %s22 = sphi 0, %s29
      %s23 = sphi 0, %s21
      %s24 = sphi 0, %s22
      %s25 = sphi 0, %s23
      %s26 = sphi 0, %s24
      %s38 = sphi 0, %s40
      %s41 = sphi 0, %s38
      %s42 = sphi 0, %s41
      %s58 = sphi 0, %s42
      %s66 = sphi 0, %s68
      %s69 = sphi 0, %s66
      %s70 = sphi 0, %s69
      %s86 = sphi 0, %s70
      %s94 = sphi 0, %s96
      %s97 = sphi 0, %s94
      %s98 = sphi 0, %s97
      %s114 = sphi 0, %s98
      %s122 = sphi 0, %s124
      %s125 = sphi 0, %s122
      %s126 = sphi 0, %s125
      %s142 = sphi 0, %s126
      %s150 = sphi 0, %s152
      %s153 = sphi 0, %s150
      %s154 = sphi 0, %s153
      %s170 = sphi 0, %s154
    $region4: #{decoder_block.13} parent=1 // loop_header_branch
      %17 = sbr.rel (%p15) target = $region8
    $region5: #{decoder_block.13} parent=1 // loop_body
      %s19 = ssub.s32 %s14, 1
      %s20 = ssub.s32 %s14, 2
      %s27 = sadd.s32 1, %s22
      %p28 = scmp.ge.s32.totalorder %s27, 4
      %s29 = scalar_select %p28, 0, %s27
      %s30 = sadd.s32 1, %s21
      %s31 = scalar_select %p28, %s30, %s21
      %p32 = scmp.ge.s32.totalorder %s31, 2
      %s33 = scalar_select %p32, 0, %s31
      %s34 = ssub.s32 %s21, %s33
      %s35 = ssub.s32 %s22, %s29
      %s36 = sor.u32 %s34, %s35
      %p37 = scmp.eq.s32.totalorder %s36, 0
      %s39 = sadd.s32 %s38, 1
      %s40 = scalar_select %p37, %s38, %s39
      %p43 = pneg %p37
      %p44 = scmp.eq.s32.totalorder %s14, 7
      %p45 = por %p43, %p44
      %p46 = scmp.ne.s32.totalorder %s38, %s41
      %p47 = scmp.eq.s32.totalorder %s14, 0
      %p48 = por %p46, %p47
      %p49 = scmp.ne.s32.totalorder %s38, %s41
      %p50 = scmp.eq.s32.totalorder %s19, 7
      %p51 = por %p49, %p50
      %p52 = scmp.ne.s32.totalorder %s41, %s42
      %p53 = scmp.eq.s32.totalorder %s19, 0
      %p54 = por %p52, %p53
      %p55 = scmp.ne.s32.totalorder %s41, %s42
      %p56 = scmp.eq.s32.totalorder %s20, 7
      %p57 = por %p55, %p56
      %p59 = scmp.ne.s32.totalorder %s42, %s58
      %p60 = scmp.eq.s32.totalorder %s20, 0
      %p61 = por %p59, %p60
      %s62 = ssub.s32 %s21, %s33
      %s63 = ssub.s32 %s22, %s29
      %s64 = sor.u32 %s62, %s63
      %p65 = scmp.eq.s32.totalorder %s64, 0
      %s67 = sadd.s32 %s66, 1
      %s68 = scalar_select %p65, %s66, %s67
      %p71 = pneg %p65
      %p72 = scmp.eq.s32.totalorder %s14, 7
      %p73 = por %p71, %p72
      %p74 = scmp.ne.s32.totalorder %s66, %s69
      %p75 = scmp.eq.s32.totalorder %s14, 0
      %p76 = por %p74, %p75
      %p77 = scmp.ne.s32.totalorder %s66, %s69
      %p78 = scmp.eq.s32.totalorder %s19, 7
      %p79 = por %p77, %p78
      %p80 = scmp.ne.s32.totalorder %s69, %s70
      %p81 = scmp.eq.s32.totalorder %s19, 0
      %p82 = por %p80, %p81
      %p83 = scmp.ne.s32.totalorder %s69, %s70
      %p84 = scmp.eq.s32.totalorder %s20, 7
      %p85 = por %p83, %p84
      %p87 = scmp.ne.s32.totalorder %s70, %s86
      %p88 = scmp.eq.s32.totalorder %s20, 0
      %p89 = por %p87, %p88
      %s90 = ssub.s32 %s21, %s33
      %s91 = ssub.s32 %s22, %s29
      %s92 = sor.u32 %s90, %s91
      %p93 = scmp.eq.s32.totalorder %s92, 0
      %s95 = sadd.s32 %s94, 1
      %s96 = scalar_select %p93, %s94, %s95
      %p99 = pneg %p93
      %p100 = scmp.eq.s32.totalorder %s14, 7
      %p101 = por %p99, %p100
      %p102 = scmp.ne.s32.totalorder %s94, %s97
      %p103 = scmp.eq.s32.totalorder %s14, 0
      %p104 = por %p102, %p103
      %p105 = scmp.ne.s32.totalorder %s94, %s97
      %p106 = scmp.eq.s32.totalorder %s19, 7
      %p107 = por %p105, %p106
      %p108 = scmp.ne.s32.totalorder %s97, %s98
      %p109 = scmp.eq.s32.totalorder %s19, 0
      %p110 = por %p108, %p109
      %p111 = scmp.ne.s32.totalorder %s97, %s98
      %p112 = scmp.eq.s32.totalorder %s20, 7
      %p113 = por %p111, %p112
      %p115 = scmp.ne.s32.totalorder %s98, %s114
      %p116 = scmp.eq.s32.totalorder %s20, 0
      %p117 = por %p115, %p116
      %s118 = ssub.s32 %s21, %s33
      %s119 = ssub.s32 %s22, %s29
      %s120 = sor.u32 %s118, %s119
      %p121 = scmp.eq.s32.totalorder %s120, 0
      %s123 = sadd.s32 %s122, 1
      %s124 = scalar_select %p121, %s122, %s123
      %p127 = pneg %p121
      %p128 = scmp.eq.s32.totalorder %s14, 7
      %p129 = por %p127, %p128
      %p130 = scmp.ne.s32.totalorder %s122, %s125
      %p131 = scmp.eq.s32.totalorder %s14, 0
      %p132 = por %p130, %p131
      %p133 = scmp.ne.s32.totalorder %s122, %s125
      %p134 = scmp.eq.s32.totalorder %s19, 7
      %p135 = por %p133, %p134
      %p136 = scmp.ne.s32.totalorder %s125, %s126
      %p137 = scmp.eq.s32.totalorder %s19, 0
      %p138 = por %p136, %p137
      %p139 = scmp.ne.s32.totalorder %s125, %s126
      %p140 = scmp.eq.s32.totalorder %s20, 7
      %p141 = por %p139, %p140
      %p143 = scmp.ne.s32.totalorder %s126, %s142
      %p144 = scmp.eq.s32.totalorder %s20, 0
      %p145 = por %p143, %p144
      %s146 = ssub.s32 %s21, %s33
      %s147 = ssub.s32 %s22, %s29
      %s148 = sor.u32 %s146, %s147
      %p149 = scmp.eq.s32.totalorder %s148, 0
      %s151 = sadd.s32 %s150, 1
      %s152 = scalar_select %p149, %s150, %s151
      %p155 = pneg %p149
      %p156 = scmp.eq.s32.totalorder %s14, 7
      %p157 = por %p155, %p156
      %p158 = scmp.ne.s32.totalorder %s150, %s153
      %p159 = scmp.eq.s32.totalorder %s14, 0
      %p160 = por %p158, %p159
      %p161 = scmp.ne.s32.totalorder %s150, %s153
      %p162 = scmp.eq.s32.totalorder %s19, 7
      %p163 = por %p161, %p162
      %p164 = scmp.ne.s32.totalorder %s153, %s154
      %p165 = scmp.eq.s32.totalorder %s19, 0
      %p166 = por %p164, %p165
      %p167 = scmp.ne.s32.totalorder %s153, %s154
      %p168 = scmp.eq.s32.totalorder %s20, 7
      %p169 = por %p167, %p168
      %p171 = scmp.ne.s32.totalorder %s154, %s170
      %p172 = scmp.eq.s32.totalorder %s20, 0
      %p173 = por %p171, %p172
      %p174 = scmp.le.s32.totalorder 1, %s14
      %p175 = scmp.lt.s32.totalorder %s14, 9
      %p176 = pnand %p174, %p175
      %p177 = pneg %p176
      // Predicated region
      $region9: #{decoder_block.13} parent=5 // pred_check
        _
      $region10: #{decoder_block.13} parent=5 // pred_check_branch
        %179 = sbr.rel (%p176) target = $region12
      $region11: #{decoder_block.13} parent=5 // pred_region
        %s180 = ssub.s32 %s14, 1
      $region12: #{decoder_block.13} parent=5 // pred_fallthru
        _
      %p181 = scmp.lt.s32.totalorder %s14, 8
      // Predicated region
      $region13: #{decoder_block.13} parent=5 // pred_check
        %p182 = pneg %p181
      $region14: #{decoder_block.13} parent=5 // pred_check_branch
        %184 = sbr.rel (%p182) target = $region16
      $region15: #{decoder_block.13} parent=5 // pred_region
        // Predicated region
        $region17: #{decoder_block.13} parent=15 // pred_check
          %p185 = pneg %p48
        $region18: #{decoder_block.13} parent=15 // pred_check_branch
          %187 = sbr.rel (%p185) target = $region20
        $region19: #{decoder_block.13} parent=15 // pred_region
          %p188 = scmp.lt.s32.totalorder %s21, 1
          %s189 = scalar_select %p188, %s21, 1
          %p190 = scmp.lt.s32.totalorder %s22, 3
          %s191 = scalar_select %p190, %s22, 3
          %s192 = smul.addr %s189, 4
          %s193 = sadd.s32 %s191, %s192
          %s194 = smul.addr %s193, 8
          %s195 = scalar_lea.vmem %s0, %s194
        $region20: #{decoder_block.13} parent=15 // pred_fallthru
          _
        // Predicated region
        $region21: #{decoder_block.13} parent=15 // pred_check
          %p196 = pneg %p76
        $region22: #{decoder_block.13} parent=15 // pred_check_branch
          %198 = sbr.rel (%p196) target = $region24
        $region23: #{decoder_block.13} parent=15 // pred_region
          %p199 = scmp.lt.s32.totalorder %s21, 1
          %s200 = scalar_select %p199, %s21, 1
          %p201 = scmp.lt.s32.totalorder %s22, 3
          %s202 = scalar_select %p201, %s22, 3
          %s203 = smul.addr %s200, 4
          %s204 = sadd.s32 %s202, %s203
          %s205 = smul.addr %s204, 8
          %s206 = scalar_lea.vmem %s1, %s205
        $region24: #{decoder_block.13} parent=15 // pred_fallthru
          _
        // Predicated region
        $region25: #{decoder_block.13} parent=15 // pred_check
          %p207 = pneg %p104
        $region26: #{decoder_block.13} parent=15 // pred_check_branch
          %209 = sbr.rel (%p207) target = $region28
        $region27: #{decoder_block.13} parent=15 // pred_region
          %p210 = scmp.lt.s32.totalorder %s21, 1
          %s211 = scalar_select %p210, %s21, 1
          %p212 = scmp.lt.s32.totalorder %s22, 3
          %s213 = scalar_select %p212, %s22, 3
          %s214 = smul.addr %s211, 4
          %s215 = sadd.s32 %s213, %s214
          %s216 = smul.addr %s215, 8
          %s217 = scalar_lea.vmem %s2, %s216
        $region28: #{decoder_block.13} parent=15 // pred_fallthru
          _
      $region16: #{decoder_block.13} parent=5 // pred_fallthru
        _
      %p218 = scmp.le.s32.totalorder 1, %s14
      %p219 = scmp.lt.s32.totalorder %s14, 9
      %p220 = pnand %p218, %p219
      %p221 = pneg %p220
      // Predicated region
      $region29: #{decoder_block.13} parent=5 // pred_check
        _
      $region30: #{decoder_block.13} parent=5 // pred_check_branch
        %223 = sbr.rel (%p220) target = $region32
      $region31: #{decoder_block.13} parent=5 // pred_region
        %s224 = ssub.s32 %s14, 1
        %p225 = scmp.lt.s32.totalorder %s23, 1
        %s226 = scalar_select %p225, %s23, 1
        %p227 = scmp.lt.s32.totalorder %s24, 3
        %s228 = scalar_select %p227, %s24, 3
        %s229 = smul.addr %s226, 4
        %s230 = sadd.s32 %s228, %s229
        %s231 = smul.addr %s230, 8
        %s232 = scalar_lea.vmem %s0, %s231
        %p233 = pneg %p54
        %p234 = pneg %p51
        %p235 = scmp.lt.s32.totalorder %s23, 1
        %s236 = scalar_select %p235, %s23, 1
        %p237 = scmp.lt.s32.totalorder %s24, 3
        %s238 = scalar_select %p237, %s24, 3
        %s239 = smul.addr %s236, 4
        %s240 = sadd.s32 %s238, %s239
        %s241 = smul.addr %s240, 8
        %s242 = scalar_lea.vmem %s1, %s241
        %p243 = pneg %p82
        %p244 = pneg %p79
        %p245 = scmp.lt.s32.totalorder %s23, 1
        %s246 = scalar_select %p245, %s23, 1
        %p247 = scmp.lt.s32.totalorder %s24, 3
        %s248 = scalar_select %p247, %s24, 3
        %s249 = smul.addr %s246, 4
        %s250 = sadd.s32 %s248, %s249
        %s251 = smul.addr %s250, 8
        %s252 = scalar_lea.vmem %s2, %s251
        %p253 = pneg %p110
        %p254 = pneg %p107
        %p255 = pneg %p138
        %p256 = pneg %p135
        %p257 = scmp.lt.s32.totalorder %s23, 1
        %s258 = scalar_select %p257, %s23, 1
        %p259 = scmp.lt.s32.totalorder %s24, 3
        %s260 = scalar_select %p259, %s24, 3
        %s261 = smul.addr %s258, 4
        %s262 = sadd.s32 %s260, %s261
        %s263 = smul.addr %s262, 8
        %s264 = scalar_lea.vmem %s3, %s263
        %p265 = pneg %p166
        %p266 = pneg %p163
        %s267 = sand.u32 %s153, 1
        %s268 = scalar_lea.sflag [#allocation3], %s267
        %s269 = sand.u32 %s153, 1
        %s270 = smul.addr %s269, 8
        %s271 = scalar_lea.vmem [#allocation2], %s270
        %p272 = scmp.lt.s32.totalorder %s23, 1
        %s273 = scalar_select %p272, %s23, 1
        %p274 = scmp.lt.s32.totalorder %s24, 3
        %s275 = scalar_select %p274, %s24, 3
        %s276 = smul.addr %s273, 4
        %s277 = sadd.s32 %s275, %s276
        %s278 = smul.addr %s277, 8
        %s279 = scalar_lea.vmem %s0, %s278
        %p280 = scmp.lt.s32.totalorder %s23, 1
        %s281 = scalar_select %p280, %s23, 1
        %p282 = scmp.lt.s32.totalorder %s24, 3
        %s283 = scalar_select %p282, %s24, 3
        %s284 = smul.addr %s281, 4
        %s285 = sadd.s32 %s283, %s284
        %s286 = smul.addr %s285, 8
        %s287 = scalar_lea.vmem %s1, %s286
        %p288 = scmp.lt.s32.totalorder %s23, 1
        %s289 = scalar_select %p288, %s23, 1
        %p290 = scmp.lt.s32.totalorder %s24, 3
        %s291 = scalar_select %p290, %s24, 3
        %s292 = smul.addr %s289, 4
        %s293 = sadd.s32 %s291, %s292
        %s294 = smul.addr %s293, 8
        %s295 = scalar_lea.vmem %s2, %s294
        %p296 = scmp.lt.s32.totalorder %s23, 1
        %s297 = scalar_select %p296, %s23, 1
        %p298 = scmp.lt.s32.totalorder %s24, 3
        %s299 = scalar_select %p298, %s24, 3
        %s300 = smul.addr %s297, 4
        %s301 = sadd.s32 %s299, %s300
        %s302 = smul.addr %s301, 8
        %s303 = scalar_lea.vmem %s3, %s302
        %v304 = vld [vmem:[%s279] sm:$0xff]
        %v305 = vmul.f32 %v304, 0.35355338
        %v306 = vld [vmem:[%s287] sm:$0xff]
        %v307 = vld [vmem:[%s295] sm:$0xff]
        %vm308 = vcmask 64512
        %v310 = vsel %vm308, %v305, 0
        %v313 = vsel %vm308, %v306, 0
        %315 = vmatprep.subr.mxu0 0.0
        %316 = vmatpush1.xpose.msra.mxu0 %v313
        %317 = vmatprep.subr.mxu0 0.0
        %318 = vmatpush1.xpose.msra.mxu0 0.0
        %319 = vmatprep.subr.mxu0 0.0
        %320 = vmatpush1.xpose.msra.mxu0 0.0
        %321 = vmatprep.subr.mxu0 0.0
        %322 = vmatpush1.xpose.msra.mxu0 0.0
        %323 = vmatprep.subr.mxu0 0.0
        %324 = vmatpush1.xpose.msra.mxu0 0.0
        %325 = vmatprep.subr.mxu0 0.0
        %326 = vmatpush1.xpose.msra.mxu0 0.0
        %327 = vmatprep.subr.mxu0 0.0
        %328 = vmatpush1.xpose.msra.mxu0 0.0
        %329 = vmatprep.subr.mxu0 0.0
        %330 = vmatpush1.xpose.msra.mxu0 0.0
        %331 = vmatprep.subr.mxu0 0.0
        %332 = vmatpush1.xpose.msra.mxu0 0.0
        %333 = vmatprep.subr.mxu0 0.0
        %334 = vmatpush1.xpose.msra.mxu0 0.0
        %335 = vmatprep.subr.mxu0 0.0
        %336 = vmatpush1.xpose.msra.mxu0 0.0
        %337 = vmatprep.subr.mxu0 0.0
        %338 = vmatpush1.xpose.msra.mxu0 0.0
        %339 = vmatprep.subr.mxu0 0.0
        %340 = vmatpush1.xpose.msra.mxu0 0.0
        %341 = vmatprep.subr.mxu0 0.0
        %342 = vmatpush1.xpose.msra.mxu0 0.0
        %343 = vmatprep.subr.mxu0 0.0
        %344 = vmatpush1.xpose.msra.mxu0 0.0
        %345 = vmatprep.subr.mxu0 0.0
        %346 = vmatpush1.xpose.msra.mxu0 0.0
        %347 = vmatprep.subr.mxu0 0.0
        %348 = vmatpush1.xpose.msra.mxu0 0.0
        %349 = vmatprep.subr.mxu0 0.0
        %350 = vmatpush1.xpose.msra.mxu0 0.0
        %351 = vmatprep.subr.mxu0 0.0
        %352 = vmatpush1.xpose.msra.mxu0 0.0
        %353 = vmatprep.subr.mxu0 0.0
        %354 = vmatpush1.xpose.msra.mxu0 0.0
        %355 = vmatprep.subr.mxu0 0.0
        %356 = vmatpush1.xpose.msra.mxu0 0.0
        %357 = vmatprep.subr.mxu0 0.0
        %358 = vmatpush1.xpose.msra.mxu0 0.0
        %359 = vmatprep.subr.mxu0 0.0
        %360 = vmatpush1.xpose.msra.mxu0 0.0
        %361 = vmatprep.subr.mxu0 0.0
        %362 = vmatpush1.xpose.msra.mxu0 0.0
        %363 = vmatprep.subr.mxu0 0.0
        %364 = vmatpush1.xpose.msra.mxu0 0.0
        %365 = vmatprep.subr.mxu0 0.0
        %366 = vmatpush1.xpose.msra.mxu0 0.0
        %367 = vmatprep.subr.mxu0 0.0
        %368 = vmatpush1.xpose.msra.mxu0 0.0
        %369 = vmatprep.subr.mxu0 0.0
        %370 = vmatpush1.xpose.msra.mxu0 0.0
        %371 = vmatprep.subr.mxu0 0.0
        %372 = vmatpush1.xpose.msra.mxu0 0.0
        %373 = vmatprep.subr.mxu0 0.0
        %374 = vmatpush1.xpose.msra.mxu0 0.0
        %375 = vmatprep.subr.mxu0 0.0
        %376 = vmatpush1.xpose.msra.mxu0 0.0
        %377 = vmatprep.subr.mxu0 0.0
        %378 = vmatpush1.xpose.msra.mxu0 0.0
        %379 = vmatprep.mubr.f32.mxu0 0.0
        %380 = vmatmul.mubr.f32.gmra.mrb[0].mxu0 %v310
        %v381 = vpop.f32.mrb[0].mxu0
        %v382 = vadd.f32 0.0, %v381
        %v383 = vpop.f32.mrb[0].mxu0
        %384 = vdwg.mxu0
        %v385 = vsel %vm308, %v382, -inf
        %386 = vmax.xlane.f32.xlu0 %v385
        %v387 = vpop.xlane.xlu0 %386
        %v388 = vsub.f32 %v382, %v387
        %v389 = vmul.f32 %v388, 1.442695
        %v390 = vpow.pop %v389
        %v391 = vsel %vm308, %v390, 0.0
        %392 = vadd.xlane.f32.xlu0 %v391
        %v393 = vpop.xlane.xlu0 %392
        %v394 = vrcp.pop %v393
        %v395 = vmul.f32 %v390, %v394
        %396 = vst.msk [vmem:[%s271] sm:$0xff] %vm308, %v395
        %v398 = vsel %vm308, %v395, 0
        %400 = vmatprep.subr.mxu0 0.0
        %401 = vmatpush1.msra.mxu0 %v307
        %402 = vmatprep.subr.mxu0 0.0
        %403 = vmatpush1.msra.mxu0 0.0
        %404 = vmatprep.subr.mxu0 0.0
        %405 = vmatpush1.msra.mxu0 0.0
        %406 = vmatprep.subr.mxu0 0.0
        %407 = vmatpush1.msra.mxu0 0.0
        %408 = vmatprep.subr.mxu0 0.0
        %409 = vmatpush1.msra.mxu0 0.0
        %410 = vmatprep.subr.mxu0 0.0
        %411 = vmatpush1.msra.mxu0 0.0
        %412 = vmatprep.subr.mxu0 0.0
        %413 = vmatpush1.msra.mxu0 0.0
        %414 = vmatprep.subr.mxu0 0.0
        %415 = vmatpush1.msra.mxu0 0.0
        %416 = vmatprep.subr.mxu0 0.0
        %417 = vmatpush1.msra.mxu0 0.0
        %418 = vmatprep.subr.mxu0 0.0
        %419 = vmatpush1.msra.mxu0 0.0
        %420 = vmatprep.subr.mxu0 0.0
        %421 = vmatpush1.msra.mxu0 0.0
        %422 = vmatprep.subr.mxu0 0.0
        %423 = vmatpush1.msra.mxu0 0.0
        %424 = vmatprep.subr.mxu0 0.0
        %425 = vmatpush1.msra.mxu0 0.0
        %426 = vmatprep.subr.mxu0 0.0
        %427 = vmatpush1.msra.mxu0 0.0
        %428 = vmatprep.subr.mxu0 0.0
        %429 = vmatpush1.msra.mxu0 0.0
        %430 = vmatprep.subr.mxu0 0.0
        %431 = vmatpush1.msra.mxu0 0.0
        %432 = vmatprep.subr.mxu0 0.0
        %433 = vmatpush1.msra.mxu0 0.0
        %434 = vmatprep.subr.mxu0 0.0
        %435 = vmatpush1.msra.mxu0 0.0
        %436 = vmatprep.subr.mxu0 0.0
        %437 = vmatpush1.msra.mxu0 0.0
        %438 = vmatprep.subr.mxu0 0.0
        %439 = vmatpush1.msra.mxu0 0.0
        %440 = vmatprep.subr.mxu0 0.0
        %441 = vmatpush1.msra.mxu0 0.0
        %442 = vmatprep.subr.mxu0 0.0
        %443 = vmatpush1.msra.mxu0 0.0
        %444 = vmatprep.subr.mxu0 0.0
        %445 = vmatpush1.msra.mxu0 0.0
        %446 = vmatprep.subr.mxu0 0.0
        %447 = vmatpush1.msra.mxu0 0.0
        %448 = vmatprep.subr.mxu0 0.0
        %449 = vmatpush1.msra.mxu0 0.0
        %450 = vmatprep.subr.mxu0 0.0
        %451 = vmatpush1.msra.mxu0 0.0
        %452 = vmatprep.subr.mxu0 0.0
        %453 = vmatpush1.msra.mxu0 0.0
        %454 = vmatprep.subr.mxu0 0.0
        %455 = vmatpush1.msra.mxu0 0.0
        %456 = vmatprep.subr.mxu0 0.0
        %457 = vmatpush1.msra.mxu0 0.0
        %458 = vmatprep.subr.mxu0 0.0
        %459 = vmatpush1.msra.mxu0 0.0
        %460 = vmatprep.subr.mxu0 0.0
        %461 = vmatpush1.msra.mxu0 0.0
        %462 = vmatprep.subr.mxu0 0.0
        %463 = vmatpush1.msra.mxu0 0.0
        %464 = vmatprep.mubr.f32.mxu0 0.0
        %465 = vmatmul.mubr.f32.gmra.mrb[0].mxu0 %v398
        %v466 = vpop.f32.mrb[0].mxu0
        %v467 = vadd.f32 0.0, %v466
        %v468 = vpop.f32.mrb[0].mxu0
        %469 = vdwg.mxu0
        %470 = vst.msk [vmem:[%s303] sm:$0xff] %vm308, %v467
        %p471 = scmp.lt.s32.totalorder %s23, 1
        %s472 = scalar_select %p471, %s23, 1
        %p473 = scmp.lt.s32.totalorder %s24, 3
        %s474 = scalar_select %p473, %s24, 3
        %s475 = smul.addr %s472, 4
        %s476 = sadd.s32 %s474, %s475
        %s477 = smul.addr %s476, 8
        %s478 = scalar_lea.vmem %s3, %s477
        %s479 = sand.u32 %s153, 1
        %s480 = scalar_lea.sflag [#allocation3], %s479
        %s481 = sand.u32 %s153, 1
        %s482 = smul.addr %s481, 8
        %s483 = scalar_lea.vmem [#allocation2], %s482
        // Predicated region
        $region33: #{decoder_block.13} parent=31 // pred_check
          %p484 = pneg %p135
        $region34: #{decoder_block.13} parent=31 // pred_check_branch
          %486 = sbr.rel (%p484) target = $region36
        $region35: #{decoder_block.13} parent=31 // pred_region
          _
        $region36: #{decoder_block.13} parent=31 // pred_fallthru
          _
        // Predicated region
        $region37: #{decoder_block.13} parent=31 // pred_check
          %p487 = pneg %p163
        $region38: #{decoder_block.13} parent=31 // pred_check_branch
          %489 = sbr.rel (%p487) target = $region40
        $region39: #{decoder_block.13} parent=31 // pred_region
          %s491 = ssub.s32 128, 128
          %492 = vsyncadd %s480, %s491
          %s493 = smul.addr %s23, 4
          %s494 = sadd.s32 %s24, %s493
          %s495 = smul.addr %s494, 128
          %s496 = scalar_lea.hbm %s4, %s495
          %s498 = sshll.u32 %s483, 4
          %s499 = int_to_ptr.vmem [resolvable:$true] %s498
          %501 = dma.vmem_to_hbm [thread:$0]  %s499, 128, %s496, %s480
        $region40: #{decoder_block.13} parent=31 // pred_fallthru
          _
      $region32: #{decoder_block.13} parent=5 // pred_fallthru
        _
      %p502 = scmp.le.s32.totalorder 2, %s14
      // Predicated region
      $region41: #{decoder_block.13} parent=5 // pred_check
        %p503 = pneg %p502
      $region42: #{decoder_block.13} parent=5 // pred_check_branch
        %505 = sbr.rel (%p503) target = $region44
      $region43: #{decoder_block.13} parent=5 // pred_region
        %s506 = ssub.s32 %s14, 2
        // Predicated region
        $region45: #{decoder_block.13} parent=43 // pred_check
          %p507 = pneg %p141
        $region46: #{decoder_block.13} parent=43 // pred_check_branch
          %509 = sbr.rel (%p507) target = $region48
        $region47: #{decoder_block.13} parent=43 // pred_region
          %p510 = scmp.lt.s32.totalorder %s25, 1
          %s511 = scalar_select %p510, %s25, 1
          %p512 = scmp.lt.s32.totalorder %s26, 3
          %s513 = scalar_select %p512, %s26, 3
          %s514 = smul.addr %s511, 4
          %s515 = sadd.s32 %s513, %s514
          %s516 = smul.addr %s515, 8
          %s517 = scalar_lea.vmem %s3, %s516
        $region48: #{decoder_block.13} parent=43 // pred_fallthru
          _
        // Predicated region
        $region49: #{decoder_block.13} parent=43 // pred_check
          %p518 = pneg %p169
        $region50: #{decoder_block.13} parent=43 // pred_check_branch
          %520 = sbr.rel (%p518) target = $region52
        $region51: #{decoder_block.13} parent=43 // pred_region
          %s521 = sand.u32 %s154, 1
          %s522 = scalar_lea.sflag [#allocation3], %s521
          %s523 = sand.u32 %s154, 1
          %s524 = smul.addr %s523, 8
          %s525 = scalar_lea.vmem [#allocation2], %s524
          %526 = dma.done %s522, 128
        $region52: #{decoder_block.13} parent=43 // pred_fallthru
          _
      $region44: #{decoder_block.13} parent=5 // pred_fallthru
        _
    $region6: #{decoder_block.13} parent=1 // loop_footer
      %s18 = sadd.s32 1, %s14
    $region7: #{decoder_block.13} parent=1 // loop_footer_branch
      %13 = sbr.rel target = $region3
    $region8: #{decoder_block.13} parent=1 // loop_exit
      _
    %527 = vsyncpa [#allocation3], 1
    %s528 = scalar_lea.sflag [#allocation3], 1
    %529 = vsyncpa %s528, 1

// kernel: decoder_block.12
$region0: #{decoder_block.12}
  #allocation0 [shape = 'u32[]', space=smem, size = 0x4, offset = 0x4, fixed_abs, tag = 'smem constant byte address 0x4 - core index']
  #allocation1 [shape = 'u32[144,128]{1,0:T(1,128)}', space=vmem, size = 0x12000, scoped, tag = 'internal scratch']
  %s0 = inlined_call_operand.vmem [shape: f32[2,8,32], index: 0, kind: input, shape index: {}]
  %s1 = inlined_call_operand.vmem [shape: f32[32,64], index: 1, kind: input, shape index: {}]
  %s2 = inlined_call_operand.vmem [shape: f32[1,64], index: 2, kind: input, shape index: {}]
  %s3 = inlined_call_operand.vmem [shape: f32[2,4,8,8], index: 3, kind: output, shape index: {0}]
  %s4 = inlined_call_operand.vmem [shape: f32[2,4,8,8], index: 4, kind: output, shape index: {1}]
  %5 = xla_tuple %s3, %s4
  %s6 = sld [smem:[#allocation0]]
  $region53: #{decoder_block.12} parent=0
    _
  %s8 = ssub.s32 1, %s6
  %s9 = scalar_select 0, %s8, %s6
  loop: start=0, step=1, limit=4
  $region2: #{decoder_block.12} parent=0 // loop_pre_header
    _
  $region3: #{decoder_block.12} parent=0 // loop_header
    %s11 = sphi 0, %s15
    %p12 = scmp.ge.s32.totalorder %s11, 4
    %s21 = sphi 0, %s23
    %s24 = sphi 0, %s21
    %s25 = sphi 0, %s24
    %s41 = sphi 0, %s25
    %s45 = sphi 0, %s45
    %s47 = sphi 0, %s45
    %s48 = sphi 0, %s47
    %s62 = sphi 0, %s48
    %s66 = sphi 0, %s66
    %s68 = sphi 0, %s66
    %s69 = sphi 0, %s68
    %s83 = sphi 0, %s69
    %s89 = sphi 0, %s91
    %s92 = sphi 0, %s89
    %s93 = sphi 0, %s92
    %s109 = sphi 0, %s93
    %s115 = sphi 0, %s117
    %s118 = sphi 0, %s115
    %s119 = sphi 0, %s118
    %s135 = sphi 0, %s119
  $region4: #{decoder_block.12} parent=0 // loop_header_branch
    %14 = sbr.rel (%p12) target = $region8
  $region5: #{decoder_block.12} parent=0 // loop_body
    %s16 = ssub.s32 %s11, 1
    %s17 = ssub.s32 %s11, 2
    %s18 = sadd.s32 %s11, 1
    %s19 = ssub.s32 %s11, %s18
    %p20 = scmp.eq.s32.totalorder %s19, 0
    %s22 = sadd.s32 %s21, 1
    %s23 = scalar_select %p20, %s21, %s22
    %p26 = pneg %p20
    %p27 = scmp.eq.s32.totalorder %s11, 1
    %p28 = por %p26, %p27
    %p29 = scmp.ne.s32.totalorder %s21, %s24
    %p30 = scmp.eq.s32.totalorder %s11, 0
    %p31 = por %p29, %p30
    %p32 = scmp.ne.s32.totalorder %s21, %s24
    %p33 = scmp.eq.s32.totalorder %s16, 1
    %p34 = por %p32, %p33
    %p35 = scmp.ne.s32.totalorder %s24, %s25
    %p36 = scmp.eq.s32.totalorder %s16, 0
    %p37 = por %p35, %p36
    %p38 = scmp.ne.s32.totalorder %s24, %s25
    %p39 = scmp.eq.s32.totalorder %s17, 1
    %p40 = por %p38, %p39
    %p42 = scmp.ne.s32.totalorder %s25, %s41
    %p43 = scmp.eq.s32.totalorder %s17, 0
    %p44 = por %p42, %p43
    %s46 = sadd.s32 %s45, 1
    %p49 = scmp.eq.s32.totalorder %s11, 1
    %p50 = scmp.ne.s32.totalorder %s45, %s47
    %p51 = scmp.eq.s32.totalorder %s11, 0
    %p52 = por %p50, %p51
    %p53 = scmp.ne.s32.totalorder %s45, %s47
    %p54 = scmp.eq.s32.totalorder %s16, 1
    %p55 = por %p53, %p54
    %p56 = scmp.ne.s32.totalorder %s47, %s48
    %p57 = scmp.eq.s32.totalorder %s16, 0
    %p58 = por %p56, %p57
    %p59 = scmp.ne.s32.totalorder %s47, %s48
    %p60 = scmp.eq.s32.totalorder %s17, 1
    %p61 = por %p59, %p60
    %p63 = scmp.ne.s32.totalorder %s48, %s62
    %p64 = scmp.eq.s32.totalorder %s17, 0
    %p65 = por %p63, %p64
    %s67 = sadd.s32 %s66, 1
    %p70 = scmp.eq.s32.totalorder %s11, 1
    %p71 = scmp.ne.s32.totalorder %s66, %s68
    %p72 = scmp.eq.s32.totalorder %s11, 0
    %p73 = por %p71, %p72
    %p74 = scmp.ne.s32.totalorder %s66, %s68
    %p75 = scmp.eq.s32.totalorder %s16, 1
    %p76 = por %p74, %p75
    %p77 = scmp.ne.s32.totalorder %s68, %s69
    %p78 = scmp.eq.s32.totalorder %s16, 0
    %p79 = por %p77, %p78
    %p80 = scmp.ne.s32.totalorder %s68, %s69
    %p81 = scmp.eq.s32.totalorder %s17, 1
    %p82 = por %p80, %p81
    %p84 = scmp.ne.s32.totalorder %s69, %s83
    %p85 = scmp.eq.s32.totalorder %s17, 0
    %p86 = por %p84, %p85
    %s87 = ssub.s32 %s11, %s18
    %p88 = scmp.eq.s32.totalorder %s87, 0
    %s90 = sadd.s32 %s89, 1
    %s91 = scalar_select %p88, %s89, %s90
    %p94 = pneg %p88
    %p95 = scmp.eq.s32.totalorder %s11, 1
    %p96 = por %p94, %p95
    %p97 = scmp.ne.s32.totalorder %s89, %s92
    %p98 = scmp.eq.s32.totalorder %s11, 0
    %p99 = por %p97, %p98
    %p100 = scmp.ne.s32.totalorder %s89, %s92
    %p101 = scmp.eq.s32.totalorder %s16, 1
    %p102 = por %p100, %p101
    %p103 = scmp.ne.s32.totalorder %s92, %s93
    %p104 = scmp.eq.s32.totalorder %s16, 0
    %p105 = por %p103, %p104
    %p106 = scmp.ne.s32.totalorder %s92, %s93
    %p107 = scmp.eq.s32.totalorder %s17, 1
    %p108 = por %p106, %p107
    %p110 = scmp.ne.s32.totalorder %s93, %s109
    %p111 = scmp.eq.s32.totalorder %s17, 0
    %p112 = por %p110, %p111
    %s113 = ssub.s32 %s11, %s18
    %p114 = scmp.eq.s32.totalorder %s113, 0
    %s116 = sadd.s32 %s115, 1
    %s117 = scalar_select %p114, %s115, %s116
    %p120 = pneg %p114
    %p121 = scmp.eq.s32.totalorder %s11, 1
    %p122 = por %p120, %p121
    %p123 = scmp.ne.s32.totalorder %s115, %s118
    %p124 = scmp.eq.s32.totalorder %s11, 0
    %p125 = por %p123, %p124
    %p126 = scmp.ne.s32.totalorder %s115, %s118
    %p127 = scmp.eq.s32.totalorder %s16, 1
    %p128 = por %p126, %p127
    %p129 = scmp.ne.s32.totalorder %s118, %s119
    %p130 = scmp.eq.s32.totalorder %s16, 0
    %p131 = por %p129, %p130
    %p132 = scmp.ne.s32.totalorder %s118, %s119
    %p133 = scmp.eq.s32.totalorder %s17, 1
    %p134 = por %p132, %p133
    %p136 = scmp.ne.s32.totalorder %s119, %s135
    %p137 = scmp.eq.s32.totalorder %s17, 0
    %p138 = por %p136, %p137
    %p139 = scmp.le.s32.totalorder 1, %s11
    %p140 = scmp.lt.s32.totalorder %s11, 3
    %p141 = pnand %p139, %p140
    %p142 = pneg %p141
    // Predicated region
    $region9: #{decoder_block.12} parent=5 // pred_check
      _
    $region10: #{decoder_block.12} parent=5 // pred_check_branch
      %144 = sbr.rel (%p141) target = $region12
    $region11: #{decoder_block.12} parent=5 // pred_region
      %s145 = ssub.s32 %s11, 1
      // Predicated region
      $region13: #{decoder_block.12} parent=11 // pred_check
        %p146 = pneg %p58
      $region14: #{decoder_block.12} parent=11 // pred_check_branch
        %148 = sbr.rel (%p146) target = $region16
      $region15: #{decoder_block.12} parent=11 // pred_region
        _
      $region16: #{decoder_block.12} parent=11 // pred_fallthru
        _
      // Predicated region
      $region17: #{decoder_block.12} parent=11 // pred_check
        %p149 = pneg %p79
      $region18: #{decoder_block.12} parent=11 // pred_check_branch
        %151 = sbr.rel (%p149) target = $region20
      $region19: #{decoder_block.12} parent=11 // pred_region
        _
      $region20: #{decoder_block.12} parent=11 // pred_fallthru
        _
    $region12: #{decoder_block.12} parent=5 // pred_fallthru
      _
    %p152 = scmp.lt.s32.totalorder %s11, 2
    // Predicated region
    $region21: #{decoder_block.12} parent=5 // pred_check
      %p153 = pneg %p152
    $region22: #{decoder_block.12} parent=5 // pred_check_branch
      %155 = sbr.rel (%p153) target = $region24
    $region23: #{decoder_block.12} parent=5 // pred_region
      // Predicated region
      $region25: #{decoder_block.12} parent=23 // pred_check
        %p156 = pneg %p31
      $region26: #{decoder_block.12} parent=23 // pred_check_branch
        %158 = sbr.rel (%p156) target = $region28
      $region27: #{decoder_block.12} parent=23 // pred_region
        %p159 = scmp.lt.s32.totalorder %s11, 1
        %s160 = scalar_select %p159, %s11, 1
        %s161 = smul.addr %s160, 8
        %s162 = scalar_lea.vmem %s0, %s161
      $region28: #{decoder_block.12} parent=23 // pred_fallthru
        _
    $region24: #{decoder_block.12} parent=5 // pred_fallthru
      _
    %p163 = scmp.le.s32.totalorder 1, %s11
    %p164 = scmp.lt.s32.totalorder %s11, 3
    %p165 = pnand %p163, %p164
    %p166 = pneg %p165
    // Predicated region
    $region29: #{decoder_block.12} parent=5 // pred_check
      _
    $region30: #{decoder_block.12} parent=5 // pred_check_branch
      %168 = sbr.rel (%p165) target = $region32
    $region31: #{decoder_block.12} parent=5 // pred_region
      %s169 = ssub.s32 %s11, 1
      %p170 = scmp.lt.s32.totalorder %s16, 1
      %s171 = scalar_select %p170, %s16, 1
      %s172 = smul.addr %s171, 8
      %s173 = scalar_lea.vmem %s0, %s172
      %p174 = pneg %p37
      %p175 = pneg %p34
      %p176 = pneg %p58
      %p177 = pneg %p55
      %p178 = pneg %p79
      %p179 = pneg %p76
      %p180 = pneg %p105
      %p181 = pneg %p102
      %p182 = scmp.lt.s32.totalorder %s16, 1
      %s183 = scalar_select %p182, %s16, 1
      %s184 = smul.addr %s183, 4
      %s185 = smul.addr %s184, 8
      %s186 = scalar_lea.vmem %s3, %s185
      %p187 = pneg %p131
      %p188 = pneg %p128
      %p189 = scmp.lt.s32.totalorder %s16, 1
      %s190 = scalar_select %p189, %s16, 1
      %s191 = smul.addr %s190, 4
      %s192 = smul.addr %s191, 8
      %s193 = scalar_lea.vmem %s4, %s192
      %p194 = scmp.lt.s32.totalorder %s16, 1
      %s195 = scalar_select %p194, %s16, 1
      %s196 = smul.addr %s195, 8
      %s197 = scalar_lea.vmem %s0, %s196
      %p198 = scmp.lt.s32.totalorder %s16, 1
      %s199 = scalar_select %p198, %s16, 1
      %s200 = smul.addr %s199, 4
      %s201 = smul.addr %s200, 8
      %s202 = scalar_lea.vmem %s3, %s201
      %p203 = scmp.lt.s32.totalorder %s16, 1
      %s204 = scalar_select %p203, %s16, 1
      %s205 = smul.addr %s204, 4
      %s206 = smul.addr %s205, 8
      %s207 = scalar_lea.vmem %s4, %s206
      %v208 = vld [vmem:[%s197] sm:$0xff]
      %v209 = vld [vmem:[%s1] sm:$0xff]
      %v210 = vld [vmem:[%s1 + $0x8] sm:$0xff]
      %v211 = vld [vmem:[%s1 + $0x10] sm:$0xff]
      %v212 = vld [vmem:[%s1 + $0x18] sm:$0xff]
      %v213 = vld [vmem:[%s2] sm:$0x1]
      %v215 = vlaneseq
      %v216 = vshrl.u32 %v215, 7
      %v217 = vsub.s32 0, %v216
      %v218 = vrot.slane %v213, %v217
      %vm220 = vcmask 261120
      %v222 = vsel %vm220, %v208, 0
      %224 = vmatprep.subr.mxu0 0.0
      %225 = vmatpush1.msra.mxu0 %v209
      %226 = vmatprep.subr.mxu0 0.0
      %227 = vmatpush1.msra.mxu0 %v210
      %228 = vmatprep.subr.mxu0 0.0
      %229 = vmatpush1.msra.mxu0 %v211
      %230 = vmatprep.subr.mxu0 0.0
      %231 = vmatpush1.msra.mxu0 %v212
      %232 = vmatprep.subr.mxu0 0.0
      %233 = vmatpush1.msra.mxu0 0.0
      %234 = vmatprep.subr.mxu0 0.0
      %235 = vmatpush1.msra.mxu0 0.0
      %236 = vmatprep.subr.mxu0 0.0
      %237 = vmatpush1.msra.mxu0 0.0
      %238 = vmatprep.subr.mxu0 0.0
      %239 = vmatpush1.msra.mxu0 0.0
      %240 = vmatprep.subr.mxu0 0.0
      %241 = vmatpush1.msra.mxu0 0.0
      %242 = vmatprep.subr.mxu0 0.0
      %243 = vmatpush1.msra.mxu0 0.0
      %244 = vmatprep.subr.mxu0 0.0
      %245 = vmatpush1.msra.mxu0 0.0
      %246 = vmatprep.subr.mxu0 0.0
      %247 = vmatpush1.msra.mxu0 0.0
      %248 = vmatprep.subr.mxu0 0.0
      %249 = vmatpush1.msra.mxu0 0.0
      %250 = vmatprep.subr.mxu0 0.0
      %251 = vmatpush1.msra.mxu0 0.0
      %252 = vmatprep.subr.mxu0 0.0
      %253 = vmatpush1.msra.mxu0 0.0
      %254 = vmatprep.subr.mxu0 0.0
      %255 = vmatpush1.msra.mxu0 0.0
      %256 = vmatprep.subr.mxu0 0.0
      %257 = vmatpush1.msra.mxu0 0.0
      %258 = vmatprep.subr.mxu0 0.0
      %259 = vmatpush1.msra.mxu0 0.0
      %260 = vmatprep.subr.mxu0 0.0
      %261 = vmatpush1.msra.mxu0 0.0
      %262 = vmatprep.subr.mxu0 0.0
      %263 = vmatpush1.msra.mxu0 0.0
      %264 = vmatprep.subr.mxu0 0.0
      %265 = vmatpush1.msra.mxu0 0.0
      %266 = vmatprep.subr.mxu0 0.0
      %267 = vmatpush1.msra.mxu0 0.0
      %268 = vmatprep.subr.mxu0 0.0
      %269 = vmatpush1.msra.mxu0 0.0
      %270 = vmatprep.subr.mxu0 0.0
      %271 = vmatpush1.msra.mxu0 0.0
      %272 = vmatprep.subr.mxu0 0.0
      %273 = vmatpush1.msra.mxu0 0.0
      %274 = vmatprep.subr.mxu0 0.0
      %275 = vmatpush1.msra.mxu0 0.0
      %276 = vmatprep.subr.mxu0 0.0
      %277 = vmatpush1.msra.mxu0 0.0
      %278 = vmatprep.subr.mxu0 0.0
      %279 = vmatpush1.msra.mxu0 0.0
      %280 = vmatprep.subr.mxu0 0.0
      %281 = vmatpush1.msra.mxu0 0.0
      %282 = vmatprep.subr.mxu0 0.0
      %283 = vmatpush1.msra.mxu0 0.0
      %284 = vmatprep.subr.mxu0 0.0
      %285 = vmatpush1.msra.mxu0 0.0
      %286 = vmatprep.subr.mxu0 0.0
      %287 = vmatpush1.msra.mxu0 0.0
      %288 = vmatprep.mubr.f32.mxu0 0.0
      %289 = vmatmul.mubr.f32.gmra.mrb[0].mxu0 %v222
      %v290 = vpop.f32.mrb[0].mxu0
      %v291 = vadd.f32 %v218, %v290
      %v292 = vpop.f32.mrb[0].mxu0
      %293 = vdwg.mxu0
      %vm294 = vcmask 64512
      %295 = vst.msk [vmem:[%s202] sm:$0xff] %vm294, %v291
      %297 = vrot.lane.b32.xlu0 %v291, 120
      %v298 = vpop.permute.xlu0 %297
      %s300 = scalar_lea.vmem %s202, 8
      %301 = vst.msk [vmem:[%s300] sm:$0xff] %vm294, %v298
      %302 = vrot.lane.b32.xlu0 %v291, 112
      %v303 = vpop.permute.xlu0 %302
      %s305 = scalar_lea.vmem %s202, 16
      %306 = vst.msk [vmem:[%s305] sm:$0xff] %vm294, %v303
      %307 = vrot.lane.b32.xlu0 %v291, 104
      %v308 = vpop.permute.xlu0 %307
      %s310 = scalar_lea.vmem %s202, 24
      %311 = vst.msk [vmem:[%s310] sm:$0xff] %vm294, %v308
      %312 = vrot.lane.b32.xlu0 %v291, 96
      %v313 = vpop.permute.xlu0 %312
      %315 = vst.msk [vmem:[%s207] sm:$0xff] %vm294, %v313
      %316 = vrot.lane.b32.xlu0 %v291, 88
      %v317 = vpop.permute.xlu0 %316
      %s319 = scalar_lea.vmem %s207, 8
      %320 = vst.msk [vmem:[%s319] sm:$0xff] %vm294, %v317
      %321 = vrot.lane.b32.xlu0 %v291, 80
      %v322 = vpop.permute.xlu0 %321
      %s324 = scalar_lea.vmem %s207, 16
      %325 = vst.msk [vmem:[%s324] sm:$0xff] %vm294, %v322
      %326 = vrot.lane.b32.xlu0 %v291, 72
      %v327 = vpop.permute.xlu0 %326
      %s329 = scalar_lea.vmem %s207, 24
      %330 = vst.msk [vmem:[%s329] sm:$0xff] %vm294, %v327
      %p331 = scmp.lt.s32.totalorder %s16, 1
      %s332 = scalar_select %p331, %s16, 1
      %s333 = smul.addr %s332, 4
      %s334 = smul.addr %s333, 8
      %s335 = scalar_lea.vmem %s3, %s334
      %p336 = scmp.lt.s32.totalorder %s16, 1
      %s337 = scalar_select %p336, %s16, 1
      %s338 = smul.addr %s337, 4
      %s339 = smul.addr %s338, 8
      %s340 = scalar_lea.vmem %s4, %s339
      // Predicated region
      $region33: #{decoder_block.12} parent=31 // pred_check
        %p341 = pneg %p102
      $region34: #{decoder_block.12} parent=31 // pred_check_branch
        %343 = sbr.rel (%p341) target = $region36
      $region35: #{decoder_block.12} parent=31 // pred_region
        _
      $region36: #{decoder_block.12} parent=31 // pred_fallthru
        _
      // Predicated region
      $region37: #{decoder_block.12} parent=31 // pred_check
        %p344 = pneg %p128
      $region38: #{decoder_block.12} parent=31 // pred_check_branch
        %346 = sbr.rel (%p344) target = $region40
      $region39: #{decoder_block.12} parent=31 // pred_region
        _
      $region40: #{decoder_block.12} parent=31 // pred_fallthru
        _
    $region32: #{decoder_block.12} parent=5 // pred_fallthru
      _
    %p347 = scmp.le.s32.totalorder 2, %s11
    // Predicated region
    $region41: #{decoder_block.12} parent=5 // pred_check
      %p348 = pneg %p347
    $region42: #{decoder_block.12} parent=5 // pred_check_branch
      %350 = sbr.rel (%p348) target = $region44
    $region43: #{decoder_block.12} parent=5 // pred_region
      %s351 = ssub.s32 %s11, 2
      // Predicated region
      $region45: #{decoder_block.12} parent=43 // pred_check
        %p352 = pneg %p108
      $region46: #{decoder_block.12} parent=43 // pred_check_branch
        %354 = sbr.rel (%p352) target = $region48
      $region47: #{decoder_block.12} parent=43 // pred_region
        %p355 = scmp.lt.s32.totalorder %s17, 1
        %s356 = scalar_select %p355, %s17, 1
        %s357 = smul.addr %s356, 4
        %s358 = smul.addr %s357, 8
        %s359 = scalar_lea.vmem %s3, %s358
      $region48: #{decoder_block.12} parent=43 // pred_fallthru
        _
      // Predicated region
      $region49: #{decoder_block.12} parent=43 // pred_check
        %p360 = pneg %p134
      $region50: #{decoder_block.12} parent=43 // pred_check_branch
        %362 = sbr.rel (%p360) target = $region52
      $region51: #{decoder_block.12} parent=43 // pred_region
        %p363 = scmp.lt.s32.totalorder %s17, 1
        %s364 = scalar_select %p363, %s17, 1
        %s365 = smul.addr %s364, 4
        %s366 = smul.addr %s365, 8
        %s367 = scalar_lea.vmem %s4, %s366
      $region52: #{decoder_block.12} parent=43 // pred_fallthru
        _
    $region44: #{decoder_block.12} parent=5 // pred_fallthru
      _
  $region6: #{decoder_block.12} parent=0 // loop_footer
    %s15 = sadd.s32 1, %s11
  $region7: #{decoder_block.12} parent=0 // loop_footer_branch
    %10 = sbr.rel target = $region3
  $region8: #{decoder_block.12} parent=0 // loop_exit
    _

// kernel: decoder_block.15
$region0: #{decoder_block.15}
  #allocation0 [shape = 'u32[]', space=smem, size = 0x4, offset = 0x4, fixed_abs, tag = 'smem constant byte address 0x4 - core index']
  #allocation1 [shape = 'u32[144,128]{1,0:T(1,128)}', space=vmem, size = 0x12000, scoped, tag = 'internal scratch']
  %s0 = inlined_call_operand.vmem [shape: f32[2,8,32], index: 0, kind: input, shape index: {}]
  %s1 = inlined_call_operand.vmem [shape: f32[1,32], index: 1, kind: input, shape index: {}]
  %s2 = inlined_call_operand.vmem [shape: f32[1,32], index: 2, kind: input, shape index: {}]
  %s3 = inlined_call_operand.vmem [shape: f32[32,64], index: 3, kind: input, shape index: {}]
  %s4 = inlined_call_operand.vmem [shape: f32[1,64], index: 4, kind: input, shape index: {}]
  %s5 = inlined_call_operand.vmem [shape: f32[64,32], index: 5, kind: input, shape index: {}]
  %s6 = inlined_call_operand.vmem [shape: f32[1,32], index: 6, kind: input, shape index: {}]
  %s7 = inlined_call_operand.hbm [shape: f32[2,8,32], index: 7, kind: output, shape index: {}]
  %s8 = sld [smem:[#allocation0]]
  $region61: #{decoder_block.15} parent=0
    _
  %s10 = ssub.s32 1, %s8
  %s11 = scalar_select 0, %s10, %s8
  $region1: #{decoder_block.15} parent=0
    #allocation2 [shape = 'u8[8192]{0}', space=vmem, size = 0x2000, scoped, tag = 'output window, operand 0']
    #allocation3 [shape = 's32[2]{0}', space=sflag, size = 0x8, scoped, tag = 'scoped memory for decoder_block.15']
    %12 = vsyncpa [#allocation3], 0
    %s13 = scalar_lea.sflag [#allocation3], 1
    %14 = vsyncpa %s13, 0
    loop: start=0, step=1, limit=4
    $region2: #{decoder_block.15} parent=1 // loop_pre_header
      _
    $region3: #{decoder_block.15} parent=1 // loop_header
      %s16 = sphi 0, %s20
      %p17 = scmp.ge.s32.totalorder %s16, 4
      %s26 = sphi 0, %s28
      %s29 = sphi 0, %s26
      %s30 = sphi 0, %s29
      %s46 = sphi 0, %s30
      %s50 = sphi 0, %s50
      %s52 = sphi 0, %s50
      %s53 = sphi 0, %s52
      %s67 = sphi 0, %s53
      %s71 = sphi 0, %s71
      %s73 = sphi 0, %s71
      %s74 = sphi 0, %s73
      %s88 = sphi 0, %s74
      %s92 = sphi 0, %s92
      %s94 = sphi 0, %s92
      %s95 = sphi 0, %s94
      %s109 = sphi 0, %s95
      %s113 = sphi 0, %s113
      %s115 = sphi 0, %s113
      %s116 = sphi 0, %s115
      %s130 = sphi 0, %s116
      %s134 = sphi 0, %s134
      %s136 = sphi 0, %s134
      %s137 = sphi 0, %s136
      %s151 = sphi 0, %s137
      %s155 = sphi 0, %s155
      %s157 = sphi 0, %s155
      %s158 = sphi 0, %s157
      %s172 = sphi 0, %s158
      %s178 = sphi 0, %s180
      %s181 = sphi 0, %s178
      %s182 = sphi 0, %s181
      %s198 = sphi 0, %s182
    $region4: #{decoder_block.15} parent=1 // loop_header_branch
      %19 = sbr.rel (%p17) target = $region8
    $region5: #{decoder_block.15} parent=1 // loop_body
      %s21 = ssub.s32 %s16, 1
      %s22 = ssub.s32 %s16, 2
      %s23 = sadd.s32 %s16, 1
      %s24 = ssub.s32 %s16, %s23
      %p25 = scmp.eq.s32.totalorder %s24, 0
      %s27 = sadd.s32 %s26, 1
      %s28 = scalar_select %p25, %s26, %s27
      %p31 = pneg %p25
      %p32 = scmp.eq.s32.totalorder %s16, 1
      %p33 = por %p31, %p32
      %p34 = scmp.ne.s32.totalorder %s26, %s29
      %p35 = scmp.eq.s32.totalorder %s16, 0
      %p36 = por %p34, %p35
      %p37 = scmp.ne.s32.totalorder %s26, %s29
      %p38 = scmp.eq.s32.totalorder %s21, 1
      %p39 = por %p37, %p38
      %p40 = scmp.ne.s32.totalorder %s29, %s30
      %p41 = scmp.eq.s32.totalorder %s21, 0
      %p42 = por %p40, %p41
      %p43 = scmp.ne.s32.totalorder %s29, %s30
      %p44 = scmp.eq.s32.totalorder %s22, 1
      %p45 = por %p43, %p44
      %p47 = scmp.ne.s32.totalorder %s30, %s46
      %p48 = scmp.eq.s32.totalorder %s22, 0
      %p49 = por %p47, %p48
      %s51 = sadd.s32 %s50, 1
      %p54 = scmp.eq.s32.totalorder %s16, 1
      %p55 = scmp.ne.s32.totalorder %s50, %s52
      %p56 = scmp.eq.s32.totalorder %s16, 0
      %p57 = por %p55, %p56
      %p58 = scmp.ne.s32.totalorder %s50, %s52
      %p59 = scmp.eq.s32.totalorder %s21, 1
      %p60 = por %p58, %p59
      %p61 = scmp.ne.s32.totalorder %s52, %s53
      %p62 = scmp.eq.s32.totalorder %s21, 0
      %p63 = por %p61, %p62
      %p64 = scmp.ne.s32.totalorder %s52, %s53
      %p65 = scmp.eq.s32.totalorder %s22, 1
      %p66 = por %p64, %p65
      %p68 = scmp.ne.s32.totalorder %s53, %s67
      %p69 = scmp.eq.s32.totalorder %s22, 0
      %p70 = por %p68, %p69
      %s72 = sadd.s32 %s71, 1
      %p75 = scmp.eq.s32.totalorder %s16, 1
      %p76 = scmp.ne.s32.totalorder %s71, %s73
      %p77 = scmp.eq.s32.totalorder %s16, 0
      %p78 = por %p76, %p77
      %p79 = scmp.ne.s32.totalorder %s71, %s73
      %p80 = scmp.eq.s32.totalorder %s21, 1
      %p81 = por %p79, %p80
      %p82 = scmp.ne.s32.totalorder %s73, %s74
      %p83 = scmp.eq.s32.totalorder %s21, 0
      %p84 = por %p82, %p83
      %p85 = scmp.ne.s32.totalorder %s73, %s74
      %p86 = scmp.eq.s32.totalorder %s22, 1
      %p87 = por %p85, %p86
      %p89 = scmp.ne.s32.totalorder %s74, %s88
      %p90 = scmp.eq.s32.totalorder %s22, 0
      %p91 = por %p89, %p90
      %s93 = sadd.s32 %s92, 1
      %p96 = scmp.eq.s32.totalorder %s16, 1
      %p97 = scmp.ne.s32.totalorder %s92, %s94
      %p98 = scmp.eq.s32.totalorder %s16, 0
      %p99 = por %p97, %p98
      %p100 = scmp.ne.s32.totalorder %s92, %s94
      %p101 = scmp.eq.s32.totalorder %s21, 1
      %p102 = por %p100, %p101
      %p103 = scmp.ne.s32.totalorder %s94, %s95
      %p104 = scmp.eq.s32.totalorder %s21, 0
      %p105 = por %p103, %p104
      %p106 = scmp.ne.s32.totalorder %s94, %s95
      %p107 = scmp.eq.s32.totalorder %s22, 1
      %p108 = por %p106, %p107
      %p110 = scmp.ne.s32.totalorder %s95, %s109
      %p111 = scmp.eq.s32.totalorder %s22, 0
      %p112 = por %p110, %p111
      %s114 = sadd.s32 %s113, 1
      %p117 = scmp.eq.s32.totalorder %s16, 1
      %p118 = scmp.ne.s32.totalorder %s113, %s115
      %p119 = scmp.eq.s32.totalorder %s16, 0
      %p120 = por %p118, %p119
      %p121 = scmp.ne.s32.totalorder %s113, %s115
      %p122 = scmp.eq.s32.totalorder %s21, 1
      %p123 = por %p121, %p122
      %p124 = scmp.ne.s32.totalorder %s115, %s116
      %p125 = scmp.eq.s32.totalorder %s21, 0
      %p126 = por %p124, %p125
      %p127 = scmp.ne.s32.totalorder %s115, %s116
      %p128 = scmp.eq.s32.totalorder %s22, 1
      %p129 = por %p127, %p128
      %p131 = scmp.ne.s32.totalorder %s116, %s130
      %p132 = scmp.eq.s32.totalorder %s22, 0
      %p133 = por %p131, %p132
      %s135 = sadd.s32 %s134, 1
      %p138 = scmp.eq.s32.totalorder %s16, 1
      %p139 = scmp.ne.s32.totalorder %s134, %s136
      %p140 = scmp.eq.s32.totalorder %s16, 0
      %p141 = por %p139, %p140
      %p142 = scmp.ne.s32.totalorder %s134, %s136
      %p143 = scmp.eq.s32.totalorder %s21, 1
      %p144 = por %p142, %p143
      %p145 = scmp.ne.s32.totalorder %s136, %s137
      %p146 = scmp.eq.s32.totalorder %s21, 0
      %p147 = por %p145, %p146
      %p148 = scmp.ne.s32.totalorder %s136, %s137
      %p149 = scmp.eq.s32.totalorder %s22, 1
      %p150 = por %p148, %p149
      %p152 = scmp.ne.s32.totalorder %s137, %s151
      %p153 = scmp.eq.s32.totalorder %s22, 0
      %p154 = por %p152, %p153
      %s156 = sadd.s32 %s155, 1
      %p159 = scmp.eq.s32.totalorder %s16, 1
      %p160 = scmp.ne.s32.totalorder %s155, %s157
      %p161 = scmp.eq.s32.totalorder %s16, 0
      %p162 = por %p160, %p161
      %p163 = scmp.ne.s32.totalorder %s155, %s157
      %p164 = scmp.eq.s32.totalorder %s21, 1
      %p165 = por %p163, %p164
      %p166 = scmp.ne.s32.totalorder %s157, %s158
      %p167 = scmp.eq.s32.totalorder %s21, 0
      %p168 = por %p166, %p167
      %p169 = scmp.ne.s32.totalorder %s157, %s158
      %p170 = scmp.eq.s32.totalorder %s22, 1
      %p171 = por %p169, %p170
      %p173 = scmp.ne.s32.totalorder %s158, %s172
      %p174 = scmp.eq.s32.totalorder %s22, 0
      %p175 = por %p173, %p174
      %s176 = ssub.s32 %s16, %s23
      %p177 = scmp.eq.s32.totalorder %s176, 0
      %s179 = sadd.s32 %s178, 1
      %s180 = scalar_select %p177, %s178, %s179
      %p183 = pneg %p177
      %p184 = scmp.eq.s32.totalorder %s16, 1
      %p185 = por %p183, %p184
      %p186 = scmp.ne.s32.totalorder %s178, %s181
      %p187 = scmp.eq.s32.totalorder %s16, 0
      %p188 = por %p186, %p187
      %p189 = scmp.ne.s32.totalorder %s178, %s181
      %p190 = scmp.eq.s32.totalorder %s21, 1
      %p191 = por %p189, %p190
      %p192 = scmp.ne.s32.totalorder %s181, %s182
      %p193 = scmp.eq.s32.totalorder %s21, 0
      %p194 = por %p192, %p193
      %p195 = scmp.ne.s32.totalorder %s181, %s182
      %p196 = scmp.eq.s32.totalorder %s22, 1
      %p197 = por %p195, %p196
      %p199 = scmp.ne.s32.totalorder %s182, %s198
      %p200 = scmp.eq.s32.totalorder %s22, 0
      %p201 = por %p199, %p200
      %p202 = scmp.le.s32.totalorder 1, %s16
      %p203 = scmp.lt.s32.totalorder %s16, 3
      %p204 = pnand %p202, %p203
      %p205 = pneg %p204
      // Predicated region
      $region9: #{decoder_block.15} parent=5 // pred_check
        _
      $region10: #{decoder_block.15} parent=5 // pred_check_branch
        %207 = sbr.rel (%p204) target = $region12
      $region11: #{decoder_block.15} parent=5 // pred_region
        %s208 = ssub.s32 %s16, 1
        // Predicated region
        $region13: #{decoder_block.15} parent=11 // pred_check
          %p209 = pneg %p63
        $region14: #{decoder_block.15} parent=11 // pred_check_branch
          %211 = sbr.rel (%p209) target = $region16
        $region15: #{decoder_block.15} parent=11 // pred_region
          _
        $region16: #{decoder_block.15} parent=11 // pred_fallthru
          _
        // Predicated region
        $region17: #{decoder_block.15} parent=11 // pred_check
          %p212 = pneg %p84
        $region18: #{decoder_block.15} parent=11 // pred_check_branch
          %214 = sbr.rel (%p212) target = $region20
        $region19: #{decoder_block.15} parent=11 // pred_region
          _
        $region20: #{decoder_block.15} parent=11 // pred_fallthru
          _
        // Predicated region
        $region21: #{decoder_block.15} parent=11 // pred_check
          %p215 = pneg %p105
        $region22: #{decoder_block.15} parent=11 // pred_check_branch
          %217 = sbr.rel (%p215) target = $region24
        $region23: #{decoder_block.15} parent=11 // pred_region
          _
        $region24: #{decoder_block.15} parent=11 // pred_fallthru
          _
        // Predicated region
        $region25: #{decoder_block.15} parent=11 // pred_check
          %p218 = pneg %p126
        $region26: #{decoder_block.15} parent=11 // pred_check_branch
          %220 = sbr.rel (%p218) target = $region28
        $region27: #{decoder_block.15} parent=11 // pred_region
          _
        $region28: #{decoder_block.15} parent=11 // pred_fallthru
          _
        // Predicated region
        $region29: #{decoder_block.15} parent=11 // pred_check
          %p221 = pneg %p147
        $region30: #{decoder_block.15} parent=11 // pred_check_branch
          %223 = sbr.rel (%p221) target = $region32
        $region31: #{decoder_block.15} parent=11 // pred_region
          _
        $region32: #{decoder_block.15} parent=11 // pred_fallthru
          _
        // Predicated region
        $region33: #{decoder_block.15} parent=11 // pred_check
          %p224 = pneg %p168
        $region34: #{decoder_block.15} parent=11 // pred_check_branch
          %226 = sbr.rel (%p224) target = $region36
        $region35: #{decoder_block.15} parent=11 // pred_region
          _
        $region36: #{decoder_block.15} parent=11 // pred_fallthru
          _
      $region12: #{decoder_block.15} parent=5 // pred_fallthru
        _
      %p227 = scmp.lt.s32.totalorder %s16, 2
      // Predicated region
      $region37: #{decoder_block.15} parent=5 // pred_check
        %p228 = pneg %p227
      $region38: #{decoder_block.15} parent=5 // pred_check_branch
        %230 = sbr.rel (%p228) target = $region40
      $region39: #{decoder_block.15} parent=5 // pred_region
        // Predicated region
        $region41: #{decoder_block.15} parent=39 // pred_check
          %p231 = pneg %p36
        $region42: #{decoder_block.15} parent=39 // pred_check_branch
          %233 = sbr.rel (%p231) target = $region44
        $region43: #{decoder_block.15} parent=39 // pred_region
          %p234 = scmp.lt.s32.totalorder %s16, 1
          %s235 = scalar_select %p234, %s16, 1
          %s236 = smul.addr %s235, 8
          %s237 = scalar_lea.vmem %s0, %s236
        $region44: #{decoder_block.15} parent=39 // pred_fallthru
          _
      $region40: #{decoder_block.15} parent=5 // pred_fallthru
        _
      %p238 = scmp.le.s32.totalorder 1, %s16
      %p239 = scmp.lt.s32.totalorder %s16, 3
      %p240 = pnand %p238, %p239
      %p241 = pneg %p240
      // Predicated region
      $region45: #{decoder_block.15} parent=5 // pred_check
        _
      $region46: #{decoder_block.15} parent=5 // pred_check_branch
        %243 = sbr.rel (%p240) target = $region48
      $region47: #{decoder_block.15} parent=5 // pred_region
        %s244 = ssub.s32 %s16, 1
        %p245 = scmp.lt.s32.totalorder %s21, 1
        %s246 = scalar_select %p245, %s21, 1
        %s247 = smul.addr %s246, 8
        %s248 = scalar_lea.vmem %s0, %s247
        %p249 = pneg %p42
        %p250 = pneg %p39
        %p251 = pneg %p63
        %p252 = pneg %p60
        %p253 = pneg %p84
        %p254 = pneg %p81
        %p255 = pneg %p105
        %p256 = pneg %p102
        %p257 = pneg %p126
        %p258 = pneg %p123
        %p259 = pneg %p147
        %p260 = pneg %p144
        %p261 = pneg %p168
        %p262 = pneg %p165
        %p263 = pneg %p194
        %p264 = pneg %p191
        %s265 = sand.u32 %s181, 1
        %s266 = scalar_lea.sflag [#allocation3], %s265
        %s267 = sand.u32 %s181, 1
        %s268 = smul.addr %s267, 8
        %s269 = scalar_lea.vmem [#allocation2], %s268
        %p270 = scmp.lt.s32.totalorder %s21, 1
        %s271 = scalar_select %p270, %s21, 1
        %s272 = smul.addr %s271, 8
        %s273 = scalar_lea.vmem %s0, %s272
        %v274 = vld [vmem:[%s273] sm:$0xff]
        %v275 = vld [vmem:[%s1] sm:$0x1]
        %v276 = vld [vmem:[%s2] sm:$0x1]
        %vm277 = vcmask 261120
        %v278 = vsel %vm277, %v274, 0.0
        %279 = vadd.xlane.f32.xlu0 %v278
        %v280 = vpop.xlane.xlu0 %279
        %v281 = vrcp.pop 32.0
        %v282 = vmul.f32 %v280, %v281
        %v283 = vsub.f32 %v274, %v282
        %v284 = vmul.f32 %v283, %v283
        %v285 = vsel %vm277, %v284, 0.0
        %286 = vadd.xlane.f32.xlu0 %v285
        %v287 = vpop.xlane.xlu0 %286
        %v288 = vmul.f32 %v287, %v281
        %v289 = vadd.f32 %v288, 1e-06
        %v290 = vrsqrt.pop %v289
        %v291 = vmul.f32 %v283, %v290
        %v293 = vlaneseq
        %v294 = vshrl.u32 %v293, 7
        %v295 = vsub.s32 0, %v294
        %v296 = vrot.slane %v275, %v295
        %v298 = vmul.f32 %v291, %v296
        %v300 = vlaneseq
        %v301 = vshrl.u32 %v300, 7
        %v302 = vsub.s32 0, %v301
        %v303 = vrot.slane %v276, %v302
        %v305 = vadd.f32 %v298, %v303
        %v306 = vld [vmem:[%s3] sm:$0xff]
        %v307 = vld [vmem:[%s3 + $0x8] sm:$0xff]
        %v308 = vld [vmem:[%s3 + $0x10] sm:$0xff]
        %v309 = vld [vmem:[%s3 + $0x18] sm:$0xff]
        %v310 = vld [vmem:[%s4] sm:$0x1]
        %v312 = vlaneseq
        %v313 = vshrl.u32 %v312, 7
        %v314 = vsub.s32 0, %v313
        %v315 = vrot.slane %v310, %v314
        %v318 = vsel %vm277, %v305, 0
        %320 = vmatprep.subr.mxu0 0.0
        %321 = vmatpush1.msra.mxu0 %v306
        %322 = vmatprep.subr.mxu0 0.0
        %323 = vmatpush1.msra.mxu0 %v307
        %324 = vmatprep.subr.mxu0 0.0
        %325 = vmatpush1.msra.mxu0 %v308
        %326 = vmatprep.subr.mxu0 0.0
        %327 = vmatpush1.msra.mxu0 %v309
        %328 = vmatprep.subr.mxu0 0.0
        %329 = vmatpush1.msra.mxu0 0.0
        %330 = vmatprep.subr.mxu0 0.0
        %331 = vmatpush1.msra.mxu0 0.0
        %332 = vmatprep.subr.mxu0 0.0
        %333 = vmatpush1.msra.mxu0 0.0
        %334 = vmatprep.subr.mxu0 0.0
        %335 = vmatpush1.msra.mxu0 0.0
        %336 = vmatprep.subr.mxu0 0.0
        %337 = vmatpush1.msra.mxu0 0.0
        %338 = vmatprep.subr.mxu0 0.0
        %339 = vmatpush1.msra.mxu0 0.0
        %340 = vmatprep.subr.mxu0 0.0
        %341 = vmatpush1.msra.mxu0 0.0
        %342 = vmatprep.subr.mxu0 0.0
        %343 = vmatpush1.msra.mxu0 0.0
        %344 = vmatprep.subr.mxu0 0.0
        %345 = vmatpush1.msra.mxu0 0.0
        %346 = vmatprep.subr.mxu0 0.0
        %347 = vmatpush1.msra.mxu0 0.0
        %348 = vmatprep.subr.mxu0 0.0
        %349 = vmatpush1.msra.mxu0 0.0
        %350 = vmatprep.subr.mxu0 0.0
        %351 = vmatpush1.msra.mxu0 0.0
        %352 = vmatprep.subr.mxu0 0.0
        %353 = vmatpush1.msra.mxu0 0.0
        %354 = vmatprep.subr.mxu0 0.0
        %355 = vmatpush1.msra.mxu0 0.0
        %356 = vmatprep.subr.mxu0 0.0
        %357 = vmatpush1.msra.mxu0 0.0
        %358 = vmatprep.subr.mxu0 0.0
        %359 = vmatpush1.msra.mxu0 0.0
        %360 = vmatprep.subr.mxu0 0.0
        %361 = vmatpush1.msra.mxu0 0.0
        %362 = vmatprep.subr.mxu0 0.0
        %363 = vmatpush1.msra.mxu0 0.0
        %364 = vmatprep.subr.mxu0 0.0
        %365 = vmatpush1.msra.mxu0 0.0
        %366 = vmatprep.subr.mxu0 0.0
        %367 = vmatpush1.msra.mxu0 0.0
        %368 = vmatprep.subr.mxu0 0.0
        %369 = vmatpush1.msra.mxu0 0.0
        %370 = vmatprep.subr.mxu0 0.0
        %371 = vmatpush1.msra.mxu0 0.0
        %372 = vmatprep.subr.mxu0 0.0
        %373 = vmatpush1.msra.mxu0 0.0
        %374 = vmatprep.subr.mxu0 0.0
        %375 = vmatpush1.msra.mxu0 0.0
        %376 = vmatprep.subr.mxu0 0.0
        %377 = vmatpush1.msra.mxu0 0.0
        %378 = vmatprep.subr.mxu0 0.0
        %379 = vmatpush1.msra.mxu0 0.0
        %380 = vmatprep.subr.mxu0 0.0
        %381 = vmatpush1.msra.mxu0 0.0
        %382 = vmatprep.subr.mxu0 0.0
        %383 = vmatpush1.msra.mxu0 0.0
        %384 = vmatprep.mubr.f32.mxu0 0.0
        %385 = vmatmul.mubr.f32.gmra.mrb[0].mxu0 %v318
        %v386 = vpop.f32.mrb[0].mxu0
        %v387 = vadd.f32 %v315, %v386
        %v388 = vpop.f32.mrb[0].mxu0
        %389 = vdwg.mxu0
        %v390 = vmul.f32 %v387, 0.5
        %v391 = vmul.f32 %v387, 0.70710677
        %v392 = verf.f32.pop %v391
        %v393 = vadd.f32 %v392, 1.0
        %v394 = vmul.f32 %v390, %v393
        %v395 = vld [vmem:[%s5] sm:$0xff]
        %v396 = vld [vmem:[%s5 + $0x8] sm:$0xff]
        %v397 = vld [vmem:[%s5 + $0x10] sm:$0xff]
        %v398 = vld [vmem:[%s5 + $0x18] sm:$0xff]
        %v399 = vld [vmem:[%s5 + $0x20] sm:$0xff]
        %v400 = vld [vmem:[%s5 + $0x28] sm:$0xff]
        %v401 = vld [vmem:[%s5 + $0x30] sm:$0xff]
        %v402 = vld [vmem:[%s5 + $0x38] sm:$0xff]
        %v403 = vld [vmem:[%s6] sm:$0x1]
        %v405 = vlaneseq
        %v406 = vshrl.u32 %v405, 7
        %v407 = vsub.s32 0, %v406
        %v408 = vrot.slane %v403, %v407
        %vm410 = vcmask 523264
        %v412 = vsel %vm410, %v394, 0
        %414 = vmatprep.subr.mxu0 0.0
        %415 = vmatpush1.msra.mxu0 %v395
        %416 = vmatprep.subr.mxu0 0.0
        %417 = vmatpush1.msra.mxu0 %v396
        %418 = vmatprep.subr.mxu0 0.0
        %419 = vmatpush1.msra.mxu0 %v397
        %420 = vmatprep.subr.mxu0 0.0
        %421 = vmatpush1.msra.mxu0 %v398
        %422 = vmatprep.subr.mxu0 0.0
        %423 = vmatpush1.msra.mxu0 %v399
        %424 = vmatprep.subr.mxu0 0.0
        %425 = vmatpush1.msra.mxu0 %v400
        %426 = vmatprep.subr.mxu0 0.0
        %427 = vmatpush1.msra.mxu0 %v401
        %428 = vmatprep.subr.mxu0 0.0
        %429 = vmatpush1.msra.mxu0 %v402
        %430 = vmatprep.subr.mxu0 0.0
        %431 = vmatpush1.msra.mxu0 0.0
        %432 = vmatprep.subr.mxu0 0.0
        %433 = vmatpush1.msra.mxu0 0.0
        %434 = vmatprep.subr.mxu0 0.0
        %435 = vmatpush1.msra.mxu0 0.0
        %436 = vmatprep.subr.mxu0 0.0
        %437 = vmatpush1.msra.mxu0 0.0
        %438 = vmatprep.subr.mxu0 0.0
        %439 = vmatpush1.msra.mxu0 0.0
        %440 = vmatprep.subr.mxu0 0.0
        %441 = vmatpush1.msra.mxu0 0.0
        %442 = vmatprep.subr.mxu0 0.0
        %443 = vmatpush1.msra.mxu0 0.0
        %444 = vmatprep.subr.mxu0 0.0
        %445 = vmatpush1.msra.mxu0 0.0
        %446 = vmatprep.subr.mxu0 0.0
        %447 = vmatpush1.msra.mxu0 0.0
        %448 = vmatprep.subr.mxu0 0.0
        %449 = vmatpush1.msra.mxu0 0.0
        %450 = vmatprep.subr.mxu0 0.0
        %451 = vmatpush1.msra.mxu0 0.0
        %452 = vmatprep.subr.mxu0 0.0
        %453 = vmatpush1.msra.mxu0 0.0
        %454 = vmatprep.subr.mxu0 0.0
        %455 = vmatpush1.msra.mxu0 0.0
        %456 = vmatprep.subr.mxu0 0.0
        %457 = vmatpush1.msra.mxu0 0.0
        %458 = vmatprep.subr.mxu0 0.0
        %459 = vmatpush1.msra.mxu0 0.0
        %460 = vmatprep.subr.mxu0 0.0
        %461 = vmatpush1.msra.mxu0 0.0
        %462 = vmatprep.subr.mxu0 0.0
        %463 = vmatpush1.msra.mxu0 0.0
        %464 = vmatprep.subr.mxu0 0.0
        %465 = vmatpush1.msra.mxu0 0.0
        %466 = vmatprep.subr.mxu0 0.0
        %467 = vmatpush1.msra.mxu0 0.0
        %468 = vmatprep.subr.mxu0 0.0
        %469 = vmatpush1.msra.mxu0 0.0
        %470 = vmatprep.subr.mxu0 0.0
        %471 = vmatpush1.msra.mxu0 0.0
        %472 = vmatprep.subr.mxu0 0.0
        %473 = vmatpush1.msra.mxu0 0.0
        %474 = vmatprep.subr.mxu0 0.0
        %475 = vmatpush1.msra.mxu0 0.0
        %476 = vmatprep.subr.mxu0 0.0
        %477 = vmatpush1.msra.mxu0 0.0
        %478 = vmatprep.mubr.f32.mxu0 0.0
        %479 = vmatmul.mubr.f32.gmra.mrb[0].mxu0 %v412
        %v480 = vpop.f32.mrb[0].mxu0
        %v481 = vadd.f32 %v408, %v480
        %v482 = vpop.f32.mrb[0].mxu0
        %483 = vdwg.mxu0
        %v484 = vadd.f32 %v481, %v274
        %485 = vst.msk [vmem:[%s269] sm:$0xff] %vm277, %v484
        %s486 = sand.u32 %s181, 1
        %s487 = scalar_lea.sflag [#allocation3], %s486
        %s488 = sand.u32 %s181, 1
        %s489 = smul.addr %s488, 8
        %s490 = scalar_lea.vmem [#allocation2], %s489
        // Predicated region
        $region49: #{decoder_block.15} parent=47 // pred_check
          %p491 = pneg %p191
        $region50: #{decoder_block.15} parent=47 // pred_check_branch
          %493 = sbr.rel (%p491) target = $region52
        $region51: #{decoder_block.15} parent=47 // pred_region
          %s495 = ssub.s32 128, 128
          %496 = vsyncadd %s487, %s495
          %s497 = smul.addr %s21, 128
          %s498 = scalar_lea.hbm %s7, %s497
          %s500 = sshll.u32 %s490, 4
          %s501 = int_to_ptr.vmem [resolvable:$true] %s500
          %503 = dma.vmem_to_hbm [thread:$0]  %s501, 128, %s498, %s487
        $region52: #{decoder_block.15} parent=47 // pred_fallthru
          _
      $region48: #{decoder_block.15} parent=5 // pred_fallthru
        _
      %p504 = scmp.le.s32.totalorder 2, %s16
      // Predicated region
      $region53: #{decoder_block.15} parent=5 // pred_check
        %p505 = pneg %p504
      $region54: #{decoder_block.15} parent=5 // pred_check_branch
        %507 = sbr.rel (%p505) target = $region56
      $region55: #{decoder_block.15} parent=5 // pred_region
        %s508 = ssub.s32 %s16, 2
        // Predicated region
        $region57: #{decoder_block.15} parent=55 // pred_check
          %p509 = pneg %p197
        $region58: #{decoder_block.15} parent=55 // pred_check_branch
          %511 = sbr.rel (%p509) target = $region60
        $region59: #{decoder_block.15} parent=55 // pred_region
          %s512 = sand.u32 %s182, 1
          %s513 = scalar_lea.sflag [#allocation3], %s512
          %s514 = sand.u32 %s182, 1
          %s515 = smul.addr %s514, 8
          %s516 = scalar_lea.vmem [#allocation2], %s515
          %517 = dma.done %s513, 128
        $region60: #{decoder_block.15} parent=55 // pred_fallthru
          _
      $region56: #{decoder_block.15} parent=5 // pred_fallthru
        _
    $region6: #{decoder_block.15} parent=1 // loop_footer
      %s20 = sadd.s32 1, %s16
    $region7: #{decoder_block.15} parent=1 // loop_footer_branch
      %15 = sbr.rel target = $region3
    $region8: #{decoder_block.15} parent=1 // loop_exit
      _
    %518 = vsyncpa [#allocation3], 1
    %s519 = scalar_lea.sflag [#allocation3], 1
    %520 = vsyncpa %s519, 1

</llo_original>
